<compile_context>
chip_gen: v6e
topology: v6e:2x2x1
jax: 0.10.0
libtpu: 0.0.40
codegen_flags: <defaults>
</compile_context>

<pallas_src>
import functools

import jax
import jax.numpy as jnp
from jax.experimental import pallas as pl
from jax.experimental.pallas import tpu as pltpu


def _bottleneck_kernel(x_ref, w1_ref, b1_ref, w2_ref, b2_ref, w3_ref, b3_ref,
                       o_ref, y1pad_ref, *, dilation):
    # x_ref:  (1, H, W, Cin)   channel-last, channels on lanes
    # w1_ref: (Cin, Cmid)      BN1-folded
    # w2_ref: (3, 3, Cmid, Cmid) HWIO, BN2-folded
    # w3_ref: (Cmid, Cout)     BN3-folded
    # b*_ref: (1, C)           folded BN biases
    # o_ref:  (1, H, W, Cout)
    # y1pad_ref: VMEM scratch (H + 2*pad, W + 2*pad, Cmid), f32
    _, H, W, Cin = x_ref.shape
    Cmid = w1_ref.shape[1]
    Cout = w3_ref.shape[1]
    pad = (y1pad_ref.shape[0] - H) // 2

    # Load the input tile once; channels stay on the lane axis.
    x = x_ref[0].astype(jnp.float32).reshape(H * W, Cin)

    # ---- conv1 (1x1) + bn1 + relu : one MXU GEMM over the channel axis ----
    y1 = jnp.dot(x, w1_ref[...].astype(jnp.float32),
                 preferred_element_type=jnp.float32)
    y1 = jnp.maximum(y1 + b1_ref[...], 0.0)                   # (H*W, Cmid)

    # ---- stage into a zero-padded VMEM scratch for the 3x3 window ----
    y1pad_ref[...] = jnp.zeros(y1pad_ref.shape, y1pad_ref.dtype)
    y1pad_ref[pad:pad + H, pad:pad + W, :] = y1.reshape(H, W, Cmid)

    # ---- conv2 (3x3, dilated) + bn2 + relu : 9 taps, each an MXU GEMM ----
    # Taps are loaded per-iteration from the VMEM scratch ref (bounded live
    # ranges; no lane-offset in-register slicing).
    acc = jnp.zeros((H * W, Cmid), jnp.float32)
    for kh in range(3):
        for kw in range(3):
            tap = y1pad_ref[kh * dilation:kh * dilation + H,
                            kw * dilation:kw * dilation + W, :]
            acc = acc + jnp.dot(tap.reshape(H * W, Cmid),
                                w2_ref[kh, kw].astype(jnp.float32),
                                preferred_element_type=jnp.float32)
    y2 = jnp.maximum(acc + b2_ref[...], 0.0)                  # (H*W, Cmid)

    # ---- conv3 (1x1) + bn3, residual add, relu ----
    y3 = jnp.dot(y2, w3_ref[...].astype(jnp.float32),
                 preferred_element_type=jnp.float32) + b3_ref[...]
    out = jnp.maximum(y3 + x, 0.0)                            # Cin == Cout residual
    o_ref[0] = out.reshape(H, W, Cout).astype(o_ref.dtype)


def _fold_bn(gamma, beta, mean, var, eps=1e-5):
    s = gamma / jnp.sqrt(var + eps)
    return s, beta - mean * s


def bottleneck_forward(x, params, *, stride=1, dilation=1, eps=1e-5):
    """Bottleneck forward. x: (B, Cin, H, W) NCHW; returns NCHW.

    BatchNorm is applied in eval mode (running stats), folded into the conv
    weights. Only the default stride=1 / downsample=None configuration is
    supported.
    """
    assert stride == 1, "stride != 1 (downsample path) not implemented"
    w1 = params["conv1"]
    w2 = params["conv2"]
    w3 = params["conv3"]

    B, Cin, H, W = x.shape
    Cmid = w1.shape[0]
    Cout = w3.shape[0]
    assert Cin == Cout, "identity residual requires inplanes == planes * 4"
    pad = dilation if dilation > 1 else 2 - stride

    s1, b1 = _fold_bn(*params["bn1"], eps)
    s2, b2 = _fold_bn(*params["bn2"], eps)
    s3, b3 = _fold_bn(*params["bn3"], eps)

    # Fold BN scales into the conv weights; re-layout weights to channel-last
    # matmul form (contracting dim first, output channels on lanes).
    w1m = (w1[:, :, 0, 0] * s1[:, None]).T.astype(jnp.float32)            # (Cin, Cmid)
    w2m = jnp.transpose(w2 * s2[:, None, None, None], (2, 3, 1, 0))       # (3,3,I,O)
    w2m = w2m.astype(jnp.float32)
    w3m = (w3[:, :, 0, 0] * s3[:, None]).T.astype(jnp.float32)            # (Cmid, Cout)
    b1m = b1.reshape(1, Cmid).astype(jnp.float32)
    b2m = b2.reshape(1, Cmid).astype(jnp.float32)
    b3m = b3.reshape(1, Cout).astype(jnp.float32)

    # Channel-last so C maps to the 128-lane axis inside the kernel.
    x_nhwc = jnp.transpose(x, (0, 2, 3, 1))

    kernel = functools.partial(_bottleneck_kernel, dilation=dilation)
    out_nhwc = pl.pallas_call(
        kernel,
        out_shape=jax.ShapeDtypeStruct((B, H, W, Cout), x.dtype),
        grid=(B,),
        in_specs=[
            pl.BlockSpec((1, H, W, Cin), lambda b: (b, 0, 0, 0)),
            pl.BlockSpec((Cin, Cmid), lambda b: (0, 0)),
            pl.BlockSpec((1, Cmid), lambda b: (0, 0)),
            pl.BlockSpec((3, 3, Cmid, Cmid), lambda b: (0, 0, 0, 0)),
            pl.BlockSpec((1, Cmid), lambda b: (0, 0)),
            pl.BlockSpec((Cmid, Cout), lambda b: (0, 0)),
            pl.BlockSpec((1, Cout), lambda b: (0, 0)),
        ],
        out_specs=pl.BlockSpec((1, H, W, Cout), lambda b: (b, 0, 0, 0)),
        scratch_shapes=[
            pltpu.VMEM((H + 2 * pad, W + 2 * pad, Cmid), jnp.float32),
        ],
        compiler_params=pltpu.CompilerParams(
            dimension_semantics=("parallel",)),
    )(x_nhwc, w1m, b1m, w2m, b2m, w3m, b3m)

    return jnp.transpose(out_nhwc, (0, 3, 1, 2))


def _ref_bottleneck(x, params, *, stride=1, dilation=1, eps=1e-5):
    """Pure-JAX reference identical to the PyTorch Bottleneck.forward (eval BN)."""
    def conv(y, w, stride=1, padding=0, dil=1):
        return jax.lax.conv_general_dilated(
            y, w, (stride, stride),
            ((padding, padding), (padding, padding)),
            rhs_dilation=(dil, dil),
            dimension_numbers=("NCHW", "OIHW", "NCHW"))

    def bn(y, p):
        g, b, m, v = p
        s = g / jnp.sqrt(v + eps)
        return y * s[None, :, None, None] + (b - m * s)[None, :, None, None]

    pad = dilation if dilation > 1 else 2 - stride
    out = jax.nn.relu(bn(conv(x, params["conv1"]), params["bn1"]))
    out = jax.nn.relu(bn(conv(out, params["conv2"], stride, pad, dilation),
                         params["bn2"]))
    out = bn(conv(out, params["conv3"]), params["bn3"])
    return jax.nn.relu(out + x)


if __name__ == "__main__":
    key = jax.random.PRNGKey(0)
    ks = jax.random.split(key, 8)

    B, planes = 2, 4
    inplanes = planes * 4          # 16, required for the identity residual
    Cmid, Cout = planes, planes * 4
    H = W = 16

    def bn_params(k, c):
        k1, k2, k3, k4 = jax.random.split(k, 4)
        gamma = jax.random.uniform(k1, (c,), minval=0.5, maxval=1.5)
        beta = 0.1 * jax.random.normal(k2, (c,))
        mean = 0.1 * jax.random.normal(k3, (c,))
        var = jax.random.uniform(k4, (c,), minval=0.5, maxval=1.5)
        return gamma, beta, mean, var

    params = {
        "conv1": 0.1 * jax.random.normal(ks[0], (Cmid, inplanes, 1, 1), jnp.float32),
        "bn1": bn_params(ks[1], Cmid),
        "conv2": 0.1 * jax.random.normal(ks[2], (Cmid, Cmid, 3, 3), jnp.float32),
        "bn2": bn_params(ks[3], Cmid),
        "conv3": 0.1 * jax.random.normal(ks[4], (Cout, Cmid, 1, 1), jnp.float32),
        "bn3": bn_params(ks[5], Cout),
    }
    x = jax.random.normal(ks[6], (B, inplanes, H, W), dtype=jnp.float32)

    out = bottleneck_forward(x, params, stride=1, dilation=1)
    out = jax.block_until_ready(out)

    ref = _ref_bottleneck(x, params, stride=1, dilation=1)
    assert out.shape == ref.shape == (B, Cout, H, W)
    assert jnp.allclose(out, ref, atol=1e-4, rtol=1e-4), \
        f"max abs err {float(jnp.max(jnp.abs(out - ref)))}"

    print("KERNEL_OK")
</pallas_src>

<mosaic_0001>
module attributes {stable_mosaic.version = 11 : i64} {
  func.func @_bottleneck_kernel(%arg0: i32, %arg1: memref<1x16x16x16xf32, #tpu.memory_space<vmem>>, %arg2: memref<16x4xf32, #tpu.memory_space<vmem>>, %arg3: memref<1x4xf32, #tpu.memory_space<vmem>>, %arg4: memref<3x3x4x4xf32, #tpu.memory_space<vmem>>, %arg5: memref<1x4xf32, #tpu.memory_space<vmem>>, %arg6: memref<4x16xf32, #tpu.memory_space<vmem>>, %arg7: memref<1x16xf32, #tpu.memory_space<vmem>>, %arg8: memref<1x16x16x16xf32, #tpu.memory_space<vmem>>, %arg9: memref<18x18x4xf32, #tpu.memory_space<vmem>>) attributes {dimension_semantics = [#tpu.dimension_semantics<parallel>], iteration_bounds = array<i64: 2>, scalar_prefetch = 0 : i64, scratch_operands = 1 : i64, tpu.core_type = #tpu.core_type<tc>, window_params = [{transform_indices = @transform_0, window_bounds = array<i64: 1, 16, 16, 16>}, {pipeline_mode = #tpu.pipeline_mode<synchronous>, transform_indices = @transform_1, window_bounds = array<i64: 16, 4>}, {pipeline_mode = #tpu.pipeline_mode<synchronous>, transform_indices = @transform_2, window_bounds = array<i64: 1, 4>}, {pipeline_mode = #tpu.pipeline_mode<synchronous>, transform_indices = @transform_3, window_bounds = array<i64: 3, 3, 4, 4>}, {pipeline_mode = #tpu.pipeline_mode<synchronous>, transform_indices = @transform_4, window_bounds = array<i64: 1, 4>}, {pipeline_mode = #tpu.pipeline_mode<synchronous>, transform_indices = @transform_5, window_bounds = array<i64: 4, 16>}, {pipeline_mode = #tpu.pipeline_mode<synchronous>, transform_indices = @transform_6, window_bounds = array<i64: 1, 16>}, {transform_indices = @transform_7, window_bounds = array<i64: 1, 16, 16, 16>}]} {
    %c0 = arith.constant 0 : index
    %c0_0 = arith.constant 0 : index
    %c0_1 = arith.constant 0 : index
    %c0_2 = arith.constant 0 : index
    %0 = vector.load %arg1[%c0, %c0_0, %c0_1, %c0_2] : memref<1x16x16x16xf32, #tpu.memory_space<vmem>>, vector<1x16x16x16xf32>
    %1 = vector.shape_cast %0 : vector<1x16x16x16xf32> to vector<16x16x16xf32>
    %2 = vector.shape_cast %1 : vector<16x16x16xf32> to vector<256x16xf32>
    %c0_3 = arith.constant 0 : index
    %c0_4 = arith.constant 0 : index
    %3 = vector.load %arg2[%c0_3, %c0_4] : memref<16x4xf32, #tpu.memory_space<vmem>>, vector<16x4xf32>
    %cst = arith.constant dense<0.000000e+00> : vector<256x4xf32>
    %4 = tpu.matmul %2, %3, %cst {dimension_numbers = #tpu.dot_dimension_numbers<[1], [0], [0], [1], [0, 0, 1, 1], [], []>} : vector<256x16xf32>, vector<16x4xf32>, vector<256x4xf32> -> vector<256x4xf32>
    %c0_5 = arith.constant 0 : index
    %c0_6 = arith.constant 0 : index
    %5 = vector.load %arg3[%c0_5, %c0_6] : memref<1x4xf32, #tpu.memory_space<vmem>>, vector<1x4xf32>
    %6 = vector.broadcast %5 : vector<1x4xf32> to vector<256x4xf32>
    %7 = arith.addf %4, %6 : vector<256x4xf32>
    %cst_7 = arith.constant 0.000000e+00 : f32
    %8 = vector.broadcast %cst_7 : f32 to vector<256x4xf32>
    %9 = arith.maximumf %7, %8 : vector<256x4xf32>
    %cst_8 = arith.constant 0.000000e+00 : f32
    %10 = vector.broadcast %cst_8 : f32 to vector<18x18x4xf32>
    %c0_9 = arith.constant 0 : index
    %c0_10 = arith.constant 0 : index
    %c0_11 = arith.constant 0 : index
    %11 = vector.load %arg9[%c0_9, %c0_10, %c0_11] : memref<18x18x4xf32, #tpu.memory_space<vmem>>, vector<18x18x4xf32>
    tpu.vector_store %arg9[%c0_9, %c0_10, %c0_11], %10 {strides = array<i32>} : memref<18x18x4xf32, #tpu.memory_space<vmem>>, vector<18x18x4xf32>,
    %12 = vector.shape_cast %9 : vector<256x4xf32> to vector<16x16x4xf32>
    %c1 = arith.constant 1 : index
    %c1_12 = arith.constant 1 : index
    %c0_13 = arith.constant 0 : index
    %13 = vector.load %arg9[%c1, %c1_12, %c0_13] : memref<18x18x4xf32, #tpu.memory_space<vmem>>, vector<16x16x4xf32>
    tpu.vector_store %arg9[%c1, %c1_12, %c0_13], %12 {strides = array<i32>} : memref<18x18x4xf32, #tpu.memory_space<vmem>>, vector<16x16x4xf32>,
    %cst_14 = arith.constant 0.000000e+00 : f32
    %14 = vector.broadcast %cst_14 : f32 to vector<256x4xf32>
    %c0_15 = arith.constant 0 : index
    %c0_16 = arith.constant 0 : index
    %c0_17 = arith.constant 0 : index
    %15 = vector.load %arg9[%c0_15, %c0_16, %c0_17] : memref<18x18x4xf32, #tpu.memory_space<vmem>>, vector<16x16x4xf32>
    %16 = vector.shape_cast %15 : vector<16x16x4xf32> to vector<256x4xf32>
    %c0_18 = arith.constant 0 : index
    %c0_19 = arith.constant 0 : index
    %c0_20 = arith.constant 0 : index
    %c0_21 = arith.constant 0 : index
    %17 = vector.load %arg4[%c0_18, %c0_19, %c0_20, %c0_21] : memref<3x3x4x4xf32, #tpu.memory_space<vmem>>, vector<1x1x4x4xf32>
    %18 = vector.shape_cast %17 : vector<1x1x4x4xf32> to vector<4x4xf32>
    %cst_22 = arith.constant dense<0.000000e+00> : vector<256x4xf32>
    %19 = tpu.matmul %16, %18, %cst_22 {dimension_numbers = #tpu.dot_dimension_numbers<[1], [0], [0], [1], [0, 0, 1, 1], [], []>} : vector<256x4xf32>, vector<4x4xf32>, vector<256x4xf32> -> vector<256x4xf32>
    %20 = arith.addf %14, %19 : vector<256x4xf32>
    %c0_23 = arith.constant 0 : index
    %c1_24 = arith.constant 1 : index
    %c0_25 = arith.constant 0 : index
    %21 = vector.load %arg9[%c0_23, %c1_24, %c0_25] : memref<18x18x4xf32, #tpu.memory_space<vmem>>, vector<16x16x4xf32>
    %22 = vector.shape_cast %21 : vector<16x16x4xf32> to vector<256x4xf32>
    %c0_26 = arith.constant 0 : index
    %c1_27 = arith.constant 1 : index
    %c0_28 = arith.constant 0 : index
    %c0_29 = arith.constant 0 : index
    %23 = vector.load %arg4[%c0_26, %c1_27, %c0_28, %c0_29] : memref<3x3x4x4xf32, #tpu.memory_space<vmem>>, vector<1x1x4x4xf32>
    %24 = vector.shape_cast %23 : vector<1x1x4x4xf32> to vector<4x4xf32>
    %cst_30 = arith.constant dense<0.000000e+00> : vector<256x4xf32>
    %25 = tpu.matmul %22, %24, %cst_30 {dimension_numbers = #tpu.dot_dimension_numbers<[1], [0], [0], [1], [0, 0, 1, 1], [], []>} : vector<256x4xf32>, vector<4x4xf32>, vector<256x4xf32> -> vector<256x4xf32>
    %26 = arith.addf %20, %25 : vector<256x4xf32>
    %c0_31 = arith.constant 0 : index
    %c2 = arith.constant 2 : index
    %c0_32 = arith.constant 0 : index
    %27 = vector.load %arg9[%c0_31, %c2, %c0_32] : memref<18x18x4xf32, #tpu.memory_space<vmem>>, vector<16x16x4xf32>
    %28 = vector.shape_cast %27 : vector<16x16x4xf32> to vector<256x4xf32>
    %c0_33 = arith.constant 0 : index
    %c2_34 = arith.constant 2 : index
    %c0_35 = arith.constant 0 : index
    %c0_36 = arith.constant 0 : index
    %29 = vector.load %arg4[%c0_33, %c2_34, %c0_35, %c0_36] : memref<3x3x4x4xf32, #tpu.memory_space<vmem>>, vector<1x1x4x4xf32>
    %30 = vector.shape_cast %29 : vector<1x1x4x4xf32> to vector<4x4xf32>
    %cst_37 = arith.constant dense<0.000000e+00> : vector<256x4xf32>
    %31 = tpu.matmul %28, %30, %cst_37 {dimension_numbers = #tpu.dot_dimension_numbers<[1], [0], [0], [1], [0, 0, 1, 1], [], []>} : vector<256x4xf32>, vector<4x4xf32>, vector<256x4xf32> -> vector<256x4xf32>
    %32 = arith.addf %26, %31 : vector<256x4xf32>
    %c1_38 = arith.constant 1 : index
    %c0_39 = arith.constant 0 : index
    %c0_40 = arith.constant 0 : index
    %33 = vector.load %arg9[%c1_38, %c0_39, %c0_40] : memref<18x18x4xf32, #tpu.memory_space<vmem>>, vector<16x16x4xf32>
    %34 = vector.shape_cast %33 : vector<16x16x4xf32> to vector<256x4xf32>
    %c1_41 = arith.constant 1 : index
    %c0_42 = arith.constant 0 : index
    %c0_43 = arith.constant 0 : index
    %c0_44 = arith.constant 0 : index
    %35 = vector.load %arg4[%c1_41, %c0_42, %c0_43, %c0_44] : memref<3x3x4x4xf32, #tpu.memory_space<vmem>>, vector<1x1x4x4xf32>
    %36 = vector.shape_cast %35 : vector<1x1x4x4xf32> to vector<4x4xf32>
    %cst_45 = arith.constant dense<0.000000e+00> : vector<256x4xf32>
    %37 = tpu.matmul %34, %36, %cst_45 {dimension_numbers = #tpu.dot_dimension_numbers<[1], [0], [0], [1], [0, 0, 1, 1], [], []>} : vector<256x4xf32>, vector<4x4xf32>, vector<256x4xf32> -> vector<256x4xf32>
    %38 = arith.addf %32, %37 : vector<256x4xf32>
    %c1_46 = arith.constant 1 : index
    %c1_47 = arith.constant 1 : index
    %c0_48 = arith.constant 0 : index
    %39 = vector.load %arg9[%c1_46, %c1_47, %c0_48] : memref<18x18x4xf32, #tpu.memory_space<vmem>>, vector<16x16x4xf32>
    %40 = vector.shape_cast %39 : vector<16x16x4xf32> to vector<256x4xf32>
    %c1_49 = arith.constant 1 : index
    %c1_50 = arith.constant 1 : index
    %c0_51 = arith.constant 0 : index
    %c0_52 = arith.constant 0 : index
    %41 = vector.load %arg4[%c1_49, %c1_50, %c0_51, %c0_52] : memref<3x3x4x4xf32, #tpu.memory_space<vmem>>, vector<1x1x4x4xf32>
    %42 = vector.shape_cast %41 : vector<1x1x4x4xf32> to vector<4x4xf32>
    %cst_53 = arith.constant dense<0.000000e+00> : vector<256x4xf32>
    %43 = tpu.matmul %40, %42, %cst_53 {dimension_numbers = #tpu.dot_dimension_numbers<[1], [0], [0], [1], [0, 0, 1, 1], [], []>} : vector<256x4xf32>, vector<4x4xf32>, vector<256x4xf32> -> vector<256x4xf32>
    %44 = arith.addf %38, %43 : vector<256x4xf32>
    %c1_54 = arith.constant 1 : index
    %c2_55 = arith.constant 2 : index
    %c0_56 = arith.constant 0 : index
    %45 = vector.load %arg9[%c1_54, %c2_55, %c0_56] : memref<18x18x4xf32, #tpu.memory_space<vmem>>, vector<16x16x4xf32>
    %46 = vector.shape_cast %45 : vector<16x16x4xf32> to vector<256x4xf32>
    %c1_57 = arith.constant 1 : index
    %c2_58 = arith.constant 2 : index
    %c0_59 = arith.constant 0 : index
    %c0_60 = arith.constant 0 : index
    %47 = vector.load %arg4[%c1_57, %c2_58, %c0_59, %c0_60] : memref<3x3x4x4xf32, #tpu.memory_space<vmem>>, vector<1x1x4x4xf32>
    %48 = vector.shape_cast %47 : vector<1x1x4x4xf32> to vector<4x4xf32>
    %cst_61 = arith.constant dense<0.000000e+00> : vector<256x4xf32>
    %49 = tpu.matmul %46, %48, %cst_61 {dimension_numbers = #tpu.dot_dimension_numbers<[1], [0], [0], [1], [0, 0, 1, 1], [], []>} : vector<256x4xf32>, vector<4x4xf32>, vector<256x4xf32> -> vector<256x4xf32>
    %50 = arith.addf %44, %49 : vector<256x4xf32>
    %c2_62 = arith.constant 2 : index
    %c0_63 = arith.constant 0 : index
    %c0_64 = arith.constant 0 : index
    %51 = vector.load %arg9[%c2_62, %c0_63, %c0_64] : memref<18x18x4xf32, #tpu.memory_space<vmem>>, vector<16x16x4xf32>
    %52 = vector.shape_cast %51 : vector<16x16x4xf32> to vector<256x4xf32>
    %c2_65 = arith.constant 2 : index
    %c0_66 = arith.constant 0 : index
    %c0_67 = arith.constant 0 : index
    %c0_68 = arith.constant 0 : index
    %53 = vector.load %arg4[%c2_65, %c0_66, %c0_67, %c0_68] : memref<3x3x4x4xf32, #tpu.memory_space<vmem>>, vector<1x1x4x4xf32>
    %54 = vector.shape_cast %53 : vector<1x1x4x4xf32> to vector<4x4xf32>
    %cst_69 = arith.constant dense<0.000000e+00> : vector<256x4xf32>
    %55 = tpu.matmul %52, %54, %cst_69 {dimension_numbers = #tpu.dot_dimension_numbers<[1], [0], [0], [1], [0, 0, 1, 1], [], []>} : vector<256x4xf32>, vector<4x4xf32>, vector<256x4xf32> -> vector<256x4xf32>
    %56 = arith.addf %50, %55 : vector<256x4xf32>
    %c2_70 = arith.constant 2 : index
    %c1_71 = arith.constant 1 : index
    %c0_72 = arith.constant 0 : index
    %57 = vector.load %arg9[%c2_70, %c1_71, %c0_72] : memref<18x18x4xf32, #tpu.memory_space<vmem>>, vector<16x16x4xf32>
    %58 = vector.shape_cast %57 : vector<16x16x4xf32> to vector<256x4xf32>
    %c2_73 = arith.constant 2 : index
    %c1_74 = arith.constant 1 : index
    %c0_75 = arith.constant 0 : index
    %c0_76 = arith.constant 0 : index
    %59 = vector.load %arg4[%c2_73, %c1_74, %c0_75, %c0_76] : memref<3x3x4x4xf32, #tpu.memory_space<vmem>>, vector<1x1x4x4xf32>
    %60 = vector.shape_cast %59 : vector<1x1x4x4xf32> to vector<4x4xf32>
    %cst_77 = arith.constant dense<0.000000e+00> : vector<256x4xf32>
    %61 = tpu.matmul %58, %60, %cst_77 {dimension_numbers = #tpu.dot_dimension_numbers<[1], [0], [0], [1], [0, 0, 1, 1], [], []>} : vector<256x4xf32>, vector<4x4xf32>, vector<256x4xf32> -> vector<256x4xf32>
    %62 = arith.addf %56, %61 : vector<256x4xf32>
    %c2_78 = arith.constant 2 : index
    %c2_79 = arith.constant 2 : index
    %c0_80 = arith.constant 0 : index
    %63 = vector.load %arg9[%c2_78, %c2_79, %c0_80] : memref<18x18x4xf32, #tpu.memory_space<vmem>>, vector<16x16x4xf32>
    %64 = vector.shape_cast %63 : vector<16x16x4xf32> to vector<256x4xf32>
    %c2_81 = arith.constant 2 : index
    %c2_82 = arith.constant 2 : index
    %c0_83 = arith.constant 0 : index
    %c0_84 = arith.constant 0 : index
    %65 = vector.load %arg4[%c2_81, %c2_82, %c0_83, %c0_84] : memref<3x3x4x4xf32, #tpu.memory_space<vmem>>, vector<1x1x4x4xf32>
    %66 = vector.shape_cast %65 : vector<1x1x4x4xf32> to vector<4x4xf32>
    %cst_85 = arith.constant dense<0.000000e+00> : vector<256x4xf32>
    %67 = tpu.matmul %64, %66, %cst_85 {dimension_numbers = #tpu.dot_dimension_numbers<[1], [0], [0], [1], [0, 0, 1, 1], [], []>} : vector<256x4xf32>, vector<4x4xf32>, vector<256x4xf32> -> vector<256x4xf32>
    %68 = arith.addf %62, %67 : vector<256x4xf32>
    %c0_86 = arith.constant 0 : index
    %c0_87 = arith.constant 0 : index
    %69 = vector.load %arg5[%c0_86, %c0_87] : memref<1x4xf32, #tpu.memory_space<vmem>>, vector<1x4xf32>
    %70 = vector.broadcast %69 : vector<1x4xf32> to vector<256x4xf32>
    %71 = arith.addf %68, %70 : vector<256x4xf32>
    %cst_88 = arith.constant 0.000000e+00 : f32
    %72 = vector.broadcast %cst_88 : f32 to vector<256x4xf32>
    %73 = arith.maximumf %71, %72 : vector<256x4xf32>
    %c0_89 = arith.constant 0 : index
    %c0_90 = arith.constant 0 : index
    %74 = vector.load %arg6[%c0_89, %c0_90] : memref<4x16xf32, #tpu.memory_space<vmem>>, vector<4x16xf32>
    %cst_91 = arith.constant dense<0.000000e+00> : vector<256x16xf32>
    %75 = tpu.matmul %73, %74, %cst_91 {dimension_numbers = #tpu.dot_dimension_numbers<[1], [0], [0], [1], [0, 0, 1, 1], [], []>} : vector<256x4xf32>, vector<4x16xf32>, vector<256x16xf32> -> vector<256x16xf32>
    %c0_92 = arith.constant 0 : index
    %c0_93 = arith.constant 0 : index
    %76 = vector.load %arg7[%c0_92, %c0_93] : memref<1x16xf32, #tpu.memory_space<vmem>>, vector<1x16xf32>
    %77 = vector.broadcast %76 : vector<1x16xf32> to vector<256x16xf32>
    %78 = arith.addf %75, %77 : vector<256x16xf32>
    %79 = arith.addf %78, %2 : vector<256x16xf32>
    %cst_94 = arith.constant 0.000000e+00 : f32
    %80 = vector.broadcast %cst_94 : f32 to vector<256x16xf32>
    %81 = arith.maximumf %79, %80 : vector<256x16xf32>
    %82 = vector.shape_cast %81 : vector<256x16xf32> to vector<16x16x16xf32>
    %c0_95 = arith.constant 0 : index
    %c0_96 = arith.constant 0 : index
    %c0_97 = arith.constant 0 : index
    %c0_98 = arith.constant 0 : index
    %83 = vector.load %arg8[%c0_95, %c0_96, %c0_97, %c0_98] : memref<1x16x16x16xf32, #tpu.memory_space<vmem>>, vector<1x16x16x16xf32>
    %84 = vector.shape_cast %83 : vector<1x16x16x16xf32> to vector<16x16x16xf32>
    %85 = vector.shape_cast %82 : vector<16x16x16xf32> to vector<1x16x16x16xf32>
    tpu.vector_store %arg8[%c0_95, %c0_96, %c0_97, %c0_98], %85 {strides = array<i32>} : memref<1x16x16x16xf32, #tpu.memory_space<vmem>>, vector<1x16x16x16xf32>,
    return
  }
  func.func @transform_0(%arg0: i32) -> (i32, i32, i32, i32) {
    %c0_i32 = arith.constant 0 : i32
    %c0_i32_0 = arith.constant 0 : i32
    %c0_i32_1 = arith.constant 0 : i32
    %c0_i32_2 = arith.constant 0 : i32
    return %arg0, %c0_i32, %c0_i32_0, %c0_i32_1 : i32, i32, i32, i32
  }
  func.func @transform_1(%arg0: i32) -> (i32, i32) {
    %c0_i32 = arith.constant 0 : i32
    %c0_i32_0 = arith.constant 0 : i32
    %c0_i32_1 = arith.constant 0 : i32
    return %c0_i32, %c0_i32_0 : i32, i32
  }
  func.func @transform_2(%arg0: i32) -> (i32, i32) {
    %c0_i32 = arith.constant 0 : i32
    %c0_i32_0 = arith.constant 0 : i32
    %c0_i32_1 = arith.constant 0 : i32
    return %c0_i32, %c0_i32_0 : i32, i32
  }
  func.func @transform_3(%arg0: i32) -> (i32, i32, i32, i32) {
    %c0_i32 = arith.constant 0 : i32
    %c0_i32_0 = arith.constant 0 : i32
    %c0_i32_1 = arith.constant 0 : i32
    %c0_i32_2 = arith.constant 0 : i32
    %c0_i32_3 = arith.constant 0 : i32
    return %c0_i32, %c0_i32_0, %c0_i32_1, %c0_i32_2 : i32, i32, i32, i32
  }
  func.func @transform_4(%arg0: i32) -> (i32, i32) {
    %c0_i32 = arith.constant 0 : i32
    %c0_i32_0 = arith.constant 0 : i32
    %c0_i32_1 = arith.constant 0 : i32
    return %c0_i32, %c0_i32_0 : i32, i32
  }
  func.func @transform_5(%arg0: i32) -> (i32, i32) {
    %c0_i32 = arith.constant 0 : i32
    %c0_i32_0 = arith.constant 0 : i32
    %c0_i32_1 = arith.constant 0 : i32
    return %c0_i32, %c0_i32_0 : i32, i32
  }
  func.func @transform_6(%arg0: i32) -> (i32, i32) {
    %c0_i32 = arith.constant 0 : i32
    %c0_i32_0 = arith.constant 0 : i32
    %c0_i32_1 = arith.constant 0 : i32
    return %c0_i32, %c0_i32_0 : i32, i32
  }
  func.func @transform_7(%arg0: i32) -> (i32, i32, i32, i32) {
    %c0_i32 = arith.constant 0 : i32
    %c0_i32_0 = arith.constant 0 : i32
    %c0_i32_1 = arith.constant 0 : i32
    %c0_i32_2 = arith.constant 0 : i32
    return %arg0, %c0_i32, %c0_i32_0, %c0_i32_1 : i32, i32, i32, i32
  }
}

</mosaic_0001>

<llo_original>
// kernel: tpu_custom_call.1
$region0: #{tpu_custom_call.1}
  #allocation0 [shape = 'u32[]', space=smem, size = 0x4, offset = 0x4, fixed_abs, tag = 'smem constant byte address 0x4 - core index']
  #allocation1 [shape = 'u32[144,128]{1,0:T(1,128)}', space=vmem, size = 0x12000, scoped, tag = 'internal scratch']
  #allocation2 [shape = 'f32[18,18,4]{2,1,0:T(8,128)}', space=vmem, size = 0x36000, scoped, tag = 'scratch operand']
  %s0 = inlined_call_operand.hbm [shape: f32[2,16,16,16], index: 0, kind: input, shape index: {}]
  %s1 = inlined_call_operand.vmem [shape: f32[16,4], index: 1, kind: input, shape index: {}]
  %s2 = inlined_call_operand.vmem [shape: f32[1,4], index: 2, kind: input, shape index: {}]
  %s3 = inlined_call_operand.hbm [shape: f32[3,3,4,4], index: 3, kind: input, shape index: {}]
  %s4 = inlined_call_operand.vmem [shape: f32[1,4], index: 4, kind: input, shape index: {}]
  %s5 = inlined_call_operand.vmem [shape: f32[4,16], index: 5, kind: input, shape index: {}]
  %s6 = inlined_call_operand.vmem [shape: f32[1,16], index: 6, kind: input, shape index: {}]
  %s7 = inlined_call_operand.hbm [shape: f32[2,16,16,16], index: 7, kind: output, shape index: {}]
  %s8 = sld [smem:[#allocation0]]
  $region69: #{tpu_custom_call.1} parent=0
    _
  %s10 = ssub.s32 1, %s8
  %s11 = scalar_select 0, %s10, %s8
  $region1: #{tpu_custom_call.1} parent=0
    #allocation3 [shape = 'u8[262144]{0}', space=vmem, size = 0x40000, scoped, tag = 'input window, operand 0']
    #allocation4 [shape = 's32[2]{0}', space=sflag, size = 0x8, scoped, tag = 'scoped memory for tpu_custom_call.1']
    #allocation5 [shape = 's32[2]{0}', space=sflag, size = 0x8, scoped, tag = 'scoped memory for tpu_custom_call.1']
    #allocation6 [shape = 'u8[18432]{0}', space=vmem, size = 0x4800, scoped, tag = 'input window, operand 3, single buffered']
    #allocation7 [shape = 's32[1]{0}', space=sflag, size = 0x4, scoped, tag = 'scoped memory for tpu_custom_call.1']
    #allocation8 [shape = 'u8[262144]{0}', space=vmem, size = 0x40000, scoped, tag = 'output window, operand 0']
    %12 = vsyncpa [#allocation4], 0
    %s13 = scalar_lea.sflag [#allocation4], 1
    %14 = vsyncpa %s13, 0
    %15 = vsyncpa [#allocation7], 0
    %16 = vsyncpa [#allocation5], 0
    %s17 = scalar_lea.sflag [#allocation5], 1
    %18 = vsyncpa %s17, 0
    loop: start=0, step=1, limit=4
    $region2: #{tpu_custom_call.1} parent=1 // loop_pre_header
      _
    $region3: #{tpu_custom_call.1} parent=1 // loop_header
      %s20 = sphi 0, %s24
      %p21 = scmp.ge.s32.totalorder %s20, 4
      %s30 = sphi 0, %s32
      %s33 = sphi 0, %s30
      %s34 = sphi 0, %s33
      %s50 = sphi 0, %s34
      %s54 = sphi 0, %s54
      %s56 = sphi 0, %s54
      %s57 = sphi 0, %s56
      %s71 = sphi 0, %s57
      %s75 = sphi 0, %s75
      %s77 = sphi 0, %s75
      %s78 = sphi 0, %s77
      %s92 = sphi 0, %s78
      %s96 = sphi 0, %s96
      %s98 = sphi 0, %s96
      %s99 = sphi 0, %s98
      %s113 = sphi 0, %s99
      %s117 = sphi 0, %s117
      %s119 = sphi 0, %s117
      %s120 = sphi 0, %s119
      %s134 = sphi 0, %s120
      %s138 = sphi 0, %s138
      %s140 = sphi 0, %s138
      %s141 = sphi 0, %s140
      %s155 = sphi 0, %s141
      %s159 = sphi 0, %s159
      %s161 = sphi 0, %s159
      %s162 = sphi 0, %s161
      %s176 = sphi 0, %s162
      %s182 = sphi 0, %s184
      %s185 = sphi 0, %s182
      %s186 = sphi 0, %s185
      %s202 = sphi 0, %s186
    $region4: #{tpu_custom_call.1} parent=1 // loop_header_branch
      %23 = sbr.rel (%p21) target = $region8
    $region5: #{tpu_custom_call.1} parent=1 // loop_body
      %s25 = ssub.s32 %s20, 1
      %s26 = ssub.s32 %s20, 2
      %s27 = sadd.s32 %s20, 1
      %s28 = ssub.s32 %s20, %s27
      %p29 = scmp.eq.s32.totalorder %s28, 0
      %s31 = sadd.s32 %s30, 1
      %s32 = scalar_select %p29, %s30, %s31
      %p35 = pneg %p29
      %p36 = scmp.eq.s32.totalorder %s20, 1
      %p37 = por %p35, %p36
      %p38 = scmp.ne.s32.totalorder %s30, %s33
      %p39 = scmp.eq.s32.totalorder %s20, 0
      %p40 = por %p38, %p39
      %p41 = scmp.ne.s32.totalorder %s30, %s33
      %p42 = scmp.eq.s32.totalorder %s25, 1
      %p43 = por %p41, %p42
      %p44 = scmp.ne.s32.totalorder %s33, %s34
      %p45 = scmp.eq.s32.totalorder %s25, 0
      %p46 = por %p44, %p45
      %p47 = scmp.ne.s32.totalorder %s33, %s34
      %p48 = scmp.eq.s32.totalorder %s26, 1
      %p49 = por %p47, %p48
      %p51 = scmp.ne.s32.totalorder %s34, %s50
      %p52 = scmp.eq.s32.totalorder %s26, 0
      %p53 = por %p51, %p52
      %s55 = sadd.s32 %s54, 1
      %p58 = scmp.eq.s32.totalorder %s20, 1
      %p59 = scmp.ne.s32.totalorder %s54, %s56
      %p60 = scmp.eq.s32.totalorder %s20, 0
      %p61 = por %p59, %p60
      %p62 = scmp.ne.s32.totalorder %s54, %s56
      %p63 = scmp.eq.s32.totalorder %s25, 1
      %p64 = por %p62, %p63
      %p65 = scmp.ne.s32.totalorder %s56, %s57
      %p66 = scmp.eq.s32.totalorder %s25, 0
      %p67 = por %p65, %p66
      %p68 = scmp.ne.s32.totalorder %s56, %s57
      %p69 = scmp.eq.s32.totalorder %s26, 1
      %p70 = por %p68, %p69
      %p72 = scmp.ne.s32.totalorder %s57, %s71
      %p73 = scmp.eq.s32.totalorder %s26, 0
      %p74 = por %p72, %p73
      %s76 = sadd.s32 %s75, 1
      %p79 = scmp.eq.s32.totalorder %s20, 1
      %p80 = scmp.ne.s32.totalorder %s75, %s77
      %p81 = scmp.eq.s32.totalorder %s20, 0
      %p82 = por %p80, %p81
      %p83 = scmp.ne.s32.totalorder %s75, %s77
      %p84 = scmp.eq.s32.totalorder %s25, 1
      %p85 = por %p83, %p84
      %p86 = scmp.ne.s32.totalorder %s77, %s78
      %p87 = scmp.eq.s32.totalorder %s25, 0
      %p88 = por %p86, %p87
      %p89 = scmp.ne.s32.totalorder %s77, %s78
      %p90 = scmp.eq.s32.totalorder %s26, 1
      %p91 = por %p89, %p90
      %p93 = scmp.ne.s32.totalorder %s78, %s92
      %p94 = scmp.eq.s32.totalorder %s26, 0
      %p95 = por %p93, %p94
      %s97 = sadd.s32 %s96, 1
      %p100 = scmp.eq.s32.totalorder %s20, 1
      %p101 = scmp.ne.s32.totalorder %s96, %s98
      %p102 = scmp.eq.s32.totalorder %s20, 0
      %p103 = por %p101, %p102
      %p104 = scmp.ne.s32.totalorder %s96, %s98
      %p105 = scmp.eq.s32.totalorder %s25, 1
      %p106 = por %p104, %p105
      %p107 = scmp.ne.s32.totalorder %s98, %s99
      %p108 = scmp.eq.s32.totalorder %s25, 0
      %p109 = por %p107, %p108
      %p110 = scmp.ne.s32.totalorder %s98, %s99
      %p111 = scmp.eq.s32.totalorder %s26, 1
      %p112 = por %p110, %p111
      %p114 = scmp.ne.s32.totalorder %s99, %s113
      %p115 = scmp.eq.s32.totalorder %s26, 0
      %p116 = por %p114, %p115
      %s118 = sadd.s32 %s117, 1
      %p121 = scmp.eq.s32.totalorder %s20, 1
      %p122 = scmp.ne.s32.totalorder %s117, %s119
      %p123 = scmp.eq.s32.totalorder %s20, 0
      %p124 = por %p122, %p123
      %p125 = scmp.ne.s32.totalorder %s117, %s119
      %p126 = scmp.eq.s32.totalorder %s25, 1
      %p127 = por %p125, %p126
      %p128 = scmp.ne.s32.totalorder %s119, %s120
      %p129 = scmp.eq.s32.totalorder %s25, 0
      %p130 = por %p128, %p129
      %p131 = scmp.ne.s32.totalorder %s119, %s120
      %p132 = scmp.eq.s32.totalorder %s26, 1
      %p133 = por %p131, %p132
      %p135 = scmp.ne.s32.totalorder %s120, %s134
      %p136 = scmp.eq.s32.totalorder %s26, 0
      %p137 = por %p135, %p136
      %s139 = sadd.s32 %s138, 1
      %p142 = scmp.eq.s32.totalorder %s20, 1
      %p143 = scmp.ne.s32.totalorder %s138, %s140
      %p144 = scmp.eq.s32.totalorder %s20, 0
      %p145 = por %p143, %p144
      %p146 = scmp.ne.s32.totalorder %s138, %s140
      %p147 = scmp.eq.s32.totalorder %s25, 1
      %p148 = por %p146, %p147
      %p149 = scmp.ne.s32.totalorder %s140, %s141
      %p150 = scmp.eq.s32.totalorder %s25, 0
      %p151 = por %p149, %p150
      %p152 = scmp.ne.s32.totalorder %s140, %s141
      %p153 = scmp.eq.s32.totalorder %s26, 1
      %p154 = por %p152, %p153
      %p156 = scmp.ne.s32.totalorder %s141, %s155
      %p157 = scmp.eq.s32.totalorder %s26, 0
      %p158 = por %p156, %p157
      %s160 = sadd.s32 %s159, 1
      %p163 = scmp.eq.s32.totalorder %s20, 1
      %p164 = scmp.ne.s32.totalorder %s159, %s161
      %p165 = scmp.eq.s32.totalorder %s20, 0
      %p166 = por %p164, %p165
      %p167 = scmp.ne.s32.totalorder %s159, %s161
      %p168 = scmp.eq.s32.totalorder %s25, 1
      %p169 = por %p167, %p168
      %p170 = scmp.ne.s32.totalorder %s161, %s162
      %p171 = scmp.eq.s32.totalorder %s25, 0
      %p172 = por %p170, %p171
      %p173 = scmp.ne.s32.totalorder %s161, %s162
      %p174 = scmp.eq.s32.totalorder %s26, 1
      %p175 = por %p173, %p174
      %p177 = scmp.ne.s32.totalorder %s162, %s176
      %p178 = scmp.eq.s32.totalorder %s26, 0
      %p179 = por %p177, %p178
      %s180 = ssub.s32 %s20, %s27
      %p181 = scmp.eq.s32.totalorder %s180, 0
      %s183 = sadd.s32 %s182, 1
      %s184 = scalar_select %p181, %s182, %s183
      %p187 = pneg %p181
      %p188 = scmp.eq.s32.totalorder %s20, 1
      %p189 = por %p187, %p188
      %p190 = scmp.ne.s32.totalorder %s182, %s185
      %p191 = scmp.eq.s32.totalorder %s20, 0
      %p192 = por %p190, %p191
      %p193 = scmp.ne.s32.totalorder %s182, %s185
      %p194 = scmp.eq.s32.totalorder %s25, 1
      %p195 = por %p193, %p194
      %p196 = scmp.ne.s32.totalorder %s185, %s186
      %p197 = scmp.eq.s32.totalorder %s25, 0
      %p198 = por %p196, %p197
      %p199 = scmp.ne.s32.totalorder %s185, %s186
      %p200 = scmp.eq.s32.totalorder %s26, 1
      %p201 = por %p199, %p200
      %p203 = scmp.ne.s32.totalorder %s186, %s202
      %p204 = scmp.eq.s32.totalorder %s26, 0
      %p205 = por %p203, %p204
      %p206 = scmp.le.s32.totalorder 1, %s20
      %p207 = scmp.lt.s32.totalorder %s20, 3
      %p208 = pnand %p206, %p207
      %p209 = pneg %p208
      // Predicated region
      $region9: #{tpu_custom_call.1} parent=5 // pred_check
        _
      $region10: #{tpu_custom_call.1} parent=5 // pred_check_branch
        %211 = sbr.rel (%p208) target = $region12
      $region11: #{tpu_custom_call.1} parent=5 // pred_region
        %s212 = ssub.s32 %s20, 1
        // Predicated region
        $region13: #{tpu_custom_call.1} parent=11 // pred_check
          %p213 = pneg %p67
        $region14: #{tpu_custom_call.1} parent=11 // pred_check_branch
          %215 = sbr.rel (%p213) target = $region16
        $region15: #{tpu_custom_call.1} parent=11 // pred_region
          _
        $region16: #{tpu_custom_call.1} parent=11 // pred_fallthru
          _
        // Predicated region
        $region17: #{tpu_custom_call.1} parent=11 // pred_check
          %p216 = pneg %p88
        $region18: #{tpu_custom_call.1} parent=11 // pred_check_branch
          %218 = sbr.rel (%p216) target = $region20
        $region19: #{tpu_custom_call.1} parent=11 // pred_region
          _
        $region20: #{tpu_custom_call.1} parent=11 // pred_fallthru
          _
        // Predicated region
        $region21: #{tpu_custom_call.1} parent=11 // pred_check
          %p219 = pneg %p109
        $region22: #{tpu_custom_call.1} parent=11 // pred_check_branch
          %221 = sbr.rel (%p219) target = $region24
        $region23: #{tpu_custom_call.1} parent=11 // pred_region
          %s223 = ssub.s32 576, 576
          %224 = vsyncadd [#allocation7], %s223
          %s225 = sshll.u32 [#allocation6], 4
          %s226 = int_to_ptr.vmem [resolvable:$true] %s225
          %231 = dma.hbm_to_vmem [thread:$0]  %s3, 576, %s226, [#allocation7], 64, 64, 4
        $region24: #{tpu_custom_call.1} parent=11 // pred_fallthru
          _
        // Predicated region
        $region25: #{tpu_custom_call.1} parent=11 // pred_check
          %p232 = pneg %p130
        $region26: #{tpu_custom_call.1} parent=11 // pred_check_branch
          %234 = sbr.rel (%p232) target = $region28
        $region27: #{tpu_custom_call.1} parent=11 // pred_region
          _
        $region28: #{tpu_custom_call.1} parent=11 // pred_fallthru
          _
        // Predicated region
        $region29: #{tpu_custom_call.1} parent=11 // pred_check
          %p235 = pneg %p151
        $region30: #{tpu_custom_call.1} parent=11 // pred_check_branch
          %237 = sbr.rel (%p235) target = $region32
        $region31: #{tpu_custom_call.1} parent=11 // pred_region
          _
        $region32: #{tpu_custom_call.1} parent=11 // pred_fallthru
          _
        // Predicated region
        $region33: #{tpu_custom_call.1} parent=11 // pred_check
          %p238 = pneg %p172
        $region34: #{tpu_custom_call.1} parent=11 // pred_check_branch
          %240 = sbr.rel (%p238) target = $region36
        $region35: #{tpu_custom_call.1} parent=11 // pred_region
          _
        $region36: #{tpu_custom_call.1} parent=11 // pred_fallthru
          _
      $region12: #{tpu_custom_call.1} parent=5 // pred_fallthru
        _
      %p241 = scmp.lt.s32.totalorder %s20, 2
      // Predicated region
      $region37: #{tpu_custom_call.1} parent=5 // pred_check
        %p242 = pneg %p241
      $region38: #{tpu_custom_call.1} parent=5 // pred_check_branch
        %244 = sbr.rel (%p242) target = $region40
      $region39: #{tpu_custom_call.1} parent=5 // pred_region
        // Predicated region
        $region41: #{tpu_custom_call.1} parent=39 // pred_check
          %p245 = pneg %p40
        $region42: #{tpu_custom_call.1} parent=39 // pred_check_branch
          %247 = sbr.rel (%p245) target = $region44
        $region43: #{tpu_custom_call.1} parent=39 // pred_region
          %s248 = sand.u32 %s30, 1
          %s249 = scalar_lea.sflag [#allocation4], %s248
          %s250 = sand.u32 %s30, 1
          %s251 = smul.addr %s250, 256
          %s252 = scalar_lea.vmem [#allocation3], %s251
          %s254 = ssub.s32 4096, 4096
          %255 = vsyncadd %s249, %s254
          %s256 = smul.addr %s20, 32
          %s257 = smul.addr %s256, 128
          %s258 = scalar_lea.hbm %s0, %s257
          %s259 = sshll.u32 %s252, 4
          %s260 = int_to_ptr.vmem [resolvable:$true] %s259
          %265 = dma.hbm_to_vmem [thread:$0]  %s258, 4096, %s260, %s249, 128, 128, 8
        $region44: #{tpu_custom_call.1} parent=39 // pred_fallthru
          _
      $region40: #{tpu_custom_call.1} parent=5 // pred_fallthru
        _
      %p266 = scmp.le.s32.totalorder 1, %s20
      %p267 = scmp.lt.s32.totalorder %s20, 3
      %p268 = pnand %p266, %p267
      %p269 = pneg %p268
      // Predicated region
      $region45: #{tpu_custom_call.1} parent=5 // pred_check
        _
      $region46: #{tpu_custom_call.1} parent=5 // pred_check_branch
        %271 = sbr.rel (%p268) target = $region48
      $region47: #{tpu_custom_call.1} parent=5 // pred_region
        %s272 = ssub.s32 %s20, 1
        %s273 = sand.u32 %s33, 1
        %s274 = scalar_lea.sflag [#allocation4], %s273
        %s275 = sand.u32 %s33, 1
        %s276 = smul.addr %s275, 256
        %s277 = scalar_lea.vmem [#allocation3], %s276
        // Predicated region
        $region49: #{tpu_custom_call.1} parent=47 // pred_check
          %p278 = pneg %p46
        $region50: #{tpu_custom_call.1} parent=47 // pred_check_branch
          %280 = sbr.rel (%p278) target = $region52
        $region51: #{tpu_custom_call.1} parent=47 // pred_region
          %281 = dma.done %s274, 4096
        $region52: #{tpu_custom_call.1} parent=47 // pred_fallthru
          _
        // Predicated region
        $region53: #{tpu_custom_call.1} parent=47 // pred_check
          %p282 = pneg %p109
        $region54: #{tpu_custom_call.1} parent=47 // pred_check_branch
          %284 = sbr.rel (%p282) target = $region56
        $region55: #{tpu_custom_call.1} parent=47 // pred_region
          %285 = dma.done [#allocation7], 576
        $region56: #{tpu_custom_call.1} parent=47 // pred_fallthru
          _
        %s286 = sand.u32 %s33, 1
        %s287 = scalar_lea.sflag [#allocation4], %s286
        %s288 = sand.u32 %s33, 1
        %s289 = smul.addr %s288, 256
        %s290 = scalar_lea.vmem [#allocation3], %s289
        %p291 = pneg %p46
        %p292 = pneg %p43
        %p293 = pneg %p67
        %p294 = pneg %p64
        %p295 = pneg %p88
        %p296 = pneg %p85
        %p297 = pneg %p109
        %p298 = pneg %p106
        %p299 = pneg %p130
        %p300 = pneg %p127
        %p301 = pneg %p151
        %p302 = pneg %p148
        %p303 = pneg %p172
        %p304 = pneg %p169
        %p305 = pneg %p198
        %p306 = pneg %p195
        %s307 = sand.u32 %s185, 1
        %s308 = scalar_lea.sflag [#allocation5], %s307
        %s309 = sand.u32 %s185, 1
        %s310 = smul.addr %s309, 256
        %s311 = scalar_lea.vmem [#allocation8], %s310
        %v312 = vld [vmem:[%s277] sm:$0xff]
        %v313 = vld [vmem:[%s277 + $0x8] sm:$0xff]
        %v314 = vld [vmem:[%s277 + $0x10] sm:$0xff]
        %v315 = vld [vmem:[%s277 + $0x18] sm:$0xff]
        %v316 = vld [vmem:[%s277 + $0x20] sm:$0xff]
        %v317 = vld [vmem:[%s277 + $0x28] sm:$0xff]
        %v318 = vld [vmem:[%s277 + $0x30] sm:$0xff]
        %v319 = vld [vmem:[%s277 + $0x38] sm:$0xff]
        %v320 = vld [vmem:[%s277 + $0x40] sm:$0xff]
        %v321 = vld [vmem:[%s277 + $0x48] sm:$0xff]
        %v322 = vld [vmem:[%s277 + $0x50] sm:$0xff]
        %v323 = vld [vmem:[%s277 + $0x58] sm:$0xff]
        %v324 = vld [vmem:[%s277 + $0x60] sm:$0xff]
        %v325 = vld [vmem:[%s277 + $0x68] sm:$0xff]
        %v326 = vld [vmem:[%s277 + $0x70] sm:$0xff]
        %v327 = vld [vmem:[%s277 + $0x78] sm:$0xff]
        %v328 = vld [vmem:[%s277 + $0x80] sm:$0xff]
        %v329 = vld [vmem:[%s277 + $0x88] sm:$0xff]
        %v330 = vld [vmem:[%s277 + $0x90] sm:$0xff]
        %v331 = vld [vmem:[%s277 + $0x98] sm:$0xff]
        %v332 = vld [vmem:[%s277 + $0xa0] sm:$0xff]
        %v333 = vld [vmem:[%s277 + $0xa8] sm:$0xff]
        %v334 = vld [vmem:[%s277 + $0xb0] sm:$0xff]
        %v335 = vld [vmem:[%s277 + $0xb8] sm:$0xff]
        %v336 = vld [vmem:[%s277 + $0xc0] sm:$0xff]
        %v337 = vld [vmem:[%s277 + $0xc8] sm:$0xff]
        %v338 = vld [vmem:[%s277 + $0xd0] sm:$0xff]
        %v339 = vld [vmem:[%s277 + $0xd8] sm:$0xff]
        %v340 = vld [vmem:[%s277 + $0xe0] sm:$0xff]
        %v341 = vld [vmem:[%s277 + $0xe8] sm:$0xff]
        %v342 = vld [vmem:[%s277 + $0xf0] sm:$0xff]
        %v343 = vld [vmem:[%s277 + $0xf8] sm:$0xff]
        %v344 = vld [vmem:[%s1] sm:$0xff]
        %v345 = vld [vmem:[%s1 + $0x8] sm:$0xff]
        %v346 = vld [vmem:[%s2] sm:$0x1]
        %v348 = vlaneseq
        %v349 = vshrl.u32 %v348, 7
        %v350 = vsub.s32 0, %v349
        %v351 = vrot.slane %v346, %v350
        %vm353 = vcmask 130048
        %v355 = vsel %vm353, %v312, 0
        %v358 = vsel %vm353, %v313, 0
        %v361 = vsel %vm353, %v314, 0
        %v364 = vsel %vm353, %v315, 0
        %v367 = vsel %vm353, %v316, 0
        %v370 = vsel %vm353, %v317, 0
        %v373 = vsel %vm353, %v318, 0
        %v376 = vsel %vm353, %v319, 0
        %v379 = vsel %vm353, %v320, 0
        %v382 = vsel %vm353, %v321, 0
        %v385 = vsel %vm353, %v322, 0
        %v388 = vsel %vm353, %v323, 0
        %v391 = vsel %vm353, %v324, 0
        %v394 = vsel %vm353, %v325, 0
        %v397 = vsel %vm353, %v326, 0
        %v400 = vsel %vm353, %v327, 0
        %v403 = vsel %vm353, %v328, 0
        %v406 = vsel %vm353, %v329, 0
        %v409 = vsel %vm353, %v330, 0
        %v412 = vsel %vm353, %v331, 0
        %v415 = vsel %vm353, %v332, 0
        %v418 = vsel %vm353, %v333, 0
        %v421 = vsel %vm353, %v334, 0
        %v424 = vsel %vm353, %v335, 0
        %v427 = vsel %vm353, %v336, 0
        %v430 = vsel %vm353, %v337, 0
        %v433 = vsel %vm353, %v338, 0
        %v436 = vsel %vm353, %v339, 0
        %v439 = vsel %vm353, %v340, 0
        %v442 = vsel %vm353, %v341, 0
        %v445 = vsel %vm353, %v342, 0
        %v448 = vsel %vm353, %v343, 0
        %450 = vmatprep.subr.mxu0 0.0
        %451 = vmatpush1.msra.mxu0 0.0
        %452 = vmatprep.subr.mxu0 0.0
        %453 = vmatpush1.msra.mxu0 0.0
        %454 = vmatprep.subr.mxu0 0.0
        %455 = vmatpush1.msra.mxu0 0.0
        %456 = vmatprep.subr.mxu0 0.0
        %457 = vmatpush1.msra.mxu0 0.0
        %458 = vmatprep.subr.mxu0 0.0
        %459 = vmatpush1.msra.mxu0 0.0
        %460 = vmatprep.subr.mxu0 0.0
        %461 = vmatpush1.msra.mxu0 0.0
        %462 = vmatprep.subr.mxu0 0.0
        %463 = vmatpush1.msra.mxu0 0.0
        %464 = vmatprep.subr.mxu0 0.0
        %465 = vmatpush1.msra.mxu0 0.0
        %466 = vmatprep.subr.mxu0 0.0
        %467 = vmatpush1.msra.mxu0 0.0
        %468 = vmatprep.subr.mxu0 0.0
        %469 = vmatpush1.msra.mxu0 0.0
        %470 = vmatprep.subr.mxu0 0.0
        %471 = vmatpush1.msra.mxu0 0.0
        %472 = vmatprep.subr.mxu0 0.0
        %473 = vmatpush1.msra.mxu0 0.0
        %474 = vmatprep.subr.mxu0 0.0
        %475 = vmatpush1.msra.mxu0 0.0
        %476 = vmatprep.subr.mxu0 0.0
        %477 = vmatpush1.msra.mxu0 0.0
        %478 = vmatprep.subr.mxu0 0.0
        %479 = vmatpush1.msra.mxu0 %v345
        %480 = vmatprep.subr.mxu0 0.0
        %481 = vmatpush1.msra.mxu0 %v344
        %482 = vmatprep.subr.mxu0 0.0
        %483 = vmatpush2.msra.mxu0 0.0
        %484 = vmatprep.subr.mxu0 0.0
        %485 = vmatpush2.msra.mxu0 0.0
        %486 = vmatprep.subr.mxu0 0.0
        %487 = vmatpush2.msra.mxu0 0.0
        %488 = vmatprep.subr.mxu0 0.0
        %489 = vmatpush2.msra.mxu0 0.0
        %490 = vmatprep.subr.mxu0 0.0
        %491 = vmatpush2.msra.mxu0 0.0
        %492 = vmatprep.subr.mxu0 0.0
        %493 = vmatpush2.msra.mxu0 0.0
        %494 = vmatprep.subr.mxu0 0.0
        %495 = vmatpush2.msra.mxu0 0.0
        %496 = vmatprep.subr.mxu0 0.0
        %497 = vmatpush2.msra.mxu0 0.0
        %498 = vmatprep.subr.mxu0 0.0
        %499 = vmatpush2.msra.mxu0 0.0
        %500 = vmatprep.subr.mxu0 0.0
        %501 = vmatpush2.msra.mxu0 0.0
        %502 = vmatprep.subr.mxu0 0.0
        %503 = vmatpush2.msra.mxu0 0.0
        %504 = vmatprep.subr.mxu0 0.0
        %505 = vmatpush2.msra.mxu0 0.0
        %506 = vmatprep.subr.mxu0 0.0
        %507 = vmatpush2.msra.mxu0 0.0
        %508 = vmatprep.subr.mxu0 0.0
        %509 = vmatpush2.msra.mxu0 0.0
        %510 = vmatprep.subr.mxu0 0.0
        %511 = vmatpush2.msra.mxu0 0.0
        %512 = vmatprep.subr.mxu0 0.0
        %513 = vmatpush2.msra.mxu0 0.0
        %514 = vmatprep.mubr.f32.mxu0 0.0
        %515 = vmatmul.mubr.f32.gmra.mxu0 %v355
        %v516 = vpop.f32.mrf.mxu0
        %v517 = vadd.f32 %v351, %v516
        %v518 = vpop.f32.mrf.mxu0
        %519 = vmatprep.mubr.f32.mxu0 0.0
        %520 = vmatmul.mubr.f32.gmra.mxu0 %v358
        %v521 = vpop.f32.mrf.mxu0
        %v522 = vadd.f32 %v351, %v521
        %v523 = vpop.f32.mrf.mxu0
        %524 = vmatprep.mubr.f32.mxu0 0.0
        %525 = vmatmul.mubr.f32.gmra.mxu0 %v361
        %v526 = vpop.f32.mrf.mxu0
        %v527 = vadd.f32 %v351, %v526
        %v528 = vpop.f32.mrf.mxu0
        %529 = vmatprep.mubr.f32.mxu0 0.0
        %530 = vmatmul.mubr.f32.gmra.mxu0 %v364
        %v531 = vpop.f32.mrf.mxu0
        %v532 = vadd.f32 %v351, %v531
        %v533 = vpop.f32.mrf.mxu0
        %534 = vmatprep.mubr.f32.mxu0 0.0
        %535 = vmatmul.mubr.f32.gmra.mxu0 %v367
        %v536 = vpop.f32.mrf.mxu0
        %v537 = vadd.f32 %v351, %v536
        %v538 = vpop.f32.mrf.mxu0
        %539 = vmatprep.mubr.f32.mxu0 0.0
        %540 = vmatmul.mubr.f32.gmra.mxu0 %v370
        %v541 = vpop.f32.mrf.mxu0
        %v542 = vadd.f32 %v351, %v541
        %v543 = vpop.f32.mrf.mxu0
        %544 = vmatprep.mubr.f32.mxu0 0.0
        %545 = vmatmul.mubr.f32.gmra.mxu0 %v373
        %v546 = vpop.f32.mrf.mxu0
        %v547 = vadd.f32 %v351, %v546
        %v548 = vpop.f32.mrf.mxu0
        %549 = vmatprep.mubr.f32.mxu0 0.0
        %550 = vmatmul.mubr.f32.gmra.mxu0 %v376
        %v551 = vpop.f32.mrf.mxu0
        %v552 = vadd.f32 %v351, %v551
        %v553 = vpop.f32.mrf.mxu0
        %554 = vmatprep.mubr.f32.mxu0 0.0
        %555 = vmatmul.mubr.f32.gmra.mxu0 %v379
        %v556 = vpop.f32.mrf.mxu0
        %v557 = vadd.f32 %v351, %v556
        %v558 = vpop.f32.mrf.mxu0
        %559 = vmatprep.mubr.f32.mxu0 0.0
        %560 = vmatmul.mubr.f32.gmra.mxu0 %v382
        %v561 = vpop.f32.mrf.mxu0
        %v562 = vadd.f32 %v351, %v561
        %v563 = vpop.f32.mrf.mxu0
        %564 = vmatprep.mubr.f32.mxu0 0.0
        %565 = vmatmul.mubr.f32.gmra.mxu0 %v385
        %v566 = vpop.f32.mrf.mxu0
        %v567 = vadd.f32 %v351, %v566
        %v568 = vpop.f32.mrf.mxu0
        %569 = vmatprep.mubr.f32.mxu0 0.0
        %570 = vmatmul.mubr.f32.gmra.mxu0 %v388
        %v571 = vpop.f32.mrf.mxu0
        %v572 = vadd.f32 %v351, %v571
        %v573 = vpop.f32.mrf.mxu0
        %574 = vmatprep.mubr.f32.mxu0 0.0
        %575 = vmatmul.mubr.f32.gmra.mxu0 %v391
        %v576 = vpop.f32.mrf.mxu0
        %v577 = vadd.f32 %v351, %v576
        %v578 = vpop.f32.mrf.mxu0
        %579 = vmatprep.mubr.f32.mxu0 0.0
        %580 = vmatmul.mubr.f32.gmra.mxu0 %v394
        %v581 = vpop.f32.mrf.mxu0
        %v582 = vadd.f32 %v351, %v581
        %v583 = vpop.f32.mrf.mxu0
        %584 = vmatprep.mubr.f32.mxu0 0.0
        %585 = vmatmul.mubr.f32.gmra.mxu0 %v397
        %v586 = vpop.f32.mrf.mxu0
        %v587 = vadd.f32 %v351, %v586
        %v588 = vpop.f32.mrf.mxu0
        %589 = vmatprep.mubr.f32.mxu0 0.0
        %590 = vmatmul.mubr.f32.gmra.mxu0 %v400
        %v591 = vpop.f32.mrf.mxu0
        %v592 = vadd.f32 %v351, %v591
        %v593 = vpop.f32.mrf.mxu0
        %594 = vmatprep.mubr.f32.mxu0 0.0
        %595 = vmatmul.mubr.f32.gmra.mxu0 %v403
        %v596 = vpop.f32.mrf.mxu0
        %v597 = vadd.f32 %v351, %v596
        %v598 = vpop.f32.mrf.mxu0
        %599 = vmatprep.mubr.f32.mxu0 0.0
        %600 = vmatmul.mubr.f32.gmra.mxu0 %v406
        %v601 = vpop.f32.mrf.mxu0
        %v602 = vadd.f32 %v351, %v601
        %v603 = vpop.f32.mrf.mxu0
        %604 = vmatprep.mubr.f32.mxu0 0.0
        %605 = vmatmul.mubr.f32.gmra.mxu0 %v409
        %v606 = vpop.f32.mrf.mxu0
        %v607 = vadd.f32 %v351, %v606
        %v608 = vpop.f32.mrf.mxu0
        %609 = vmatprep.mubr.f32.mxu0 0.0
        %610 = vmatmul.mubr.f32.gmra.mxu0 %v412
        %v611 = vpop.f32.mrf.mxu0
        %v612 = vadd.f32 %v351, %v611
        %v613 = vpop.f32.mrf.mxu0
        %614 = vmatprep.mubr.f32.mxu0 0.0
        %615 = vmatmul.mubr.f32.gmra.mxu0 %v415
        %v616 = vpop.f32.mrf.mxu0
        %v617 = vadd.f32 %v351, %v616
        %v618 = vpop.f32.mrf.mxu0
        %619 = vmatprep.mubr.f32.mxu0 0.0
        %620 = vmatmul.mubr.f32.gmra.mxu0 %v418
        %v621 = vpop.f32.mrf.mxu0
        %v622 = vadd.f32 %v351, %v621
        %v623 = vpop.f32.mrf.mxu0
        %624 = vmatprep.mubr.f32.mxu0 0.0
        %625 = vmatmul.mubr.f32.gmra.mxu0 %v421
        %v626 = vpop.f32.mrf.mxu0
        %v627 = vadd.f32 %v351, %v626
        %v628 = vpop.f32.mrf.mxu0
        %629 = vmatprep.mubr.f32.mxu0 0.0
        %630 = vmatmul.mubr.f32.gmra.mxu0 %v424
        %v631 = vpop.f32.mrf.mxu0
        %v632 = vadd.f32 %v351, %v631
        %v633 = vpop.f32.mrf.mxu0
        %634 = vmatprep.mubr.f32.mxu0 0.0
        %635 = vmatmul.mubr.f32.gmra.mxu0 %v427
        %v636 = vpop.f32.mrf.mxu0
        %v637 = vadd.f32 %v351, %v636
        %v638 = vpop.f32.mrf.mxu0
        %639 = vmatprep.mubr.f32.mxu0 0.0
        %640 = vmatmul.mubr.f32.gmra.mxu0 %v430
        %v641 = vpop.f32.mrf.mxu0
        %v642 = vadd.f32 %v351, %v641
        %v643 = vpop.f32.mrf.mxu0
        %644 = vmatprep.mubr.f32.mxu0 0.0
        %645 = vmatmul.mubr.f32.gmra.mxu0 %v433
        %v646 = vpop.f32.mrf.mxu0
        %v647 = vadd.f32 %v351, %v646
        %v648 = vpop.f32.mrf.mxu0
        %649 = vmatprep.mubr.f32.mxu0 0.0
        %650 = vmatmul.mubr.f32.gmra.mxu0 %v436
        %v651 = vpop.f32.mrf.mxu0
        %v652 = vadd.f32 %v351, %v651
        %v653 = vpop.f32.mrf.mxu0
        %654 = vmatprep.mubr.f32.mxu0 0.0
        %655 = vmatmul.mubr.f32.gmra.mxu0 %v439
        %v656 = vpop.f32.mrf.mxu0
        %v657 = vadd.f32 %v351, %v656
        %v658 = vpop.f32.mrf.mxu0
        %659 = vmatprep.mubr.f32.mxu0 0.0
        %660 = vmatmul.mubr.f32.gmra.mxu0 %v442
        %v661 = vpop.f32.mrf.mxu0
        %v662 = vadd.f32 %v351, %v661
        %v663 = vpop.f32.mrf.mxu0
        %664 = vmatprep.mubr.f32.mxu0 0.0
        %665 = vmatmul.mubr.f32.gmra.mxu0 %v445
        %v666 = vpop.f32.mrf.mxu0
        %v667 = vadd.f32 %v351, %v666
        %v668 = vpop.f32.mrf.mxu0
        %669 = vmatprep.mubr.f32.mxu0 0.0
        %670 = vmatmul.mubr.f32.gmra.mxu0 %v448
        %v671 = vpop.f32.mrf.mxu0
        %v672 = vadd.f32 %v351, %v671
        %v673 = vpop.f32.mrf.mxu0
        %674 = vdwg.mxu0
        %v675 = vmax.f32 %v517, 0.0
        %v676 = vmax.f32 %v522, 0.0
        %v677 = vmax.f32 %v527, 0.0
        %v678 = vmax.f32 %v532, 0.0
        %v679 = vmax.f32 %v537, 0.0
        %v680 = vmax.f32 %v542, 0.0
        %v681 = vmax.f32 %v547, 0.0
        %v682 = vmax.f32 %v552, 0.0
        %v683 = vmax.f32 %v557, 0.0
        %v684 = vmax.f32 %v562, 0.0
        %v685 = vmax.f32 %v567, 0.0
        %v686 = vmax.f32 %v572, 0.0
        %v687 = vmax.f32 %v577, 0.0
        %v688 = vmax.f32 %v582, 0.0
        %v689 = vmax.f32 %v587, 0.0
        %v690 = vmax.f32 %v592, 0.0
        %v691 = vmax.f32 %v597, 0.0
        %v692 = vmax.f32 %v602, 0.0
        %v693 = vmax.f32 %v607, 0.0
        %v694 = vmax.f32 %v612, 0.0
        %v695 = vmax.f32 %v617, 0.0
        %v696 = vmax.f32 %v622, 0.0
        %v697 = vmax.f32 %v627, 0.0
        %v698 = vmax.f32 %v632, 0.0
        %v699 = vmax.f32 %v637, 0.0
        %v700 = vmax.f32 %v642, 0.0
        %v701 = vmax.f32 %v647, 0.0
        %v702 = vmax.f32 %v652, 0.0
        %v703 = vmax.f32 %v657, 0.0
        %v704 = vmax.f32 %v662, 0.0
        %v705 = vmax.f32 %v667, 0.0
        %v706 = vmax.f32 %v672, 0.0
        %vm707 = vcmask 31744
        %708 = vst.msk [vmem:[#allocation2] sm:$0xff] %vm707, 0.0
        %709 = vst.msk [vmem:[#allocation2 + $0x8] sm:$0xff] %vm707, 0.0
        %vm710 = vcmask 25600
        %711 = vst.msk [vmem:[#allocation2 + $0x10] sm:$0x3] %vm710, 0.0
        %712 = vst.msk [vmem:[#allocation2 + $0x18] sm:$0xff] %vm707, 0.0
        %713 = vst.msk [vmem:[#allocation2 + $0x20] sm:$0xff] %vm707, 0.0
        %714 = vst.msk [vmem:[#allocation2 + $0x28] sm:$0x3] %vm710, 0.0
        %715 = vst.msk [vmem:[#allocation2 + $0x30] sm:$0xff] %vm707, 0.0
        %716 = vst.msk [vmem:[#allocation2 + $0x38] sm:$0xff] %vm707, 0.0
        %717 = vst.msk [vmem:[#allocation2 + $0x40] sm:$0x3] %vm710, 0.0
        %718 = vst.msk [vmem:[#allocation2 + $0x48] sm:$0xff] %vm707, 0.0
        %719 = vst.msk [vmem:[#allocation2 + $0x50] sm:$0xff] %vm707, 0.0
        %720 = vst.msk [vmem:[#allocation2 + $0x58] sm:$0x3] %vm710, 0.0
        %721 = vst.msk [vmem:[#allocation2 + $0x60] sm:$0xff] %vm707, 0.0
        %722 = vst.msk [vmem:[#allocation2 + $0x68] sm:$0xff] %vm707, 0.0
        %723 = vst.msk [vmem:[#allocation2 + $0x70] sm:$0x3] %vm710, 0.0
        %724 = vst.msk [vmem:[#allocation2 + $0x78] sm:$0xff] %vm707, 0.0
        %725 = vst.msk [vmem:[#allocation2 + $0x80] sm:$0xff] %vm707, 0.0
        %726 = vst.msk [vmem:[#allocation2 + $0x88] sm:$0x3] %vm710, 0.0
        %727 = vst.msk [vmem:[#allocation2 + $0x90] sm:$0xff] %vm707, 0.0
        %728 = vst.msk [vmem:[#allocation2 + $0x98] sm:$0xff] %vm707, 0.0
        %729 = vst.msk [vmem:[#allocation2 + $0xa0] sm:$0x3] %vm710, 0.0
        %730 = vst.msk [vmem:[#allocation2 + $0xa8] sm:$0xff] %vm707, 0.0
        %731 = vst.msk [vmem:[#allocation2 + $0xb0] sm:$0xff] %vm707, 0.0
        %732 = vst.msk [vmem:[#allocation2 + $0xb8] sm:$0x3] %vm710, 0.0
        %733 = vst.msk [vmem:[#allocation2 + $0xc0] sm:$0xff] %vm707, 0.0
        %734 = vst.msk [vmem:[#allocation2 + $0xc8] sm:$0xff] %vm707, 0.0
        %735 = vst.msk [vmem:[#allocation2 + $0xd0] sm:$0x3] %vm710, 0.0
        %736 = vst.msk [vmem:[#allocation2 + $0xd8] sm:$0xff] %vm707, 0.0
        %737 = vst.msk [vmem:[#allocation2 + $0xe0] sm:$0xff] %vm707, 0.0
        %738 = vst.msk [vmem:[#allocation2 + $0xe8] sm:$0x3] %vm710, 0.0
        %739 = vst.msk [vmem:[#allocation2 + $0xf0] sm:$0xff] %vm707, 0.0
        %740 = vst.msk [vmem:[#allocation2 + $0xf8] sm:$0xff] %vm707, 0.0
        %741 = vst.msk [vmem:[#allocation2 + $0x100] sm:$0x3] %vm710, 0.0
        %742 = vst.msk [vmem:[#allocation2 + $0x108] sm:$0xff] %vm707, 0.0
        %743 = vst.msk [vmem:[#allocation2 + $0x110] sm:$0xff] %vm707, 0.0
        %744 = vst.msk [vmem:[#allocation2 + $0x118] sm:$0x3] %vm710, 0.0
        %745 = vst.msk [vmem:[#allocation2 + $0x120] sm:$0xff] %vm707, 0.0
        %746 = vst.msk [vmem:[#allocation2 + $0x128] sm:$0xff] %vm707, 0.0
        %747 = vst.msk [vmem:[#allocation2 + $0x130] sm:$0x3] %vm710, 0.0
        %748 = vst.msk [vmem:[#allocation2 + $0x138] sm:$0xff] %vm707, 0.0
        %749 = vst.msk [vmem:[#allocation2 + $0x140] sm:$0xff] %vm707, 0.0
        %750 = vst.msk [vmem:[#allocation2 + $0x148] sm:$0x3] %vm710, 0.0
        %751 = vst.msk [vmem:[#allocation2 + $0x150] sm:$0xff] %vm707, 0.0
        %752 = vst.msk [vmem:[#allocation2 + $0x158] sm:$0xff] %vm707, 0.0
        %753 = vst.msk [vmem:[#allocation2 + $0x160] sm:$0x3] %vm710, 0.0
        %754 = vst.msk [vmem:[#allocation2 + $0x168] sm:$0xff] %vm707, 0.0
        %755 = vst.msk [vmem:[#allocation2 + $0x170] sm:$0xff] %vm707, 0.0
        %756 = vst.msk [vmem:[#allocation2 + $0x178] sm:$0x3] %vm710, 0.0
        %757 = vst.msk [vmem:[#allocation2 + $0x180] sm:$0xff] %vm707, 0.0
        %758 = vst.msk [vmem:[#allocation2 + $0x188] sm:$0xff] %vm707, 0.0
        %759 = vst.msk [vmem:[#allocation2 + $0x190] sm:$0x3] %vm710, 0.0
        %760 = vst.msk [vmem:[#allocation2 + $0x198] sm:$0xff] %vm707, 0.0
        %761 = vst.msk [vmem:[#allocation2 + $0x1a0] sm:$0xff] %vm707, 0.0
        %762 = vst.msk [vmem:[#allocation2 + $0x1a8] sm:$0x3] %vm710, 0.0
        %s763 = scalar_lea.vmem [#allocation2], 24
        %764 = vst.msk [vmem:[%s763 + $0x1] sm:$0xff] %vm707, %v675
        %765 = vst.msk [vmem:[%s763 + $0x9] sm:$0xff] %vm707, %v676
        %766 = vst.msk [vmem:[%s763 + $0x19] sm:$0xff] %vm707, %v677
        %767 = vst.msk [vmem:[%s763 + $0x21] sm:$0xff] %vm707, %v678
        %768 = vst.msk [vmem:[%s763 + $0x31] sm:$0xff] %vm707, %v679
        %769 = vst.msk [vmem:[%s763 + $0x39] sm:$0xff] %vm707, %v680
        %770 = vst.msk [vmem:[%s763 + $0x49] sm:$0xff] %vm707, %v681
        %771 = vst.msk [vmem:[%s763 + $0x51] sm:$0xff] %vm707, %v682
        %772 = vst.msk [vmem:[%s763 + $0x61] sm:$0xff] %vm707, %v683
        %773 = vst.msk [vmem:[%s763 + $0x69] sm:$0xff] %vm707, %v684
        %774 = vst.msk [vmem:[%s763 + $0x79] sm:$0xff] %vm707, %v685
        %775 = vst.msk [vmem:[%s763 + $0x81] sm:$0xff] %vm707, %v686
        %776 = vst.msk [vmem:[%s763 + $0x91] sm:$0xff] %vm707, %v687
        %777 = vst.msk [vmem:[%s763 + $0x99] sm:$0xff] %vm707, %v688
        %778 = vst.msk [vmem:[%s763 + $0xa9] sm:$0xff] %vm707, %v689
        %779 = vst.msk [vmem:[%s763 + $0xb1] sm:$0xff] %vm707, %v690
        %780 = vst.msk [vmem:[%s763 + $0xc1] sm:$0xff] %vm707, %v691
        %781 = vst.msk [vmem:[%s763 + $0xc9] sm:$0xff] %vm707, %v692
        %782 = vst.msk [vmem:[%s763 + $0xd9] sm:$0xff] %vm707, %v693
        %783 = vst.msk [vmem:[%s763 + $0xe1] sm:$0xff] %vm707, %v694
        %784 = vst.msk [vmem:[%s763 + $0xf1] sm:$0xff] %vm707, %v695
        %785 = vst.msk [vmem:[%s763 + $0xf9] sm:$0xff] %vm707, %v696
        %786 = vst.msk [vmem:[%s763 + $0x109] sm:$0xff] %vm707, %v697
        %787 = vst.msk [vmem:[%s763 + $0x111] sm:$0xff] %vm707, %v698
        %788 = vst.msk [vmem:[%s763 + $0x121] sm:$0xff] %vm707, %v699
        %789 = vst.msk [vmem:[%s763 + $0x129] sm:$0xff] %vm707, %v700
        %790 = vst.msk [vmem:[%s763 + $0x139] sm:$0xff] %vm707, %v701
        %791 = vst.msk [vmem:[%s763 + $0x141] sm:$0xff] %vm707, %v702
        %792 = vst.msk [vmem:[%s763 + $0x151] sm:$0xff] %vm707, %v703
        %793 = vst.msk [vmem:[%s763 + $0x159] sm:$0xff] %vm707, %v704
        %794 = vst.msk [vmem:[%s763 + $0x169] sm:$0xff] %vm707, %v705
        %795 = vst.msk [vmem:[%s763 + $0x171] sm:$0xff] %vm707, %v706
        %v796 = vld [vmem:[#allocation2] sm:$0xff]
        %v797 = vld [vmem:[#allocation2 + $0x8] sm:$0xff]
        %v798 = vld [vmem:[#allocation2 + $0x18] sm:$0xff]
        %v799 = vld [vmem:[#allocation2 + $0x20] sm:$0xff]
        %v800 = vld [vmem:[#allocation2 + $0x30] sm:$0xff]
        %v801 = vld [vmem:[#allocation2 + $0x38] sm:$0xff]
        %v802 = vld [vmem:[#allocation2 + $0x48] sm:$0xff]
        %v803 = vld [vmem:[#allocation2 + $0x50] sm:$0xff]
        %v804 = vld [vmem:[#allocation2 + $0x60] sm:$0xff]
        %v805 = vld [vmem:[#allocation2 + $0x68] sm:$0xff]
        %v806 = vld [vmem:[#allocation2 + $0x78] sm:$0xff]
        %v807 = vld [vmem:[#allocation2 + $0x80] sm:$0xff]
        %v808 = vld [vmem:[#allocation2 + $0x90] sm:$0xff]
        %v809 = vld [vmem:[#allocation2 + $0x98] sm:$0xff]
        %v810 = vld [vmem:[#allocation2 + $0xa8] sm:$0xff]
        %v811 = vld [vmem:[#allocation2 + $0xb0] sm:$0xff]
        %v812 = vld [vmem:[#allocation2 + $0xc0] sm:$0xff]
        %v813 = vld [vmem:[#allocation2 + $0xc8] sm:$0xff]
        %v814 = vld [vmem:[#allocation2 + $0xd8] sm:$0xff]
        %v815 = vld [vmem:[#allocation2 + $0xe0] sm:$0xff]
        %v816 = vld [vmem:[#allocation2 + $0xf0] sm:$0xff]
        %v817 = vld [vmem:[#allocation2 + $0xf8] sm:$0xff]
        %v818 = vld [vmem:[#allocation2 + $0x108] sm:$0xff]
        %v819 = vld [vmem:[#allocation2 + $0x110] sm:$0xff]
        %v820 = vld [vmem:[#allocation2 + $0x120] sm:$0xff]
        %v821 = vld [vmem:[#allocation2 + $0x128] sm:$0xff]
        %v822 = vld [vmem:[#allocation2 + $0x138] sm:$0xff]
        %v823 = vld [vmem:[#allocation2 + $0x140] sm:$0xff]
        %v824 = vld [vmem:[#allocation2 + $0x150] sm:$0xff]
        %v825 = vld [vmem:[#allocation2 + $0x158] sm:$0xff]
        %v826 = vld [vmem:[#allocation2 + $0x168] sm:$0xff]
        %v827 = vld [vmem:[#allocation2 + $0x170] sm:$0xff]
        %v828 = vld [vmem:[#allocation6] sm:$0xf]
        %v829 = vld [vmem:[#allocation2 + $0x1] sm:$0xff]
        %v830 = vld [vmem:[#allocation2 + $0x9] sm:$0xff]
        %v831 = vld [vmem:[#allocation2 + $0x19] sm:$0xff]
        %v832 = vld [vmem:[#allocation2 + $0x21] sm:$0xff]
        %v833 = vld [vmem:[#allocation2 + $0x31] sm:$0xff]
        %v834 = vld [vmem:[#allocation2 + $0x39] sm:$0xff]
        %v835 = vld [vmem:[#allocation2 + $0x49] sm:$0xff]
        %v836 = vld [vmem:[#allocation2 + $0x51] sm:$0xff]
        %v837 = vld [vmem:[#allocation2 + $0x61] sm:$0xff]
        %v838 = vld [vmem:[#allocation2 + $0x69] sm:$0xff]
        %v839 = vld [vmem:[#allocation2 + $0x79] sm:$0xff]
        %v840 = vld [vmem:[#allocation2 + $0x81] sm:$0xff]
        %v841 = vld [vmem:[#allocation2 + $0x91] sm:$0xff]
        %v842 = vld [vmem:[#allocation2 + $0x99] sm:$0xff]
        %v843 = vld [vmem:[#allocation2 + $0xa9] sm:$0xff]
        %v844 = vld [vmem:[#allocation2 + $0xb1] sm:$0xff]
        %v845 = vld [vmem:[#allocation2 + $0xc1] sm:$0xff]
        %v846 = vld [vmem:[#allocation2 + $0xc9] sm:$0xff]
        %v847 = vld [vmem:[#allocation2 + $0xd9] sm:$0xff]
        %v848 = vld [vmem:[#allocation2 + $0xe1] sm:$0xff]
        %v849 = vld [vmem:[#allocation2 + $0xf1] sm:$0xff]
        %v850 = vld [vmem:[#allocation2 + $0xf9] sm:$0xff]
        %v851 = vld [vmem:[#allocation2 + $0x109] sm:$0xff]
        %v852 = vld [vmem:[#allocation2 + $0x111] sm:$0xff]
        %v853 = vld [vmem:[#allocation2 + $0x121] sm:$0xff]
        %v854 = vld [vmem:[#allocation2 + $0x129] sm:$0xff]
        %v855 = vld [vmem:[#allocation2 + $0x139] sm:$0xff]
        %v856 = vld [vmem:[#allocation2 + $0x141] sm:$0xff]
        %v857 = vld [vmem:[#allocation2 + $0x151] sm:$0xff]
        %v858 = vld [vmem:[#allocation2 + $0x159] sm:$0xff]
        %v859 = vld [vmem:[#allocation2 + $0x169] sm:$0xff]
        %v860 = vld [vmem:[#allocation2 + $0x171] sm:$0xff]
        %s861 = scalar_lea.vmem [#allocation6], 4
        %v862 = vld [vmem:[%s861] sm:$0xf]
        %v864 = vsel %vm707, %v829, 0
        %v867 = vsel %vm707, %v830, 0
        %v870 = vsel %vm707, %v831, 0
        %v873 = vsel %vm707, %v832, 0
        %v876 = vsel %vm707, %v833, 0
        %v879 = vsel %vm707, %v834, 0
        %v882 = vsel %vm707, %v835, 0
        %v885 = vsel %vm707, %v836, 0
        %v888 = vsel %vm707, %v837, 0
        %v891 = vsel %vm707, %v838, 0
        %v894 = vsel %vm707, %v839, 0
        %v897 = vsel %vm707, %v840, 0
        %v900 = vsel %vm707, %v841, 0
        %v903 = vsel %vm707, %v842, 0
        %v906 = vsel %vm707, %v843, 0
        %v909 = vsel %vm707, %v844, 0
        %v912 = vsel %vm707, %v845, 0
        %v915 = vsel %vm707, %v846, 0
        %v918 = vsel %vm707, %v847, 0
        %v921 = vsel %vm707, %v848, 0
        %v924 = vsel %vm707, %v849, 0
        %v927 = vsel %vm707, %v850, 0
        %v930 = vsel %vm707, %v851, 0
        %v933 = vsel %vm707, %v852, 0
        %v936 = vsel %vm707, %v853, 0
        %v939 = vsel %vm707, %v854, 0
        %v942 = vsel %vm707, %v855, 0
        %v945 = vsel %vm707, %v856, 0
        %v948 = vsel %vm707, %v857, 0
        %v951 = vsel %vm707, %v858, 0
        %v954 = vsel %vm707, %v859, 0
        %v957 = vsel %vm707, %v860, 0
        %vm959 = vcmask 1043456
        %v961 = vsel %vm959, %v862, 0
        %963 = vmatprep.subr.mxu0 0.0
        %964 = vmatpush1.msra.mxu0 0.0
        %965 = vmatprep.subr.mxu0 0.0
        %966 = vmatpush1.msra.mxu0 0.0
        %967 = vmatprep.subr.mxu0 0.0
        %968 = vmatpush1.msra.mxu0 0.0
        %969 = vmatprep.subr.mxu0 0.0
        %970 = vmatpush1.msra.mxu0 0.0
        %971 = vmatprep.subr.mxu0 0.0
        %972 = vmatpush1.msra.mxu0 0.0
        %973 = vmatprep.subr.mxu0 0.0
        %974 = vmatpush1.msra.mxu0 0.0
        %975 = vmatprep.subr.mxu0 0.0
        %976 = vmatpush1.msra.mxu0 0.0
        %977 = vmatprep.subr.mxu0 0.0
        %978 = vmatpush1.msra.mxu0 0.0
        %979 = vmatprep.subr.mxu0 0.0
        %980 = vmatpush1.msra.mxu0 0.0
        %981 = vmatprep.subr.mxu0 0.0
        %982 = vmatpush1.msra.mxu0 0.0
        %983 = vmatprep.subr.mxu0 0.0
        %984 = vmatpush1.msra.mxu0 0.0
        %985 = vmatprep.subr.mxu0 0.0
        %986 = vmatpush1.msra.mxu0 0.0
        %987 = vmatprep.subr.mxu0 0.0
        %988 = vmatpush1.msra.mxu0 0.0
        %989 = vmatprep.subr.mxu0 0.0
        %990 = vmatpush1.msra.mxu0 0.0
        %991 = vmatprep.subr.mxu0 0.0
        %992 = vmatpush1.msra.mxu0 0.0
        %993 = vmatprep.subr.mxu0 0.0
        %994 = vmatpush1.msra.mxu0 %v961
        %995 = vmatprep.subr.mxu0 0.0
        %996 = vmatpush2.msra.mxu0 0.0
        %997 = vmatprep.subr.mxu0 0.0
        %998 = vmatpush2.msra.mxu0 0.0
        %999 = vmatprep.subr.mxu0 0.0
        %1000 = vmatpush2.msra.mxu0 0.0
        %1001 = vmatprep.subr.mxu0 0.0
        %1002 = vmatpush2.msra.mxu0 0.0
        %1003 = vmatprep.subr.mxu0 0.0
        %1004 = vmatpush2.msra.mxu0 0.0
        %1005 = vmatprep.subr.mxu0 0.0
        %1006 = vmatpush2.msra.mxu0 0.0
        %1007 = vmatprep.subr.mxu0 0.0
        %1008 = vmatpush2.msra.mxu0 0.0
        %1009 = vmatprep.subr.mxu0 0.0
        %1010 = vmatpush2.msra.mxu0 0.0
        %1011 = vmatprep.subr.mxu0 0.0
        %1012 = vmatpush2.msra.mxu0 0.0
        %1013 = vmatprep.subr.mxu0 0.0
        %1014 = vmatpush2.msra.mxu0 0.0
        %1015 = vmatprep.subr.mxu0 0.0
        %1016 = vmatpush2.msra.mxu0 0.0
        %1017 = vmatprep.subr.mxu0 0.0
        %1018 = vmatpush2.msra.mxu0 0.0
        %1019 = vmatprep.subr.mxu0 0.0
        %1020 = vmatpush2.msra.mxu0 0.0
        %1021 = vmatprep.subr.mxu0 0.0
        %1022 = vmatpush2.msra.mxu0 0.0
        %1023 = vmatprep.subr.mxu0 0.0
        %1024 = vmatpush2.msra.mxu0 0.0
        %1025 = vmatprep.subr.mxu0 0.0
        %1026 = vmatpush2.msra.mxu0 0.0
        %1027 = vmatprep.mubr.f32.mxu0 0.0
        %1028 = vmatmul.mubr.f32.gmra.mxu0 %v864
        %v1029 = vpop.f32.mrf.mxu0
        %v1030 = vadd.f32 0.0, %v1029
        %v1031 = vpop.f32.mrf.mxu0
        %1032 = vmatprep.mubr.f32.mxu0 0.0
        %1033 = vmatmul.mubr.f32.gmra.mxu0 %v867
        %v1034 = vpop.f32.mrf.mxu0
        %v1035 = vadd.f32 0.0, %v1034
        %v1036 = vpop.f32.mrf.mxu0
        %1037 = vmatprep.mubr.f32.mxu0 0.0
        %1038 = vmatmul.mubr.f32.gmra.mxu0 %v870
        %v1039 = vpop.f32.mrf.mxu0
        %v1040 = vadd.f32 0.0, %v1039
        %v1041 = vpop.f32.mrf.mxu0
        %1042 = vmatprep.mubr.f32.mxu0 0.0
        %1043 = vmatmul.mubr.f32.gmra.mxu0 %v873
        %v1044 = vpop.f32.mrf.mxu0
        %v1045 = vadd.f32 0.0, %v1044
        %v1046 = vpop.f32.mrf.mxu0
        %1047 = vmatprep.mubr.f32.mxu0 0.0
        %1048 = vmatmul.mubr.f32.gmra.mxu0 %v876
        %v1049 = vpop.f32.mrf.mxu0
        %v1050 = vadd.f32 0.0, %v1049
        %v1051 = vpop.f32.mrf.mxu0
        %1052 = vmatprep.mubr.f32.mxu0 0.0
        %1053 = vmatmul.mubr.f32.gmra.mxu0 %v879
        %v1054 = vpop.f32.mrf.mxu0
        %v1055 = vadd.f32 0.0, %v1054
        %v1056 = vpop.f32.mrf.mxu0
        %1057 = vmatprep.mubr.f32.mxu0 0.0
        %1058 = vmatmul.mubr.f32.gmra.mxu0 %v882
        %v1059 = vpop.f32.mrf.mxu0
        %v1060 = vadd.f32 0.0, %v1059
        %v1061 = vpop.f32.mrf.mxu0
        %1062 = vmatprep.mubr.f32.mxu0 0.0
        %1063 = vmatmul.mubr.f32.gmra.mxu0 %v885
        %v1064 = vpop.f32.mrf.mxu0
        %v1065 = vadd.f32 0.0, %v1064
        %v1066 = vpop.f32.mrf.mxu0
        %1067 = vmatprep.mubr.f32.mxu0 0.0
        %1068 = vmatmul.mubr.f32.gmra.mxu0 %v888
        %v1069 = vpop.f32.mrf.mxu0
        %v1070 = vadd.f32 0.0, %v1069
        %v1071 = vpop.f32.mrf.mxu0
        %1072 = vmatprep.mubr.f32.mxu0 0.0
        %1073 = vmatmul.mubr.f32.gmra.mxu0 %v891
        %v1074 = vpop.f32.mrf.mxu0
        %v1075 = vadd.f32 0.0, %v1074
        %v1076 = vpop.f32.mrf.mxu0
        %1077 = vmatprep.mubr.f32.mxu0 0.0
        %1078 = vmatmul.mubr.f32.gmra.mxu0 %v894
        %v1079 = vpop.f32.mrf.mxu0
        %v1080 = vadd.f32 0.0, %v1079
        %v1081 = vpop.f32.mrf.mxu0
        %1082 = vmatprep.mubr.f32.mxu0 0.0
        %1083 = vmatmul.mubr.f32.gmra.mxu0 %v897
        %v1084 = vpop.f32.mrf.mxu0
        %v1085 = vadd.f32 0.0, %v1084
        %v1086 = vpop.f32.mrf.mxu0
        %1087 = vmatprep.mubr.f32.mxu0 0.0
        %1088 = vmatmul.mubr.f32.gmra.mxu0 %v900
        %v1089 = vpop.f32.mrf.mxu0
        %v1090 = vadd.f32 0.0, %v1089
        %v1091 = vpop.f32.mrf.mxu0
        %1092 = vmatprep.mubr.f32.mxu0 0.0
        %1093 = vmatmul.mubr.f32.gmra.mxu0 %v903
        %v1094 = vpop.f32.mrf.mxu0
        %v1095 = vadd.f32 0.0, %v1094
        %v1096 = vpop.f32.mrf.mxu0
        %1097 = vmatprep.mubr.f32.mxu0 0.0
        %1098 = vmatmul.mubr.f32.gmra.mxu0 %v906
        %v1099 = vpop.f32.mrf.mxu0
        %v1100 = vadd.f32 0.0, %v1099
        %v1101 = vpop.f32.mrf.mxu0
        %1102 = vmatprep.mubr.f32.mxu0 0.0
        %1103 = vmatmul.mubr.f32.gmra.mxu0 %v909
        %v1104 = vpop.f32.mrf.mxu0
        %v1105 = vadd.f32 0.0, %v1104
        %v1106 = vpop.f32.mrf.mxu0
        %1107 = vmatprep.mubr.f32.mxu0 0.0
        %1108 = vmatmul.mubr.f32.gmra.mxu0 %v912
        %v1109 = vpop.f32.mrf.mxu0
        %v1110 = vadd.f32 0.0, %v1109
        %v1111 = vpop.f32.mrf.mxu0
        %1112 = vmatprep.mubr.f32.mxu0 0.0
        %1113 = vmatmul.mubr.f32.gmra.mxu0 %v915
        %v1114 = vpop.f32.mrf.mxu0
        %v1115 = vadd.f32 0.0, %v1114
        %v1116 = vpop.f32.mrf.mxu0
        %1117 = vmatprep.mubr.f32.mxu0 0.0
        %1118 = vmatmul.mubr.f32.gmra.mxu0 %v918
        %v1119 = vpop.f32.mrf.mxu0
        %v1120 = vadd.f32 0.0, %v1119
        %v1121 = vpop.f32.mrf.mxu0
        %1122 = vmatprep.mubr.f32.mxu0 0.0
        %1123 = vmatmul.mubr.f32.gmra.mxu0 %v921
        %v1124 = vpop.f32.mrf.mxu0
        %v1125 = vadd.f32 0.0, %v1124
        %v1126 = vpop.f32.mrf.mxu0
        %1127 = vmatprep.mubr.f32.mxu0 0.0
        %1128 = vmatmul.mubr.f32.gmra.mxu0 %v924
        %v1129 = vpop.f32.mrf.mxu0
        %v1130 = vadd.f32 0.0, %v1129
        %v1131 = vpop.f32.mrf.mxu0
        %1132 = vmatprep.mubr.f32.mxu0 0.0
        %1133 = vmatmul.mubr.f32.gmra.mxu0 %v927
        %v1134 = vpop.f32.mrf.mxu0
        %v1135 = vadd.f32 0.0, %v1134
        %v1136 = vpop.f32.mrf.mxu0
        %1137 = vmatprep.mubr.f32.mxu0 0.0
        %1138 = vmatmul.mubr.f32.gmra.mxu0 %v930
        %v1139 = vpop.f32.mrf.mxu0
        %v1140 = vadd.f32 0.0, %v1139
        %v1141 = vpop.f32.mrf.mxu0
        %1142 = vmatprep.mubr.f32.mxu0 0.0
        %1143 = vmatmul.mubr.f32.gmra.mxu0 %v933
        %v1144 = vpop.f32.mrf.mxu0
        %v1145 = vadd.f32 0.0, %v1144
        %v1146 = vpop.f32.mrf.mxu0
        %1147 = vmatprep.mubr.f32.mxu0 0.0
        %1148 = vmatmul.mubr.f32.gmra.mxu0 %v936
        %v1149 = vpop.f32.mrf.mxu0
        %v1150 = vadd.f32 0.0, %v1149
        %v1151 = vpop.f32.mrf.mxu0
        %1152 = vmatprep.mubr.f32.mxu0 0.0
        %1153 = vmatmul.mubr.f32.gmra.mxu0 %v939
        %v1154 = vpop.f32.mrf.mxu0
        %v1155 = vadd.f32 0.0, %v1154
        %v1156 = vpop.f32.mrf.mxu0
        %1157 = vmatprep.mubr.f32.mxu0 0.0
        %1158 = vmatmul.mubr.f32.gmra.mxu0 %v942
        %v1159 = vpop.f32.mrf.mxu0
        %v1160 = vadd.f32 0.0, %v1159
        %v1161 = vpop.f32.mrf.mxu0
        %1162 = vmatprep.mubr.f32.mxu0 0.0
        %1163 = vmatmul.mubr.f32.gmra.mxu0 %v945
        %v1164 = vpop.f32.mrf.mxu0
        %v1165 = vadd.f32 0.0, %v1164
        %v1166 = vpop.f32.mrf.mxu0
        %1167 = vmatprep.mubr.f32.mxu0 0.0
        %1168 = vmatmul.mubr.f32.gmra.mxu0 %v948
        %v1169 = vpop.f32.mrf.mxu0
        %v1170 = vadd.f32 0.0, %v1169
        %v1171 = vpop.f32.mrf.mxu0
        %1172 = vmatprep.mubr.f32.mxu0 0.0
        %1173 = vmatmul.mubr.f32.gmra.mxu0 %v951
        %v1174 = vpop.f32.mrf.mxu0
        %v1175 = vadd.f32 0.0, %v1174
        %v1176 = vpop.f32.mrf.mxu0
        %1177 = vmatprep.mubr.f32.mxu0 0.0
        %1178 = vmatmul.mubr.f32.gmra.mxu0 %v954
        %v1179 = vpop.f32.mrf.mxu0
        %v1180 = vadd.f32 0.0, %v1179
        %v1181 = vpop.f32.mrf.mxu0
        %1182 = vmatprep.mubr.f32.mxu0 0.0
        %1183 = vmatmul.mubr.f32.gmra.mxu0 %v957
        %v1184 = vpop.f32.mrf.mxu0
        %v1185 = vadd.f32 0.0, %v1184
        %v1186 = vpop.f32.mrf.mxu0
        %1187 = vdwg.mxu0
        %v1189 = vsel %vm707, %v796, 0
        %v1192 = vsel %vm707, %v797, 0
        %v1195 = vsel %vm707, %v798, 0
        %v1198 = vsel %vm707, %v799, 0
        %v1201 = vsel %vm707, %v800, 0
        %v1204 = vsel %vm707, %v801, 0
        %v1207 = vsel %vm707, %v802, 0
        %v1210 = vsel %vm707, %v803, 0
        %v1213 = vsel %vm707, %v804, 0
        %v1216 = vsel %vm707, %v805, 0
        %v1219 = vsel %vm707, %v806, 0
        %v1222 = vsel %vm707, %v807, 0
        %v1225 = vsel %vm707, %v808, 0
        %v1228 = vsel %vm707, %v809, 0
        %v1231 = vsel %vm707, %v810, 0
        %v1234 = vsel %vm707, %v811, 0
        %v1237 = vsel %vm707, %v812, 0
        %v1240 = vsel %vm707, %v813, 0
        %v1243 = vsel %vm707, %v814, 0
        %v1246 = vsel %vm707, %v815, 0
        %v1249 = vsel %vm707, %v816, 0
        %v1252 = vsel %vm707, %v817, 0
        %v1255 = vsel %vm707, %v818, 0
        %v1258 = vsel %vm707, %v819, 0
        %v1261 = vsel %vm707, %v820, 0
        %v1264 = vsel %vm707, %v821, 0
        %v1267 = vsel %vm707, %v822, 0
        %v1270 = vsel %vm707, %v823, 0
        %v1273 = vsel %vm707, %v824, 0
        %v1276 = vsel %vm707, %v825, 0
        %v1279 = vsel %vm707, %v826, 0
        %v1282 = vsel %vm707, %v827, 0
        %v1285 = vsel %vm959, %v828, 0
        %1287 = vmatprep.subr.mxu0 0.0
        %1288 = vmatpush1.msra.mxu0 0.0
        %1289 = vmatprep.subr.mxu0 0.0
        %1290 = vmatpush1.msra.mxu0 0.0
        %1291 = vmatprep.subr.mxu0 0.0
        %1292 = vmatpush1.msra.mxu0 0.0
        %1293 = vmatprep.subr.mxu0 0.0
        %1294 = vmatpush1.msra.mxu0 0.0
        %1295 = vmatprep.subr.mxu0 0.0
        %1296 = vmatpush1.msra.mxu0 0.0
        %1297 = vmatprep.subr.mxu0 0.0
        %1298 = vmatpush1.msra.mxu0 0.0
        %1299 = vmatprep.subr.mxu0 0.0
        %1300 = vmatpush1.msra.mxu0 0.0
        %1301 = vmatprep.subr.mxu0 0.0
        %1302 = vmatpush1.msra.mxu0 0.0
        %1303 = vmatprep.subr.mxu0 0.0
        %1304 = vmatpush1.msra.mxu0 0.0
        %1305 = vmatprep.subr.mxu0 0.0
        %1306 = vmatpush1.msra.mxu0 0.0
        %1307 = vmatprep.subr.mxu0 0.0
        %1308 = vmatpush1.msra.mxu0 0.0
        %1309 = vmatprep.subr.mxu0 0.0
        %1310 = vmatpush1.msra.mxu0 0.0
        %1311 = vmatprep.subr.mxu0 0.0
        %1312 = vmatpush1.msra.mxu0 0.0
        %1313 = vmatprep.subr.mxu0 0.0
        %1314 = vmatpush1.msra.mxu0 0.0
        %1315 = vmatprep.subr.mxu0 0.0
        %1316 = vmatpush1.msra.mxu0 0.0
        %1317 = vmatprep.subr.mxu0 0.0
        %1318 = vmatpush1.msra.mxu0 %v1285
        %1319 = vmatprep.subr.mxu0 0.0
        %1320 = vmatpush2.msra.mxu0 0.0
        %1321 = vmatprep.subr.mxu0 0.0
        %1322 = vmatpush2.msra.mxu0 0.0
        %1323 = vmatprep.subr.mxu0 0.0
        %1324 = vmatpush2.msra.mxu0 0.0
        %1325 = vmatprep.subr.mxu0 0.0
        %1326 = vmatpush2.msra.mxu0 0.0
        %1327 = vmatprep.subr.mxu0 0.0
        %1328 = vmatpush2.msra.mxu0 0.0
        %1329 = vmatprep.subr.mxu0 0.0
        %1330 = vmatpush2.msra.mxu0 0.0
        %1331 = vmatprep.subr.mxu0 0.0
        %1332 = vmatpush2.msra.mxu0 0.0
        %1333 = vmatprep.subr.mxu0 0.0
        %1334 = vmatpush2.msra.mxu0 0.0
        %1335 = vmatprep.subr.mxu0 0.0
        %1336 = vmatpush2.msra.mxu0 0.0
        %1337 = vmatprep.subr.mxu0 0.0
        %1338 = vmatpush2.msra.mxu0 0.0
        %1339 = vmatprep.subr.mxu0 0.0
        %1340 = vmatpush2.msra.mxu0 0.0
        %1341 = vmatprep.subr.mxu0 0.0
        %1342 = vmatpush2.msra.mxu0 0.0
        %1343 = vmatprep.subr.mxu0 0.0
        %1344 = vmatpush2.msra.mxu0 0.0
        %1345 = vmatprep.subr.mxu0 0.0
        %1346 = vmatpush2.msra.mxu0 0.0
        %1347 = vmatprep.subr.mxu0 0.0
        %1348 = vmatpush2.msra.mxu0 0.0
        %1349 = vmatprep.subr.mxu0 0.0
        %1350 = vmatpush2.msra.mxu0 0.0
        %1351 = vmatprep.mubr.f32.mxu0 0.0
        %1352 = vmatmul.mubr.f32.gmra.mxu0 %v1189
        %v1353 = vpop.f32.mrf.mxu0
        %v1354 = vadd.f32 %v1030, %v1353
        %v1355 = vpop.f32.mrf.mxu0
        %1356 = vmatprep.mubr.f32.mxu0 0.0
        %1357 = vmatmul.mubr.f32.gmra.mxu0 %v1192
        %v1358 = vpop.f32.mrf.mxu0
        %v1359 = vadd.f32 %v1035, %v1358
        %v1360 = vpop.f32.mrf.mxu0
        %1361 = vmatprep.mubr.f32.mxu0 0.0
        %1362 = vmatmul.mubr.f32.gmra.mxu0 %v1195
        %v1363 = vpop.f32.mrf.mxu0
        %v1364 = vadd.f32 %v1040, %v1363
        %v1365 = vpop.f32.mrf.mxu0
        %1366 = vmatprep.mubr.f32.mxu0 0.0
        %1367 = vmatmul.mubr.f32.gmra.mxu0 %v1198
        %v1368 = vpop.f32.mrf.mxu0
        %v1369 = vadd.f32 %v1045, %v1368
        %v1370 = vpop.f32.mrf.mxu0
        %1371 = vmatprep.mubr.f32.mxu0 0.0
        %1372 = vmatmul.mubr.f32.gmra.mxu0 %v1201
        %v1373 = vpop.f32.mrf.mxu0
        %v1374 = vadd.f32 %v1050, %v1373
        %v1375 = vpop.f32.mrf.mxu0
        %1376 = vmatprep.mubr.f32.mxu0 0.0
        %1377 = vmatmul.mubr.f32.gmra.mxu0 %v1204
        %v1378 = vpop.f32.mrf.mxu0
        %v1379 = vadd.f32 %v1055, %v1378
        %v1380 = vpop.f32.mrf.mxu0
        %1381 = vmatprep.mubr.f32.mxu0 0.0
        %1382 = vmatmul.mubr.f32.gmra.mxu0 %v1207
        %v1383 = vpop.f32.mrf.mxu0
        %v1384 = vadd.f32 %v1060, %v1383
        %v1385 = vpop.f32.mrf.mxu0
        %1386 = vmatprep.mubr.f32.mxu0 0.0
        %1387 = vmatmul.mubr.f32.gmra.mxu0 %v1210
        %v1388 = vpop.f32.mrf.mxu0
        %v1389 = vadd.f32 %v1065, %v1388
        %v1390 = vpop.f32.mrf.mxu0
        %1391 = vmatprep.mubr.f32.mxu0 0.0
        %1392 = vmatmul.mubr.f32.gmra.mxu0 %v1213
        %v1393 = vpop.f32.mrf.mxu0
        %v1394 = vadd.f32 %v1070, %v1393
        %v1395 = vpop.f32.mrf.mxu0
        %1396 = vmatprep.mubr.f32.mxu0 0.0
        %1397 = vmatmul.mubr.f32.gmra.mxu0 %v1216
        %v1398 = vpop.f32.mrf.mxu0
        %v1399 = vadd.f32 %v1075, %v1398
        %v1400 = vpop.f32.mrf.mxu0
        %1401 = vmatprep.mubr.f32.mxu0 0.0
        %1402 = vmatmul.mubr.f32.gmra.mxu0 %v1219
        %v1403 = vpop.f32.mrf.mxu0
        %v1404 = vadd.f32 %v1080, %v1403
        %v1405 = vpop.f32.mrf.mxu0
        %1406 = vmatprep.mubr.f32.mxu0 0.0
        %1407 = vmatmul.mubr.f32.gmra.mxu0 %v1222
        %v1408 = vpop.f32.mrf.mxu0
        %v1409 = vadd.f32 %v1085, %v1408
        %v1410 = vpop.f32.mrf.mxu0
        %1411 = vmatprep.mubr.f32.mxu0 0.0
        %1412 = vmatmul.mubr.f32.gmra.mxu0 %v1225
        %v1413 = vpop.f32.mrf.mxu0
        %v1414 = vadd.f32 %v1090, %v1413
        %v1415 = vpop.f32.mrf.mxu0
        %1416 = vmatprep.mubr.f32.mxu0 0.0
        %1417 = vmatmul.mubr.f32.gmra.mxu0 %v1228
        %v1418 = vpop.f32.mrf.mxu0
        %v1419 = vadd.f32 %v1095, %v1418
        %v1420 = vpop.f32.mrf.mxu0
        %1421 = vmatprep.mubr.f32.mxu0 0.0
        %1422 = vmatmul.mubr.f32.gmra.mxu0 %v1231
        %v1423 = vpop.f32.mrf.mxu0
        %v1424 = vadd.f32 %v1100, %v1423
        %v1425 = vpop.f32.mrf.mxu0
        %1426 = vmatprep.mubr.f32.mxu0 0.0
        %1427 = vmatmul.mubr.f32.gmra.mxu0 %v1234
        %v1428 = vpop.f32.mrf.mxu0
        %v1429 = vadd.f32 %v1105, %v1428
        %v1430 = vpop.f32.mrf.mxu0
        %1431 = vmatprep.mubr.f32.mxu0 0.0
        %1432 = vmatmul.mubr.f32.gmra.mxu0 %v1237
        %v1433 = vpop.f32.mrf.mxu0
        %v1434 = vadd.f32 %v1110, %v1433
        %v1435 = vpop.f32.mrf.mxu0
        %1436 = vmatprep.mubr.f32.mxu0 0.0
        %1437 = vmatmul.mubr.f32.gmra.mxu0 %v1240
        %v1438 = vpop.f32.mrf.mxu0
        %v1439 = vadd.f32 %v1115, %v1438
        %v1440 = vpop.f32.mrf.mxu0
        %1441 = vmatprep.mubr.f32.mxu0 0.0
        %1442 = vmatmul.mubr.f32.gmra.mxu0 %v1243
        %v1443 = vpop.f32.mrf.mxu0
        %v1444 = vadd.f32 %v1120, %v1443
        %v1445 = vpop.f32.mrf.mxu0
        %1446 = vmatprep.mubr.f32.mxu0 0.0
        %1447 = vmatmul.mubr.f32.gmra.mxu0 %v1246
        %v1448 = vpop.f32.mrf.mxu0
        %v1449 = vadd.f32 %v1125, %v1448
        %v1450 = vpop.f32.mrf.mxu0
        %1451 = vmatprep.mubr.f32.mxu0 0.0
        %1452 = vmatmul.mubr.f32.gmra.mxu0 %v1249
        %v1453 = vpop.f32.mrf.mxu0
        %v1454 = vadd.f32 %v1130, %v1453
        %v1455 = vpop.f32.mrf.mxu0
        %1456 = vmatprep.mubr.f32.mxu0 0.0
        %1457 = vmatmul.mubr.f32.gmra.mxu0 %v1252
        %v1458 = vpop.f32.mrf.mxu0
        %v1459 = vadd.f32 %v1135, %v1458
        %v1460 = vpop.f32.mrf.mxu0
        %1461 = vmatprep.mubr.f32.mxu0 0.0
        %1462 = vmatmul.mubr.f32.gmra.mxu0 %v1255
        %v1463 = vpop.f32.mrf.mxu0
        %v1464 = vadd.f32 %v1140, %v1463
        %v1465 = vpop.f32.mrf.mxu0
        %1466 = vmatprep.mubr.f32.mxu0 0.0
        %1467 = vmatmul.mubr.f32.gmra.mxu0 %v1258
        %v1468 = vpop.f32.mrf.mxu0
        %v1469 = vadd.f32 %v1145, %v1468
        %v1470 = vpop.f32.mrf.mxu0
        %1471 = vmatprep.mubr.f32.mxu0 0.0
        %1472 = vmatmul.mubr.f32.gmra.mxu0 %v1261
        %v1473 = vpop.f32.mrf.mxu0
        %v1474 = vadd.f32 %v1150, %v1473
        %v1475 = vpop.f32.mrf.mxu0
        %1476 = vmatprep.mubr.f32.mxu0 0.0
        %1477 = vmatmul.mubr.f32.gmra.mxu0 %v1264
        %v1478 = vpop.f32.mrf.mxu0
        %v1479 = vadd.f32 %v1155, %v1478
        %v1480 = vpop.f32.mrf.mxu0
        %1481 = vmatprep.mubr.f32.mxu0 0.0
        %1482 = vmatmul.mubr.f32.gmra.mxu0 %v1267
        %v1483 = vpop.f32.mrf.mxu0
        %v1484 = vadd.f32 %v1160, %v1483
        %v1485 = vpop.f32.mrf.mxu0
        %1486 = vmatprep.mubr.f32.mxu0 0.0
        %1487 = vmatmul.mubr.f32.gmra.mxu0 %v1270
        %v1488 = vpop.f32.mrf.mxu0
        %v1489 = vadd.f32 %v1165, %v1488
        %v1490 = vpop.f32.mrf.mxu0
        %1491 = vmatprep.mubr.f32.mxu0 0.0
        %1492 = vmatmul.mubr.f32.gmra.mxu0 %v1273
        %v1493 = vpop.f32.mrf.mxu0
        %v1494 = vadd.f32 %v1170, %v1493
        %v1495 = vpop.f32.mrf.mxu0
        %1496 = vmatprep.mubr.f32.mxu0 0.0
        %1497 = vmatmul.mubr.f32.gmra.mxu0 %v1276
        %v1498 = vpop.f32.mrf.mxu0
        %v1499 = vadd.f32 %v1175, %v1498
        %v1500 = vpop.f32.mrf.mxu0
        %1501 = vmatprep.mubr.f32.mxu0 0.0
        %1502 = vmatmul.mubr.f32.gmra.mxu0 %v1279
        %v1503 = vpop.f32.mrf.mxu0
        %v1504 = vadd.f32 %v1180, %v1503
        %v1505 = vpop.f32.mrf.mxu0
        %1506 = vmatprep.mubr.f32.mxu0 0.0
        %1507 = vmatmul.mubr.f32.gmra.mxu0 %v1282
        %v1508 = vpop.f32.mrf.mxu0
        %v1509 = vadd.f32 %v1185, %v1508
        %v1510 = vpop.f32.mrf.mxu0
        %1511 = vdwg.mxu0
        %v1512 = vld [vmem:[#allocation2 + $0x2] sm:$0xff]
        %v1513 = vld [vmem:[#allocation2 + $0xa] sm:$0xff]
        %v1514 = vld [vmem:[#allocation2 + $0x1a] sm:$0xff]
        %v1515 = vld [vmem:[#allocation2 + $0x22] sm:$0xff]
        %v1516 = vld [vmem:[#allocation2 + $0x32] sm:$0xff]
        %v1517 = vld [vmem:[#allocation2 + $0x3a] sm:$0xff]
        %v1518 = vld [vmem:[#allocation2 + $0x4a] sm:$0xff]
        %v1519 = vld [vmem:[#allocation2 + $0x52] sm:$0xff]
        %v1520 = vld [vmem:[#allocation2 + $0x62] sm:$0xff]
        %v1521 = vld [vmem:[#allocation2 + $0x6a] sm:$0xff]
        %v1522 = vld [vmem:[#allocation2 + $0x7a] sm:$0xff]
        %v1523 = vld [vmem:[#allocation2 + $0x82] sm:$0xff]
        %v1524 = vld [vmem:[#allocation2 + $0x92] sm:$0xff]
        %v1525 = vld [vmem:[#allocation2 + $0x9a] sm:$0xff]
        %v1526 = vld [vmem:[#allocation2 + $0xaa] sm:$0xff]
        %v1527 = vld [vmem:[#allocation2 + $0xb2] sm:$0xff]
        %v1528 = vld [vmem:[#allocation2 + $0xc2] sm:$0xff]
        %v1529 = vld [vmem:[#allocation2 + $0xca] sm:$0xff]
        %v1530 = vld [vmem:[#allocation2 + $0xda] sm:$0xff]
        %v1531 = vld [vmem:[#allocation2 + $0xe2] sm:$0xff]
        %v1532 = vld [vmem:[#allocation2 + $0xf2] sm:$0xff]
        %v1533 = vld [vmem:[#allocation2 + $0xfa] sm:$0xff]
        %v1534 = vld [vmem:[#allocation2 + $0x10a] sm:$0xff]
        %v1535 = vld [vmem:[#allocation2 + $0x112] sm:$0xff]
        %v1536 = vld [vmem:[#allocation2 + $0x122] sm:$0xff]
        %v1537 = vld [vmem:[#allocation2 + $0x12a] sm:$0xff]
        %v1538 = vld [vmem:[#allocation2 + $0x13a] sm:$0xff]
        %v1539 = vld [vmem:[#allocation2 + $0x142] sm:$0xff]
        %v1540 = vld [vmem:[#allocation2 + $0x152] sm:$0xff]
        %v1541 = vld [vmem:[#allocation2 + $0x15a] sm:$0xff]
        %v1542 = vld [vmem:[#allocation2 + $0x16a] sm:$0xff]
        %v1543 = vld [vmem:[#allocation2 + $0x172] sm:$0xff]
        %s1544 = scalar_lea.vmem [#allocation6], 8
        %v1545 = vld [vmem:[%s1544] sm:$0xf]
        %v1547 = vsel %vm707, %v1512, 0
        %v1550 = vsel %vm707, %v1513, 0
        %v1553 = vsel %vm707, %v1514, 0
        %v1556 = vsel %vm707, %v1515, 0
        %v1559 = vsel %vm707, %v1516, 0
        %v1562 = vsel %vm707, %v1517, 0
        %v1565 = vsel %vm707, %v1518, 0
        %v1568 = vsel %vm707, %v1519, 0
        %v1571 = vsel %vm707, %v1520, 0
        %v1574 = vsel %vm707, %v1521, 0
        %v1577 = vsel %vm707, %v1522, 0
        %v1580 = vsel %vm707, %v1523, 0
        %v1583 = vsel %vm707, %v1524, 0
        %v1586 = vsel %vm707, %v1525, 0
        %v1589 = vsel %vm707, %v1526, 0
        %v1592 = vsel %vm707, %v1527, 0
        %v1595 = vsel %vm707, %v1528, 0
        %v1598 = vsel %vm707, %v1529, 0
        %v1601 = vsel %vm707, %v1530, 0
        %v1604 = vsel %vm707, %v1531, 0
        %v1607 = vsel %vm707, %v1532, 0
        %v1610 = vsel %vm707, %v1533, 0
        %v1613 = vsel %vm707, %v1534, 0
        %v1616 = vsel %vm707, %v1535, 0
        %v1619 = vsel %vm707, %v1536, 0
        %v1622 = vsel %vm707, %v1537, 0
        %v1625 = vsel %vm707, %v1538, 0
        %v1628 = vsel %vm707, %v1539, 0
        %v1631 = vsel %vm707, %v1540, 0
        %v1634 = vsel %vm707, %v1541, 0
        %v1637 = vsel %vm707, %v1542, 0
        %v1640 = vsel %vm707, %v1543, 0
        %v1643 = vsel %vm959, %v1545, 0
        %1645 = vmatprep.subr.mxu0 0.0
        %1646 = vmatpush1.msra.mxu0 0.0
        %1647 = vmatprep.subr.mxu0 0.0
        %1648 = vmatpush1.msra.mxu0 0.0
        %1649 = vmatprep.subr.mxu0 0.0
        %1650 = vmatpush1.msra.mxu0 0.0
        %1651 = vmatprep.subr.mxu0 0.0
        %1652 = vmatpush1.msra.mxu0 0.0
        %1653 = vmatprep.subr.mxu0 0.0
        %1654 = vmatpush1.msra.mxu0 0.0
        %1655 = vmatprep.subr.mxu0 0.0
        %1656 = vmatpush1.msra.mxu0 0.0
        %1657 = vmatprep.subr.mxu0 0.0
        %1658 = vmatpush1.msra.mxu0 0.0
        %1659 = vmatprep.subr.mxu0 0.0
        %1660 = vmatpush1.msra.mxu0 0.0
        %1661 = vmatprep.subr.mxu0 0.0
        %1662 = vmatpush1.msra.mxu0 0.0
        %1663 = vmatprep.subr.mxu0 0.0
        %1664 = vmatpush1.msra.mxu0 0.0
        %1665 = vmatprep.subr.mxu0 0.0
        %1666 = vmatpush1.msra.mxu0 0.0
        %1667 = vmatprep.subr.mxu0 0.0
        %1668 = vmatpush1.msra.mxu0 0.0
        %1669 = vmatprep.subr.mxu0 0.0
        %1670 = vmatpush1.msra.mxu0 0.0
        %1671 = vmatprep.subr.mxu0 0.0
        %1672 = vmatpush1.msra.mxu0 0.0
        %1673 = vmatprep.subr.mxu0 0.0
        %1674 = vmatpush1.msra.mxu0 0.0
        %1675 = vmatprep.subr.mxu0 0.0
        %1676 = vmatpush1.msra.mxu0 %v1643
        %1677 = vmatprep.subr.mxu0 0.0
        %1678 = vmatpush2.msra.mxu0 0.0
        %1679 = vmatprep.subr.mxu0 0.0
        %1680 = vmatpush2.msra.mxu0 0.0
        %1681 = vmatprep.subr.mxu0 0.0
        %1682 = vmatpush2.msra.mxu0 0.0
        %1683 = vmatprep.subr.mxu0 0.0
        %1684 = vmatpush2.msra.mxu0 0.0
        %1685 = vmatprep.subr.mxu0 0.0
        %1686 = vmatpush2.msra.mxu0 0.0
        %1687 = vmatprep.subr.mxu0 0.0
        %1688 = vmatpush2.msra.mxu0 0.0
        %1689 = vmatprep.subr.mxu0 0.0
        %1690 = vmatpush2.msra.mxu0 0.0
        %1691 = vmatprep.subr.mxu0 0.0
        %1692 = vmatpush2.msra.mxu0 0.0
        %1693 = vmatprep.subr.mxu0 0.0
        %1694 = vmatpush2.msra.mxu0 0.0
        %1695 = vmatprep.subr.mxu0 0.0
        %1696 = vmatpush2.msra.mxu0 0.0
        %1697 = vmatprep.subr.mxu0 0.0
        %1698 = vmatpush2.msra.mxu0 0.0
        %1699 = vmatprep.subr.mxu0 0.0
        %1700 = vmatpush2.msra.mxu0 0.0
        %1701 = vmatprep.subr.mxu0 0.0
        %1702 = vmatpush2.msra.mxu0 0.0
        %1703 = vmatprep.subr.mxu0 0.0
        %1704 = vmatpush2.msra.mxu0 0.0
        %1705 = vmatprep.subr.mxu0 0.0
        %1706 = vmatpush2.msra.mxu0 0.0
        %1707 = vmatprep.subr.mxu0 0.0
        %1708 = vmatpush2.msra.mxu0 0.0
        %1709 = vmatprep.mubr.f32.mxu0 0.0
        %1710 = vmatmul.mubr.f32.gmra.mxu0 %v1547
        %v1711 = vpop.f32.mrf.mxu0
        %v1712 = vadd.f32 0.0, %v1711
        %v1713 = vpop.f32.mrf.mxu0
        %1714 = vmatprep.mubr.f32.mxu0 0.0
        %1715 = vmatmul.mubr.f32.gmra.mxu0 %v1550
        %v1716 = vpop.f32.mrf.mxu0
        %v1717 = vadd.f32 0.0, %v1716
        %v1718 = vpop.f32.mrf.mxu0
        %1719 = vmatprep.mubr.f32.mxu0 0.0
        %1720 = vmatmul.mubr.f32.gmra.mxu0 %v1553
        %v1721 = vpop.f32.mrf.mxu0
        %v1722 = vadd.f32 0.0, %v1721
        %v1723 = vpop.f32.mrf.mxu0
        %1724 = vmatprep.mubr.f32.mxu0 0.0
        %1725 = vmatmul.mubr.f32.gmra.mxu0 %v1556
        %v1726 = vpop.f32.mrf.mxu0
        %v1727 = vadd.f32 0.0, %v1726
        %v1728 = vpop.f32.mrf.mxu0
        %1729 = vmatprep.mubr.f32.mxu0 0.0
        %1730 = vmatmul.mubr.f32.gmra.mxu0 %v1559
        %v1731 = vpop.f32.mrf.mxu0
        %v1732 = vadd.f32 0.0, %v1731
        %v1733 = vpop.f32.mrf.mxu0
        %1734 = vmatprep.mubr.f32.mxu0 0.0
        %1735 = vmatmul.mubr.f32.gmra.mxu0 %v1562
        %v1736 = vpop.f32.mrf.mxu0
        %v1737 = vadd.f32 0.0, %v1736
        %v1738 = vpop.f32.mrf.mxu0
        %1739 = vmatprep.mubr.f32.mxu0 0.0
        %1740 = vmatmul.mubr.f32.gmra.mxu0 %v1565
        %v1741 = vpop.f32.mrf.mxu0
        %v1742 = vadd.f32 0.0, %v1741
        %v1743 = vpop.f32.mrf.mxu0
        %1744 = vmatprep.mubr.f32.mxu0 0.0
        %1745 = vmatmul.mubr.f32.gmra.mxu0 %v1568
        %v1746 = vpop.f32.mrf.mxu0
        %v1747 = vadd.f32 0.0, %v1746
        %v1748 = vpop.f32.mrf.mxu0
        %1749 = vmatprep.mubr.f32.mxu0 0.0
        %1750 = vmatmul.mubr.f32.gmra.mxu0 %v1571
        %v1751 = vpop.f32.mrf.mxu0
        %v1752 = vadd.f32 0.0, %v1751
        %v1753 = vpop.f32.mrf.mxu0
        %1754 = vmatprep.mubr.f32.mxu0 0.0
        %1755 = vmatmul.mubr.f32.gmra.mxu0 %v1574
        %v1756 = vpop.f32.mrf.mxu0
        %v1757 = vadd.f32 0.0, %v1756
        %v1758 = vpop.f32.mrf.mxu0
        %1759 = vmatprep.mubr.f32.mxu0 0.0
        %1760 = vmatmul.mubr.f32.gmra.mxu0 %v1577
        %v1761 = vpop.f32.mrf.mxu0
        %v1762 = vadd.f32 0.0, %v1761
        %v1763 = vpop.f32.mrf.mxu0
        %1764 = vmatprep.mubr.f32.mxu0 0.0
        %1765 = vmatmul.mubr.f32.gmra.mxu0 %v1580
        %v1766 = vpop.f32.mrf.mxu0
        %v1767 = vadd.f32 0.0, %v1766
        %v1768 = vpop.f32.mrf.mxu0
        %1769 = vmatprep.mubr.f32.mxu0 0.0
        %1770 = vmatmul.mubr.f32.gmra.mxu0 %v1583
        %v1771 = vpop.f32.mrf.mxu0
        %v1772 = vadd.f32 0.0, %v1771
        %v1773 = vpop.f32.mrf.mxu0
        %1774 = vmatprep.mubr.f32.mxu0 0.0
        %1775 = vmatmul.mubr.f32.gmra.mxu0 %v1586
        %v1776 = vpop.f32.mrf.mxu0
        %v1777 = vadd.f32 0.0, %v1776
        %v1778 = vpop.f32.mrf.mxu0
        %1779 = vmatprep.mubr.f32.mxu0 0.0
        %1780 = vmatmul.mubr.f32.gmra.mxu0 %v1589
        %v1781 = vpop.f32.mrf.mxu0
        %v1782 = vadd.f32 0.0, %v1781
        %v1783 = vpop.f32.mrf.mxu0
        %1784 = vmatprep.mubr.f32.mxu0 0.0
        %1785 = vmatmul.mubr.f32.gmra.mxu0 %v1592
        %v1786 = vpop.f32.mrf.mxu0
        %v1787 = vadd.f32 0.0, %v1786
        %v1788 = vpop.f32.mrf.mxu0
        %1789 = vmatprep.mubr.f32.mxu0 0.0
        %1790 = vmatmul.mubr.f32.gmra.mxu0 %v1595
        %v1791 = vpop.f32.mrf.mxu0
        %v1792 = vadd.f32 0.0, %v1791
        %v1793 = vpop.f32.mrf.mxu0
        %1794 = vmatprep.mubr.f32.mxu0 0.0
        %1795 = vmatmul.mubr.f32.gmra.mxu0 %v1598
        %v1796 = vpop.f32.mrf.mxu0
        %v1797 = vadd.f32 0.0, %v1796
        %v1798 = vpop.f32.mrf.mxu0
        %1799 = vmatprep.mubr.f32.mxu0 0.0
        %1800 = vmatmul.mubr.f32.gmra.mxu0 %v1601
        %v1801 = vpop.f32.mrf.mxu0
        %v1802 = vadd.f32 0.0, %v1801
        %v1803 = vpop.f32.mrf.mxu0
        %1804 = vmatprep.mubr.f32.mxu0 0.0
        %1805 = vmatmul.mubr.f32.gmra.mxu0 %v1604
        %v1806 = vpop.f32.mrf.mxu0
        %v1807 = vadd.f32 0.0, %v1806
        %v1808 = vpop.f32.mrf.mxu0
        %1809 = vmatprep.mubr.f32.mxu0 0.0
        %1810 = vmatmul.mubr.f32.gmra.mxu0 %v1607
        %v1811 = vpop.f32.mrf.mxu0
        %v1812 = vadd.f32 0.0, %v1811
        %v1813 = vpop.f32.mrf.mxu0
        %1814 = vmatprep.mubr.f32.mxu0 0.0
        %1815 = vmatmul.mubr.f32.gmra.mxu0 %v1610
        %v1816 = vpop.f32.mrf.mxu0
        %v1817 = vadd.f32 0.0, %v1816
        %v1818 = vpop.f32.mrf.mxu0
        %1819 = vmatprep.mubr.f32.mxu0 0.0
        %1820 = vmatmul.mubr.f32.gmra.mxu0 %v1613
        %v1821 = vpop.f32.mrf.mxu0
        %v1822 = vadd.f32 0.0, %v1821
        %v1823 = vpop.f32.mrf.mxu0
        %1824 = vmatprep.mubr.f32.mxu0 0.0
        %1825 = vmatmul.mubr.f32.gmra.mxu0 %v1616
        %v1826 = vpop.f32.mrf.mxu0
        %v1827 = vadd.f32 0.0, %v1826
        %v1828 = vpop.f32.mrf.mxu0
        %1829 = vmatprep.mubr.f32.mxu0 0.0
        %1830 = vmatmul.mubr.f32.gmra.mxu0 %v1619
        %v1831 = vpop.f32.mrf.mxu0
        %v1832 = vadd.f32 0.0, %v1831
        %v1833 = vpop.f32.mrf.mxu0
        %1834 = vmatprep.mubr.f32.mxu0 0.0
        %1835 = vmatmul.mubr.f32.gmra.mxu0 %v1622
        %v1836 = vpop.f32.mrf.mxu0
        %v1837 = vadd.f32 0.0, %v1836
        %v1838 = vpop.f32.mrf.mxu0
        %1839 = vmatprep.mubr.f32.mxu0 0.0
        %1840 = vmatmul.mubr.f32.gmra.mxu0 %v1625
        %v1841 = vpop.f32.mrf.mxu0
        %v1842 = vadd.f32 0.0, %v1841
        %v1843 = vpop.f32.mrf.mxu0
        %1844 = vmatprep.mubr.f32.mxu0 0.0
        %1845 = vmatmul.mubr.f32.gmra.mxu0 %v1628
        %v1846 = vpop.f32.mrf.mxu0
        %v1847 = vadd.f32 0.0, %v1846
        %v1848 = vpop.f32.mrf.mxu0
        %1849 = vmatprep.mubr.f32.mxu0 0.0
        %1850 = vmatmul.mubr.f32.gmra.mxu0 %v1631
        %v1851 = vpop.f32.mrf.mxu0
        %v1852 = vadd.f32 0.0, %v1851
        %v1853 = vpop.f32.mrf.mxu0
        %1854 = vmatprep.mubr.f32.mxu0 0.0
        %1855 = vmatmul.mubr.f32.gmra.mxu0 %v1634
        %v1856 = vpop.f32.mrf.mxu0
        %v1857 = vadd.f32 0.0, %v1856
        %v1858 = vpop.f32.mrf.mxu0
        %1859 = vmatprep.mubr.f32.mxu0 0.0
        %1860 = vmatmul.mubr.f32.gmra.mxu0 %v1637
        %v1861 = vpop.f32.mrf.mxu0
        %v1862 = vadd.f32 0.0, %v1861
        %v1863 = vpop.f32.mrf.mxu0
        %1864 = vmatprep.mubr.f32.mxu0 0.0
        %1865 = vmatmul.mubr.f32.gmra.mxu0 %v1640
        %v1866 = vpop.f32.mrf.mxu0
        %v1867 = vadd.f32 0.0, %v1866
        %v1868 = vpop.f32.mrf.mxu0
        %1869 = vdwg.mxu0
        %v1870 = vadd.f32 %v1354, %v1712
        %v1871 = vadd.f32 %v1359, %v1717
        %v1872 = vadd.f32 %v1364, %v1722
        %v1873 = vadd.f32 %v1369, %v1727
        %v1874 = vadd.f32 %v1374, %v1732
        %v1875 = vadd.f32 %v1379, %v1737
        %v1876 = vadd.f32 %v1384, %v1742
        %v1877 = vadd.f32 %v1389, %v1747
        %v1878 = vadd.f32 %v1394, %v1752
        %v1879 = vadd.f32 %v1399, %v1757
        %v1880 = vadd.f32 %v1404, %v1762
        %v1881 = vadd.f32 %v1409, %v1767
        %v1882 = vadd.f32 %v1414, %v1772
        %v1883 = vadd.f32 %v1419, %v1777
        %v1884 = vadd.f32 %v1424, %v1782
        %v1885 = vadd.f32 %v1429, %v1787
        %v1886 = vadd.f32 %v1434, %v1792
        %v1887 = vadd.f32 %v1439, %v1797
        %v1888 = vadd.f32 %v1444, %v1802
        %v1889 = vadd.f32 %v1449, %v1807
        %v1890 = vadd.f32 %v1454, %v1812
        %v1891 = vadd.f32 %v1459, %v1817
        %v1892 = vadd.f32 %v1464, %v1822
        %v1893 = vadd.f32 %v1469, %v1827
        %v1894 = vadd.f32 %v1474, %v1832
        %v1895 = vadd.f32 %v1479, %v1837
        %v1896 = vadd.f32 %v1484, %v1842
        %v1897 = vadd.f32 %v1489, %v1847
        %v1898 = vadd.f32 %v1494, %v1852
        %v1899 = vadd.f32 %v1499, %v1857
        %v1900 = vadd.f32 %v1504, %v1862
        %v1901 = vadd.f32 %v1509, %v1867
        %v1902 = vld [vmem:[%s763] sm:$0xff]
        %v1903 = vld [vmem:[%s763 + $0x8] sm:$0xff]
        %v1904 = vld [vmem:[%s763 + $0x18] sm:$0xff]
        %v1905 = vld [vmem:[%s763 + $0x20] sm:$0xff]
        %v1906 = vld [vmem:[%s763 + $0x30] sm:$0xff]
        %v1907 = vld [vmem:[%s763 + $0x38] sm:$0xff]
        %v1908 = vld [vmem:[%s763 + $0x48] sm:$0xff]
        %v1909 = vld [vmem:[%s763 + $0x50] sm:$0xff]
        %v1910 = vld [vmem:[%s763 + $0x60] sm:$0xff]
        %v1911 = vld [vmem:[%s763 + $0x68] sm:$0xff]
        %v1912 = vld [vmem:[%s763 + $0x78] sm:$0xff]
        %v1913 = vld [vmem:[%s763 + $0x80] sm:$0xff]
        %v1914 = vld [vmem:[%s763 + $0x90] sm:$0xff]
        %v1915 = vld [vmem:[%s763 + $0x98] sm:$0xff]
        %v1916 = vld [vmem:[%s763 + $0xa8] sm:$0xff]
        %v1917 = vld [vmem:[%s763 + $0xb0] sm:$0xff]
        %v1918 = vld [vmem:[%s763 + $0xc0] sm:$0xff]
        %v1919 = vld [vmem:[%s763 + $0xc8] sm:$0xff]
        %v1920 = vld [vmem:[%s763 + $0xd8] sm:$0xff]
        %v1921 = vld [vmem:[%s763 + $0xe0] sm:$0xff]
        %v1922 = vld [vmem:[%s763 + $0xf0] sm:$0xff]
        %v1923 = vld [vmem:[%s763 + $0xf8] sm:$0xff]
        %v1924 = vld [vmem:[%s763 + $0x108] sm:$0xff]
        %v1925 = vld [vmem:[%s763 + $0x110] sm:$0xff]
        %v1926 = vld [vmem:[%s763 + $0x120] sm:$0xff]
        %v1927 = vld [vmem:[%s763 + $0x128] sm:$0xff]
        %v1928 = vld [vmem:[%s763 + $0x138] sm:$0xff]
        %v1929 = vld [vmem:[%s763 + $0x140] sm:$0xff]
        %v1930 = vld [vmem:[%s763 + $0x150] sm:$0xff]
        %v1931 = vld [vmem:[%s763 + $0x158] sm:$0xff]
        %v1932 = vld [vmem:[%s763 + $0x168] sm:$0xff]
        %v1933 = vld [vmem:[%s763 + $0x170] sm:$0xff]
        %s1934 = scalar_lea.vmem [#allocation6], 12
        %v1935 = vld [vmem:[%s1934] sm:$0xf]
        %v1937 = vsel %vm707, %v1902, 0
        %v1940 = vsel %vm707, %v1903, 0
        %v1943 = vsel %vm707, %v1904, 0
        %v1946 = vsel %vm707, %v1905, 0
        %v1949 = vsel %vm707, %v1906, 0
        %v1952 = vsel %vm707, %v1907, 0
        %v1955 = vsel %vm707, %v1908, 0
        %v1958 = vsel %vm707, %v1909, 0
        %v1961 = vsel %vm707, %v1910, 0
        %v1964 = vsel %vm707, %v1911, 0
        %v1967 = vsel %vm707, %v1912, 0
        %v1970 = vsel %vm707, %v1913, 0
        %v1973 = vsel %vm707, %v1914, 0
        %v1976 = vsel %vm707, %v1915, 0
        %v1979 = vsel %vm707, %v1916, 0
        %v1982 = vsel %vm707, %v1917, 0
        %v1985 = vsel %vm707, %v1918, 0
        %v1988 = vsel %vm707, %v1919, 0
        %v1991 = vsel %vm707, %v1920, 0
        %v1994 = vsel %vm707, %v1921, 0
        %v1997 = vsel %vm707, %v1922, 0
        %v2000 = vsel %vm707, %v1923, 0
        %v2003 = vsel %vm707, %v1924, 0
        %v2006 = vsel %vm707, %v1925, 0
        %v2009 = vsel %vm707, %v1926, 0
        %v2012 = vsel %vm707, %v1927, 0
        %v2015 = vsel %vm707, %v1928, 0
        %v2018 = vsel %vm707, %v1929, 0
        %v2021 = vsel %vm707, %v1930, 0
        %v2024 = vsel %vm707, %v1931, 0
        %v2027 = vsel %vm707, %v1932, 0
        %v2030 = vsel %vm707, %v1933, 0
        %v2033 = vsel %vm959, %v1935, 0
        %2035 = vmatprep.subr.mxu0 0.0
        %2036 = vmatpush1.msra.mxu0 0.0
        %2037 = vmatprep.subr.mxu0 0.0
        %2038 = vmatpush1.msra.mxu0 0.0
        %2039 = vmatprep.subr.mxu0 0.0
        %2040 = vmatpush1.msra.mxu0 0.0
        %2041 = vmatprep.subr.mxu0 0.0
        %2042 = vmatpush1.msra.mxu0 0.0
        %2043 = vmatprep.subr.mxu0 0.0
        %2044 = vmatpush1.msra.mxu0 0.0
        %2045 = vmatprep.subr.mxu0 0.0
        %2046 = vmatpush1.msra.mxu0 0.0
        %2047 = vmatprep.subr.mxu0 0.0
        %2048 = vmatpush1.msra.mxu0 0.0
        %2049 = vmatprep.subr.mxu0 0.0
        %2050 = vmatpush1.msra.mxu0 0.0
        %2051 = vmatprep.subr.mxu0 0.0
        %2052 = vmatpush1.msra.mxu0 0.0
        %2053 = vmatprep.subr.mxu0 0.0
        %2054 = vmatpush1.msra.mxu0 0.0
        %2055 = vmatprep.subr.mxu0 0.0
        %2056 = vmatpush1.msra.mxu0 0.0
        %2057 = vmatprep.subr.mxu0 0.0
        %2058 = vmatpush1.msra.mxu0 0.0
        %2059 = vmatprep.subr.mxu0 0.0
        %2060 = vmatpush1.msra.mxu0 0.0
        %2061 = vmatprep.subr.mxu0 0.0
        %2062 = vmatpush1.msra.mxu0 0.0
        %2063 = vmatprep.subr.mxu0 0.0
        %2064 = vmatpush1.msra.mxu0 0.0
        %2065 = vmatprep.subr.mxu0 0.0
        %2066 = vmatpush1.msra.mxu0 %v2033
        %2067 = vmatprep.subr.mxu0 0.0
        %2068 = vmatpush2.msra.mxu0 0.0
        %2069 = vmatprep.subr.mxu0 0.0
        %2070 = vmatpush2.msra.mxu0 0.0
        %2071 = vmatprep.subr.mxu0 0.0
        %2072 = vmatpush2.msra.mxu0 0.0
        %2073 = vmatprep.subr.mxu0 0.0
        %2074 = vmatpush2.msra.mxu0 0.0
        %2075 = vmatprep.subr.mxu0 0.0
        %2076 = vmatpush2.msra.mxu0 0.0
        %2077 = vmatprep.subr.mxu0 0.0
        %2078 = vmatpush2.msra.mxu0 0.0
        %2079 = vmatprep.subr.mxu0 0.0
        %2080 = vmatpush2.msra.mxu0 0.0
        %2081 = vmatprep.subr.mxu0 0.0
        %2082 = vmatpush2.msra.mxu0 0.0
        %2083 = vmatprep.subr.mxu0 0.0
        %2084 = vmatpush2.msra.mxu0 0.0
        %2085 = vmatprep.subr.mxu0 0.0
        %2086 = vmatpush2.msra.mxu0 0.0
        %2087 = vmatprep.subr.mxu0 0.0
        %2088 = vmatpush2.msra.mxu0 0.0
        %2089 = vmatprep.subr.mxu0 0.0
        %2090 = vmatpush2.msra.mxu0 0.0
        %2091 = vmatprep.subr.mxu0 0.0
        %2092 = vmatpush2.msra.mxu0 0.0
        %2093 = vmatprep.subr.mxu0 0.0
        %2094 = vmatpush2.msra.mxu0 0.0
        %2095 = vmatprep.subr.mxu0 0.0
        %2096 = vmatpush2.msra.mxu0 0.0
        %2097 = vmatprep.subr.mxu0 0.0
        %2098 = vmatpush2.msra.mxu0 0.0
        %2099 = vmatprep.mubr.f32.mxu0 0.0
        %2100 = vmatmul.mubr.f32.gmra.mxu0 %v1937
        %v2101 = vpop.f32.mrf.mxu0
        %v2102 = vadd.f32 0.0, %v2101
        %v2103 = vpop.f32.mrf.mxu0
        %2104 = vmatprep.mubr.f32.mxu0 0.0
        %2105 = vmatmul.mubr.f32.gmra.mxu0 %v1940
        %v2106 = vpop.f32.mrf.mxu0
        %v2107 = vadd.f32 0.0, %v2106
        %v2108 = vpop.f32.mrf.mxu0
        %2109 = vmatprep.mubr.f32.mxu0 0.0
        %2110 = vmatmul.mubr.f32.gmra.mxu0 %v1943
        %v2111 = vpop.f32.mrf.mxu0
        %v2112 = vadd.f32 0.0, %v2111
        %v2113 = vpop.f32.mrf.mxu0
        %2114 = vmatprep.mubr.f32.mxu0 0.0
        %2115 = vmatmul.mubr.f32.gmra.mxu0 %v1946
        %v2116 = vpop.f32.mrf.mxu0
        %v2117 = vadd.f32 0.0, %v2116
        %v2118 = vpop.f32.mrf.mxu0
        %2119 = vmatprep.mubr.f32.mxu0 0.0
        %2120 = vmatmul.mubr.f32.gmra.mxu0 %v1949
        %v2121 = vpop.f32.mrf.mxu0
        %v2122 = vadd.f32 0.0, %v2121
        %v2123 = vpop.f32.mrf.mxu0
        %2124 = vmatprep.mubr.f32.mxu0 0.0
        %2125 = vmatmul.mubr.f32.gmra.mxu0 %v1952
        %v2126 = vpop.f32.mrf.mxu0
        %v2127 = vadd.f32 0.0, %v2126
        %v2128 = vpop.f32.mrf.mxu0
        %2129 = vmatprep.mubr.f32.mxu0 0.0
        %2130 = vmatmul.mubr.f32.gmra.mxu0 %v1955
        %v2131 = vpop.f32.mrf.mxu0
        %v2132 = vadd.f32 0.0, %v2131
        %v2133 = vpop.f32.mrf.mxu0
        %2134 = vmatprep.mubr.f32.mxu0 0.0
        %2135 = vmatmul.mubr.f32.gmra.mxu0 %v1958
        %v2136 = vpop.f32.mrf.mxu0
        %v2137 = vadd.f32 0.0, %v2136
        %v2138 = vpop.f32.mrf.mxu0
        %2139 = vmatprep.mubr.f32.mxu0 0.0
        %2140 = vmatmul.mubr.f32.gmra.mxu0 %v1961
        %v2141 = vpop.f32.mrf.mxu0
        %v2142 = vadd.f32 0.0, %v2141
        %v2143 = vpop.f32.mrf.mxu0
        %2144 = vmatprep.mubr.f32.mxu0 0.0
        %2145 = vmatmul.mubr.f32.gmra.mxu0 %v1964
        %v2146 = vpop.f32.mrf.mxu0
        %v2147 = vadd.f32 0.0, %v2146
        %v2148 = vpop.f32.mrf.mxu0
        %2149 = vmatprep.mubr.f32.mxu0 0.0
        %2150 = vmatmul.mubr.f32.gmra.mxu0 %v1967
        %v2151 = vpop.f32.mrf.mxu0
        %v2152 = vadd.f32 0.0, %v2151
        %v2153 = vpop.f32.mrf.mxu0
        %2154 = vmatprep.mubr.f32.mxu0 0.0
        %2155 = vmatmul.mubr.f32.gmra.mxu0 %v1970
        %v2156 = vpop.f32.mrf.mxu0
        %v2157 = vadd.f32 0.0, %v2156
        %v2158 = vpop.f32.mrf.mxu0
        %2159 = vmatprep.mubr.f32.mxu0 0.0
        %2160 = vmatmul.mubr.f32.gmra.mxu0 %v1973
        %v2161 = vpop.f32.mrf.mxu0
        %v2162 = vadd.f32 0.0, %v2161
        %v2163 = vpop.f32.mrf.mxu0
        %2164 = vmatprep.mubr.f32.mxu0 0.0
        %2165 = vmatmul.mubr.f32.gmra.mxu0 %v1976
        %v2166 = vpop.f32.mrf.mxu0
        %v2167 = vadd.f32 0.0, %v2166
        %v2168 = vpop.f32.mrf.mxu0
        %2169 = vmatprep.mubr.f32.mxu0 0.0
        %2170 = vmatmul.mubr.f32.gmra.mxu0 %v1979
        %v2171 = vpop.f32.mrf.mxu0
        %v2172 = vadd.f32 0.0, %v2171
        %v2173 = vpop.f32.mrf.mxu0
        %2174 = vmatprep.mubr.f32.mxu0 0.0
        %2175 = vmatmul.mubr.f32.gmra.mxu0 %v1982
        %v2176 = vpop.f32.mrf.mxu0
        %v2177 = vadd.f32 0.0, %v2176
        %v2178 = vpop.f32.mrf.mxu0
        %2179 = vmatprep.mubr.f32.mxu0 0.0
        %2180 = vmatmul.mubr.f32.gmra.mxu0 %v1985
        %v2181 = vpop.f32.mrf.mxu0
        %v2182 = vadd.f32 0.0, %v2181
        %v2183 = vpop.f32.mrf.mxu0
        %2184 = vmatprep.mubr.f32.mxu0 0.0
        %2185 = vmatmul.mubr.f32.gmra.mxu0 %v1988
        %v2186 = vpop.f32.mrf.mxu0
        %v2187 = vadd.f32 0.0, %v2186
        %v2188 = vpop.f32.mrf.mxu0
        %2189 = vmatprep.mubr.f32.mxu0 0.0
        %2190 = vmatmul.mubr.f32.gmra.mxu0 %v1991
        %v2191 = vpop.f32.mrf.mxu0
        %v2192 = vadd.f32 0.0, %v2191
        %v2193 = vpop.f32.mrf.mxu0
        %2194 = vmatprep.mubr.f32.mxu0 0.0
        %2195 = vmatmul.mubr.f32.gmra.mxu0 %v1994
        %v2196 = vpop.f32.mrf.mxu0
        %v2197 = vadd.f32 0.0, %v2196
        %v2198 = vpop.f32.mrf.mxu0
        %2199 = vmatprep.mubr.f32.mxu0 0.0
        %2200 = vmatmul.mubr.f32.gmra.mxu0 %v1997
        %v2201 = vpop.f32.mrf.mxu0
        %v2202 = vadd.f32 0.0, %v2201
        %v2203 = vpop.f32.mrf.mxu0
        %2204 = vmatprep.mubr.f32.mxu0 0.0
        %2205 = vmatmul.mubr.f32.gmra.mxu0 %v2000
        %v2206 = vpop.f32.mrf.mxu0
        %v2207 = vadd.f32 0.0, %v2206
        %v2208 = vpop.f32.mrf.mxu0
        %2209 = vmatprep.mubr.f32.mxu0 0.0
        %2210 = vmatmul.mubr.f32.gmra.mxu0 %v2003
        %v2211 = vpop.f32.mrf.mxu0
        %v2212 = vadd.f32 0.0, %v2211
        %v2213 = vpop.f32.mrf.mxu0
        %2214 = vmatprep.mubr.f32.mxu0 0.0
        %2215 = vmatmul.mubr.f32.gmra.mxu0 %v2006
        %v2216 = vpop.f32.mrf.mxu0
        %v2217 = vadd.f32 0.0, %v2216
        %v2218 = vpop.f32.mrf.mxu0
        %2219 = vmatprep.mubr.f32.mxu0 0.0
        %2220 = vmatmul.mubr.f32.gmra.mxu0 %v2009
        %v2221 = vpop.f32.mrf.mxu0
        %v2222 = vadd.f32 0.0, %v2221
        %v2223 = vpop.f32.mrf.mxu0
        %2224 = vmatprep.mubr.f32.mxu0 0.0
        %2225 = vmatmul.mubr.f32.gmra.mxu0 %v2012
        %v2226 = vpop.f32.mrf.mxu0
        %v2227 = vadd.f32 0.0, %v2226
        %v2228 = vpop.f32.mrf.mxu0
        %2229 = vmatprep.mubr.f32.mxu0 0.0
        %2230 = vmatmul.mubr.f32.gmra.mxu0 %v2015
        %v2231 = vpop.f32.mrf.mxu0
        %v2232 = vadd.f32 0.0, %v2231
        %v2233 = vpop.f32.mrf.mxu0
        %2234 = vmatprep.mubr.f32.mxu0 0.0
        %2235 = vmatmul.mubr.f32.gmra.mxu0 %v2018
        %v2236 = vpop.f32.mrf.mxu0
        %v2237 = vadd.f32 0.0, %v2236
        %v2238 = vpop.f32.mrf.mxu0
        %2239 = vmatprep.mubr.f32.mxu0 0.0
        %2240 = vmatmul.mubr.f32.gmra.mxu0 %v2021
        %v2241 = vpop.f32.mrf.mxu0
        %v2242 = vadd.f32 0.0, %v2241
        %v2243 = vpop.f32.mrf.mxu0
        %2244 = vmatprep.mubr.f32.mxu0 0.0
        %2245 = vmatmul.mubr.f32.gmra.mxu0 %v2024
        %v2246 = vpop.f32.mrf.mxu0
        %v2247 = vadd.f32 0.0, %v2246
        %v2248 = vpop.f32.mrf.mxu0
        %2249 = vmatprep.mubr.f32.mxu0 0.0
        %2250 = vmatmul.mubr.f32.gmra.mxu0 %v2027
        %v2251 = vpop.f32.mrf.mxu0
        %v2252 = vadd.f32 0.0, %v2251
        %v2253 = vpop.f32.mrf.mxu0
        %2254 = vmatprep.mubr.f32.mxu0 0.0
        %2255 = vmatmul.mubr.f32.gmra.mxu0 %v2030
        %v2256 = vpop.f32.mrf.mxu0
        %v2257 = vadd.f32 0.0, %v2256
        %v2258 = vpop.f32.mrf.mxu0
        %2259 = vdwg.mxu0
        %v2260 = vadd.f32 %v1870, %v2102
        %v2261 = vadd.f32 %v1871, %v2107
        %v2262 = vadd.f32 %v1872, %v2112
        %v2263 = vadd.f32 %v1873, %v2117
        %v2264 = vadd.f32 %v1874, %v2122
        %v2265 = vadd.f32 %v1875, %v2127
        %v2266 = vadd.f32 %v1876, %v2132
        %v2267 = vadd.f32 %v1877, %v2137
        %v2268 = vadd.f32 %v1878, %v2142
        %v2269 = vadd.f32 %v1879, %v2147
        %v2270 = vadd.f32 %v1880, %v2152
        %v2271 = vadd.f32 %v1881, %v2157
        %v2272 = vadd.f32 %v1882, %v2162
        %v2273 = vadd.f32 %v1883, %v2167
        %v2274 = vadd.f32 %v1884, %v2172
        %v2275 = vadd.f32 %v1885, %v2177
        %v2276 = vadd.f32 %v1886, %v2182
        %v2277 = vadd.f32 %v1887, %v2187
        %v2278 = vadd.f32 %v1888, %v2192
        %v2279 = vadd.f32 %v1889, %v2197
        %v2280 = vadd.f32 %v1890, %v2202
        %v2281 = vadd.f32 %v1891, %v2207
        %v2282 = vadd.f32 %v1892, %v2212
        %v2283 = vadd.f32 %v1893, %v2217
        %v2284 = vadd.f32 %v1894, %v2222
        %v2285 = vadd.f32 %v1895, %v2227
        %v2286 = vadd.f32 %v1896, %v2232
        %v2287 = vadd.f32 %v1897, %v2237
        %v2288 = vadd.f32 %v1898, %v2242
        %v2289 = vadd.f32 %v1899, %v2247
        %v2290 = vadd.f32 %v1900, %v2252
        %v2291 = vadd.f32 %v1901, %v2257
        %v2292 = vld [vmem:[%s763 + $0x1] sm:$0xff]
        %v2293 = vld [vmem:[%s763 + $0x9] sm:$0xff]
        %v2294 = vld [vmem:[%s763 + $0x19] sm:$0xff]
        %v2295 = vld [vmem:[%s763 + $0x21] sm:$0xff]
        %v2296 = vld [vmem:[%s763 + $0x31] sm:$0xff]
        %v2297 = vld [vmem:[%s763 + $0x39] sm:$0xff]
        %v2298 = vld [vmem:[%s763 + $0x49] sm:$0xff]
        %v2299 = vld [vmem:[%s763 + $0x51] sm:$0xff]
        %v2300 = vld [vmem:[%s763 + $0x61] sm:$0xff]
        %v2301 = vld [vmem:[%s763 + $0x69] sm:$0xff]
        %v2302 = vld [vmem:[%s763 + $0x79] sm:$0xff]
        %v2303 = vld [vmem:[%s763 + $0x81] sm:$0xff]
        %v2304 = vld [vmem:[%s763 + $0x91] sm:$0xff]
        %v2305 = vld [vmem:[%s763 + $0x99] sm:$0xff]
        %v2306 = vld [vmem:[%s763 + $0xa9] sm:$0xff]
        %v2307 = vld [vmem:[%s763 + $0xb1] sm:$0xff]
        %v2308 = vld [vmem:[%s763 + $0xc1] sm:$0xff]
        %v2309 = vld [vmem:[%s763 + $0xc9] sm:$0xff]
        %v2310 = vld [vmem:[%s763 + $0xd9] sm:$0xff]
        %v2311 = vld [vmem:[%s763 + $0xe1] sm:$0xff]
        %v2312 = vld [vmem:[%s763 + $0xf1] sm:$0xff]
        %v2313 = vld [vmem:[%s763 + $0xf9] sm:$0xff]
        %v2314 = vld [vmem:[%s763 + $0x109] sm:$0xff]
        %v2315 = vld [vmem:[%s763 + $0x111] sm:$0xff]
        %v2316 = vld [vmem:[%s763 + $0x121] sm:$0xff]
        %v2317 = vld [vmem:[%s763 + $0x129] sm:$0xff]
        %v2318 = vld [vmem:[%s763 + $0x139] sm:$0xff]
        %v2319 = vld [vmem:[%s763 + $0x141] sm:$0xff]
        %v2320 = vld [vmem:[%s763 + $0x151] sm:$0xff]
        %v2321 = vld [vmem:[%s763 + $0x159] sm:$0xff]
        %v2322 = vld [vmem:[%s763 + $0x169] sm:$0xff]
        %v2323 = vld [vmem:[%s763 + $0x171] sm:$0xff]
        %s2324 = scalar_lea.vmem [#allocation6], 16
        %v2325 = vld [vmem:[%s2324] sm:$0xf]
        %v2327 = vsel %vm707, %v2292, 0
        %v2330 = vsel %vm707, %v2293, 0
        %v2333 = vsel %vm707, %v2294, 0
        %v2336 = vsel %vm707, %v2295, 0
        %v2339 = vsel %vm707, %v2296, 0
        %v2342 = vsel %vm707, %v2297, 0
        %v2345 = vsel %vm707, %v2298, 0
        %v2348 = vsel %vm707, %v2299, 0
        %v2351 = vsel %vm707, %v2300, 0
        %v2354 = vsel %vm707, %v2301, 0
        %v2357 = vsel %vm707, %v2302, 0
        %v2360 = vsel %vm707, %v2303, 0
        %v2363 = vsel %vm707, %v2304, 0
        %v2366 = vsel %vm707, %v2305, 0
        %v2369 = vsel %vm707, %v2306, 0
        %v2372 = vsel %vm707, %v2307, 0
        %v2375 = vsel %vm707, %v2308, 0
        %v2378 = vsel %vm707, %v2309, 0
        %v2381 = vsel %vm707, %v2310, 0
        %v2384 = vsel %vm707, %v2311, 0
        %v2387 = vsel %vm707, %v2312, 0
        %v2390 = vsel %vm707, %v2313, 0
        %v2393 = vsel %vm707, %v2314, 0
        %v2396 = vsel %vm707, %v2315, 0
        %v2399 = vsel %vm707, %v2316, 0
        %v2402 = vsel %vm707, %v2317, 0
        %v2405 = vsel %vm707, %v2318, 0
        %v2408 = vsel %vm707, %v2319, 0
        %v2411 = vsel %vm707, %v2320, 0
        %v2414 = vsel %vm707, %v2321, 0
        %v2417 = vsel %vm707, %v2322, 0
        %v2420 = vsel %vm707, %v2323, 0
        %v2423 = vsel %vm959, %v2325, 0
        %2425 = vmatprep.subr.mxu0 0.0
        %2426 = vmatpush1.msra.mxu0 0.0
        %2427 = vmatprep.subr.mxu0 0.0
        %2428 = vmatpush1.msra.mxu0 0.0
        %2429 = vmatprep.subr.mxu0 0.0
        %2430 = vmatpush1.msra.mxu0 0.0
        %2431 = vmatprep.subr.mxu0 0.0
        %2432 = vmatpush1.msra.mxu0 0.0
        %2433 = vmatprep.subr.mxu0 0.0
        %2434 = vmatpush1.msra.mxu0 0.0
        %2435 = vmatprep.subr.mxu0 0.0
        %2436 = vmatpush1.msra.mxu0 0.0
        %2437 = vmatprep.subr.mxu0 0.0
        %2438 = vmatpush1.msra.mxu0 0.0
        %2439 = vmatprep.subr.mxu0 0.0
        %2440 = vmatpush1.msra.mxu0 0.0
        %2441 = vmatprep.subr.mxu0 0.0
        %2442 = vmatpush1.msra.mxu0 0.0
        %2443 = vmatprep.subr.mxu0 0.0
        %2444 = vmatpush1.msra.mxu0 0.0
        %2445 = vmatprep.subr.mxu0 0.0
        %2446 = vmatpush1.msra.mxu0 0.0
        %2447 = vmatprep.subr.mxu0 0.0
        %2448 = vmatpush1.msra.mxu0 0.0
        %2449 = vmatprep.subr.mxu0 0.0
        %2450 = vmatpush1.msra.mxu0 0.0
        %2451 = vmatprep.subr.mxu0 0.0
        %2452 = vmatpush1.msra.mxu0 0.0
        %2453 = vmatprep.subr.mxu0 0.0
        %2454 = vmatpush1.msra.mxu0 0.0
        %2455 = vmatprep.subr.mxu0 0.0
        %2456 = vmatpush1.msra.mxu0 %v2423
        %2457 = vmatprep.subr.mxu0 0.0
        %2458 = vmatpush2.msra.mxu0 0.0
        %2459 = vmatprep.subr.mxu0 0.0
        %2460 = vmatpush2.msra.mxu0 0.0
        %2461 = vmatprep.subr.mxu0 0.0
        %2462 = vmatpush2.msra.mxu0 0.0
        %2463 = vmatprep.subr.mxu0 0.0
        %2464 = vmatpush2.msra.mxu0 0.0
        %2465 = vmatprep.subr.mxu0 0.0
        %2466 = vmatpush2.msra.mxu0 0.0
        %2467 = vmatprep.subr.mxu0 0.0
        %2468 = vmatpush2.msra.mxu0 0.0
        %2469 = vmatprep.subr.mxu0 0.0
        %2470 = vmatpush2.msra.mxu0 0.0
        %2471 = vmatprep.subr.mxu0 0.0
        %2472 = vmatpush2.msra.mxu0 0.0
        %2473 = vmatprep.subr.mxu0 0.0
        %2474 = vmatpush2.msra.mxu0 0.0
        %2475 = vmatprep.subr.mxu0 0.0
        %2476 = vmatpush2.msra.mxu0 0.0
        %2477 = vmatprep.subr.mxu0 0.0
        %2478 = vmatpush2.msra.mxu0 0.0
        %2479 = vmatprep.subr.mxu0 0.0
        %2480 = vmatpush2.msra.mxu0 0.0
        %2481 = vmatprep.subr.mxu0 0.0
        %2482 = vmatpush2.msra.mxu0 0.0
        %2483 = vmatprep.subr.mxu0 0.0
        %2484 = vmatpush2.msra.mxu0 0.0
        %2485 = vmatprep.subr.mxu0 0.0
        %2486 = vmatpush2.msra.mxu0 0.0
        %2487 = vmatprep.subr.mxu0 0.0
        %2488 = vmatpush2.msra.mxu0 0.0
        %2489 = vmatprep.mubr.f32.mxu0 0.0
        %2490 = vmatmul.mubr.f32.gmra.mxu0 %v2327
        %v2491 = vpop.f32.mrf.mxu0
        %v2492 = vadd.f32 0.0, %v2491
        %v2493 = vpop.f32.mrf.mxu0
        %2494 = vmatprep.mubr.f32.mxu0 0.0
        %2495 = vmatmul.mubr.f32.gmra.mxu0 %v2330
        %v2496 = vpop.f32.mrf.mxu0
        %v2497 = vadd.f32 0.0, %v2496
        %v2498 = vpop.f32.mrf.mxu0
        %2499 = vmatprep.mubr.f32.mxu0 0.0
        %2500 = vmatmul.mubr.f32.gmra.mxu0 %v2333
        %v2501 = vpop.f32.mrf.mxu0
        %v2502 = vadd.f32 0.0, %v2501
        %v2503 = vpop.f32.mrf.mxu0
        %2504 = vmatprep.mubr.f32.mxu0 0.0
        %2505 = vmatmul.mubr.f32.gmra.mxu0 %v2336
        %v2506 = vpop.f32.mrf.mxu0
        %v2507 = vadd.f32 0.0, %v2506
        %v2508 = vpop.f32.mrf.mxu0
        %2509 = vmatprep.mubr.f32.mxu0 0.0
        %2510 = vmatmul.mubr.f32.gmra.mxu0 %v2339
        %v2511 = vpop.f32.mrf.mxu0
        %v2512 = vadd.f32 0.0, %v2511
        %v2513 = vpop.f32.mrf.mxu0
        %2514 = vmatprep.mubr.f32.mxu0 0.0
        %2515 = vmatmul.mubr.f32.gmra.mxu0 %v2342
        %v2516 = vpop.f32.mrf.mxu0
        %v2517 = vadd.f32 0.0, %v2516
        %v2518 = vpop.f32.mrf.mxu0
        %2519 = vmatprep.mubr.f32.mxu0 0.0
        %2520 = vmatmul.mubr.f32.gmra.mxu0 %v2345
        %v2521 = vpop.f32.mrf.mxu0
        %v2522 = vadd.f32 0.0, %v2521
        %v2523 = vpop.f32.mrf.mxu0
        %2524 = vmatprep.mubr.f32.mxu0 0.0
        %2525 = vmatmul.mubr.f32.gmra.mxu0 %v2348
        %v2526 = vpop.f32.mrf.mxu0
        %v2527 = vadd.f32 0.0, %v2526
        %v2528 = vpop.f32.mrf.mxu0
        %2529 = vmatprep.mubr.f32.mxu0 0.0
        %2530 = vmatmul.mubr.f32.gmra.mxu0 %v2351
        %v2531 = vpop.f32.mrf.mxu0
        %v2532 = vadd.f32 0.0, %v2531
        %v2533 = vpop.f32.mrf.mxu0
        %2534 = vmatprep.mubr.f32.mxu0 0.0
        %2535 = vmatmul.mubr.f32.gmra.mxu0 %v2354
        %v2536 = vpop.f32.mrf.mxu0
        %v2537 = vadd.f32 0.0, %v2536
        %v2538 = vpop.f32.mrf.mxu0
        %2539 = vmatprep.mubr.f32.mxu0 0.0
        %2540 = vmatmul.mubr.f32.gmra.mxu0 %v2357
        %v2541 = vpop.f32.mrf.mxu0
        %v2542 = vadd.f32 0.0, %v2541
        %v2543 = vpop.f32.mrf.mxu0
        %2544 = vmatprep.mubr.f32.mxu0 0.0
        %2545 = vmatmul.mubr.f32.gmra.mxu0 %v2360
        %v2546 = vpop.f32.mrf.mxu0
        %v2547 = vadd.f32 0.0, %v2546
        %v2548 = vpop.f32.mrf.mxu0
        %2549 = vmatprep.mubr.f32.mxu0 0.0
        %2550 = vmatmul.mubr.f32.gmra.mxu0 %v2363
        %v2551 = vpop.f32.mrf.mxu0
        %v2552 = vadd.f32 0.0, %v2551
        %v2553 = vpop.f32.mrf.mxu0
        %2554 = vmatprep.mubr.f32.mxu0 0.0
        %2555 = vmatmul.mubr.f32.gmra.mxu0 %v2366
        %v2556 = vpop.f32.mrf.mxu0
        %v2557 = vadd.f32 0.0, %v2556
        %v2558 = vpop.f32.mrf.mxu0
        %2559 = vmatprep.mubr.f32.mxu0 0.0
        %2560 = vmatmul.mubr.f32.gmra.mxu0 %v2369
        %v2561 = vpop.f32.mrf.mxu0
        %v2562 = vadd.f32 0.0, %v2561
        %v2563 = vpop.f32.mrf.mxu0
        %2564 = vmatprep.mubr.f32.mxu0 0.0
        %2565 = vmatmul.mubr.f32.gmra.mxu0 %v2372
        %v2566 = vpop.f32.mrf.mxu0
        %v2567 = vadd.f32 0.0, %v2566
        %v2568 = vpop.f32.mrf.mxu0
        %2569 = vmatprep.mubr.f32.mxu0 0.0
        %2570 = vmatmul.mubr.f32.gmra.mxu0 %v2375
        %v2571 = vpop.f32.mrf.mxu0
        %v2572 = vadd.f32 0.0, %v2571
        %v2573 = vpop.f32.mrf.mxu0
        %2574 = vmatprep.mubr.f32.mxu0 0.0
        %2575 = vmatmul.mubr.f32.gmra.mxu0 %v2378
        %v2576 = vpop.f32.mrf.mxu0
        %v2577 = vadd.f32 0.0, %v2576
        %v2578 = vpop.f32.mrf.mxu0
        %2579 = vmatprep.mubr.f32.mxu0 0.0
        %2580 = vmatmul.mubr.f32.gmra.mxu0 %v2381
        %v2581 = vpop.f32.mrf.mxu0
        %v2582 = vadd.f32 0.0, %v2581
        %v2583 = vpop.f32.mrf.mxu0
        %2584 = vmatprep.mubr.f32.mxu0 0.0
        %2585 = vmatmul.mubr.f32.gmra.mxu0 %v2384
        %v2586 = vpop.f32.mrf.mxu0
        %v2587 = vadd.f32 0.0, %v2586
        %v2588 = vpop.f32.mrf.mxu0
        %2589 = vmatprep.mubr.f32.mxu0 0.0
        %2590 = vmatmul.mubr.f32.gmra.mxu0 %v2387
        %v2591 = vpop.f32.mrf.mxu0
        %v2592 = vadd.f32 0.0, %v2591
        %v2593 = vpop.f32.mrf.mxu0
        %2594 = vmatprep.mubr.f32.mxu0 0.0
        %2595 = vmatmul.mubr.f32.gmra.mxu0 %v2390
        %v2596 = vpop.f32.mrf.mxu0
        %v2597 = vadd.f32 0.0, %v2596
        %v2598 = vpop.f32.mrf.mxu0
        %2599 = vmatprep.mubr.f32.mxu0 0.0
        %2600 = vmatmul.mubr.f32.gmra.mxu0 %v2393
        %v2601 = vpop.f32.mrf.mxu0
        %v2602 = vadd.f32 0.0, %v2601
        %v2603 = vpop.f32.mrf.mxu0
        %2604 = vmatprep.mubr.f32.mxu0 0.0
        %2605 = vmatmul.mubr.f32.gmra.mxu0 %v2396
        %v2606 = vpop.f32.mrf.mxu0
        %v2607 = vadd.f32 0.0, %v2606
        %v2608 = vpop.f32.mrf.mxu0
        %2609 = vmatprep.mubr.f32.mxu0 0.0
        %2610 = vmatmul.mubr.f32.gmra.mxu0 %v2399
        %v2611 = vpop.f32.mrf.mxu0
        %v2612 = vadd.f32 0.0, %v2611
        %v2613 = vpop.f32.mrf.mxu0
        %2614 = vmatprep.mubr.f32.mxu0 0.0
        %2615 = vmatmul.mubr.f32.gmra.mxu0 %v2402
        %v2616 = vpop.f32.mrf.mxu0
        %v2617 = vadd.f32 0.0, %v2616
        %v2618 = vpop.f32.mrf.mxu0
        %2619 = vmatprep.mubr.f32.mxu0 0.0
        %2620 = vmatmul.mubr.f32.gmra.mxu0 %v2405
        %v2621 = vpop.f32.mrf.mxu0
        %v2622 = vadd.f32 0.0, %v2621
        %v2623 = vpop.f32.mrf.mxu0
        %2624 = vmatprep.mubr.f32.mxu0 0.0
        %2625 = vmatmul.mubr.f32.gmra.mxu0 %v2408
        %v2626 = vpop.f32.mrf.mxu0
        %v2627 = vadd.f32 0.0, %v2626
        %v2628 = vpop.f32.mrf.mxu0
        %2629 = vmatprep.mubr.f32.mxu0 0.0
        %2630 = vmatmul.mubr.f32.gmra.mxu0 %v2411
        %v2631 = vpop.f32.mrf.mxu0
        %v2632 = vadd.f32 0.0, %v2631
        %v2633 = vpop.f32.mrf.mxu0
        %2634 = vmatprep.mubr.f32.mxu0 0.0
        %2635 = vmatmul.mubr.f32.gmra.mxu0 %v2414
        %v2636 = vpop.f32.mrf.mxu0
        %v2637 = vadd.f32 0.0, %v2636
        %v2638 = vpop.f32.mrf.mxu0
        %2639 = vmatprep.mubr.f32.mxu0 0.0
        %2640 = vmatmul.mubr.f32.gmra.mxu0 %v2417
        %v2641 = vpop.f32.mrf.mxu0
        %v2642 = vadd.f32 0.0, %v2641
        %v2643 = vpop.f32.mrf.mxu0
        %2644 = vmatprep.mubr.f32.mxu0 0.0
        %2645 = vmatmul.mubr.f32.gmra.mxu0 %v2420
        %v2646 = vpop.f32.mrf.mxu0
        %v2647 = vadd.f32 0.0, %v2646
        %v2648 = vpop.f32.mrf.mxu0
        %2649 = vdwg.mxu0
        %v2650 = vadd.f32 %v2260, %v2492
        %v2651 = vadd.f32 %v2261, %v2497
        %v2652 = vadd.f32 %v2262, %v2502
        %v2653 = vadd.f32 %v2263, %v2507
        %v2654 = vadd.f32 %v2264, %v2512
        %v2655 = vadd.f32 %v2265, %v2517
        %v2656 = vadd.f32 %v2266, %v2522
        %v2657 = vadd.f32 %v2267, %v2527
        %v2658 = vadd.f32 %v2268, %v2532
        %v2659 = vadd.f32 %v2269, %v2537
        %v2660 = vadd.f32 %v2270, %v2542
        %v2661 = vadd.f32 %v2271, %v2547
        %v2662 = vadd.f32 %v2272, %v2552
        %v2663 = vadd.f32 %v2273, %v2557
        %v2664 = vadd.f32 %v2274, %v2562
        %v2665 = vadd.f32 %v2275, %v2567
        %v2666 = vadd.f32 %v2276, %v2572
        %v2667 = vadd.f32 %v2277, %v2577
        %v2668 = vadd.f32 %v2278, %v2582
        %v2669 = vadd.f32 %v2279, %v2587
        %v2670 = vadd.f32 %v2280, %v2592
        %v2671 = vadd.f32 %v2281, %v2597
        %v2672 = vadd.f32 %v2282, %v2602
        %v2673 = vadd.f32 %v2283, %v2607
        %v2674 = vadd.f32 %v2284, %v2612
        %v2675 = vadd.f32 %v2285, %v2617
        %v2676 = vadd.f32 %v2286, %v2622
        %v2677 = vadd.f32 %v2287, %v2627
        %v2678 = vadd.f32 %v2288, %v2632
        %v2679 = vadd.f32 %v2289, %v2637
        %v2680 = vadd.f32 %v2290, %v2642
        %v2681 = vadd.f32 %v2291, %v2647
        %v2682 = vld [vmem:[%s763 + $0x2] sm:$0xff]
        %v2683 = vld [vmem:[%s763 + $0xa] sm:$0xff]
        %v2684 = vld [vmem:[%s763 + $0x1a] sm:$0xff]
        %v2685 = vld [vmem:[%s763 + $0x22] sm:$0xff]
        %v2686 = vld [vmem:[%s763 + $0x32] sm:$0xff]
        %v2687 = vld [vmem:[%s763 + $0x3a] sm:$0xff]
        %v2688 = vld [vmem:[%s763 + $0x4a] sm:$0xff]
        %v2689 = vld [vmem:[%s763 + $0x52] sm:$0xff]
        %v2690 = vld [vmem:[%s763 + $0x62] sm:$0xff]
        %v2691 = vld [vmem:[%s763 + $0x6a] sm:$0xff]
        %v2692 = vld [vmem:[%s763 + $0x7a] sm:$0xff]
        %v2693 = vld [vmem:[%s763 + $0x82] sm:$0xff]
        %v2694 = vld [vmem:[%s763 + $0x92] sm:$0xff]
        %v2695 = vld [vmem:[%s763 + $0x9a] sm:$0xff]
        %v2696 = vld [vmem:[%s763 + $0xaa] sm:$0xff]
        %v2697 = vld [vmem:[%s763 + $0xb2] sm:$0xff]
        %v2698 = vld [vmem:[%s763 + $0xc2] sm:$0xff]
        %v2699 = vld [vmem:[%s763 + $0xca] sm:$0xff]
        %v2700 = vld [vmem:[%s763 + $0xda] sm:$0xff]
        %v2701 = vld [vmem:[%s763 + $0xe2] sm:$0xff]
        %v2702 = vld [vmem:[%s763 + $0xf2] sm:$0xff]
        %v2703 = vld [vmem:[%s763 + $0xfa] sm:$0xff]
        %v2704 = vld [vmem:[%s763 + $0x10a] sm:$0xff]
        %v2705 = vld [vmem:[%s763 + $0x112] sm:$0xff]
        %v2706 = vld [vmem:[%s763 + $0x122] sm:$0xff]
        %v2707 = vld [vmem:[%s763 + $0x12a] sm:$0xff]
        %v2708 = vld [vmem:[%s763 + $0x13a] sm:$0xff]
        %v2709 = vld [vmem:[%s763 + $0x142] sm:$0xff]
        %v2710 = vld [vmem:[%s763 + $0x152] sm:$0xff]
        %v2711 = vld [vmem:[%s763 + $0x15a] sm:$0xff]
        %v2712 = vld [vmem:[%s763 + $0x16a] sm:$0xff]
        %v2713 = vld [vmem:[%s763 + $0x172] sm:$0xff]
        %s2714 = scalar_lea.vmem [#allocation6], 20
        %v2715 = vld [vmem:[%s2714] sm:$0xf]
        %v2717 = vsel %vm707, %v2682, 0
        %v2720 = vsel %vm707, %v2683, 0
        %v2723 = vsel %vm707, %v2684, 0
        %v2726 = vsel %vm707, %v2685, 0
        %v2729 = vsel %vm707, %v2686, 0
        %v2732 = vsel %vm707, %v2687, 0
        %v2735 = vsel %vm707, %v2688, 0
        %v2738 = vsel %vm707, %v2689, 0
        %v2741 = vsel %vm707, %v2690, 0
        %v2744 = vsel %vm707, %v2691, 0
        %v2747 = vsel %vm707, %v2692, 0
        %v2750 = vsel %vm707, %v2693, 0
        %v2753 = vsel %vm707, %v2694, 0
        %v2756 = vsel %vm707, %v2695, 0
        %v2759 = vsel %vm707, %v2696, 0
        %v2762 = vsel %vm707, %v2697, 0
        %v2765 = vsel %vm707, %v2698, 0
        %v2768 = vsel %vm707, %v2699, 0
        %v2771 = vsel %vm707, %v2700, 0
        %v2774 = vsel %vm707, %v2701, 0
        %v2777 = vsel %vm707, %v2702, 0
        %v2780 = vsel %vm707, %v2703, 0
        %v2783 = vsel %vm707, %v2704, 0
        %v2786 = vsel %vm707, %v2705, 0
        %v2789 = vsel %vm707, %v2706, 0
        %v2792 = vsel %vm707, %v2707, 0
        %v2795 = vsel %vm707, %v2708, 0
        %v2798 = vsel %vm707, %v2709, 0
        %v2801 = vsel %vm707, %v2710, 0
        %v2804 = vsel %vm707, %v2711, 0
        %v2807 = vsel %vm707, %v2712, 0
        %v2810 = vsel %vm707, %v2713, 0
        %v2813 = vsel %vm959, %v2715, 0
        %2815 = vmatprep.subr.mxu0 0.0
        %2816 = vmatpush1.msra.mxu0 0.0
        %2817 = vmatprep.subr.mxu0 0.0
        %2818 = vmatpush1.msra.mxu0 0.0
        %2819 = vmatprep.subr.mxu0 0.0
        %2820 = vmatpush1.msra.mxu0 0.0
        %2821 = vmatprep.subr.mxu0 0.0
        %2822 = vmatpush1.msra.mxu0 0.0
        %2823 = vmatprep.subr.mxu0 0.0
        %2824 = vmatpush1.msra.mxu0 0.0
        %2825 = vmatprep.subr.mxu0 0.0
        %2826 = vmatpush1.msra.mxu0 0.0
        %2827 = vmatprep.subr.mxu0 0.0
        %2828 = vmatpush1.msra.mxu0 0.0
        %2829 = vmatprep.subr.mxu0 0.0
        %2830 = vmatpush1.msra.mxu0 0.0
        %2831 = vmatprep.subr.mxu0 0.0
        %2832 = vmatpush1.msra.mxu0 0.0
        %2833 = vmatprep.subr.mxu0 0.0
        %2834 = vmatpush1.msra.mxu0 0.0
        %2835 = vmatprep.subr.mxu0 0.0
        %2836 = vmatpush1.msra.mxu0 0.0
        %2837 = vmatprep.subr.mxu0 0.0
        %2838 = vmatpush1.msra.mxu0 0.0
        %2839 = vmatprep.subr.mxu0 0.0
        %2840 = vmatpush1.msra.mxu0 0.0
        %2841 = vmatprep.subr.mxu0 0.0
        %2842 = vmatpush1.msra.mxu0 0.0
        %2843 = vmatprep.subr.mxu0 0.0
        %2844 = vmatpush1.msra.mxu0 0.0
        %2845 = vmatprep.subr.mxu0 0.0
        %2846 = vmatpush1.msra.mxu0 %v2813
        %2847 = vmatprep.subr.mxu0 0.0
        %2848 = vmatpush2.msra.mxu0 0.0
        %2849 = vmatprep.subr.mxu0 0.0
        %2850 = vmatpush2.msra.mxu0 0.0
        %2851 = vmatprep.subr.mxu0 0.0
        %2852 = vmatpush2.msra.mxu0 0.0
        %2853 = vmatprep.subr.mxu0 0.0
        %2854 = vmatpush2.msra.mxu0 0.0
        %2855 = vmatprep.subr.mxu0 0.0
        %2856 = vmatpush2.msra.mxu0 0.0
        %2857 = vmatprep.subr.mxu0 0.0
        %2858 = vmatpush2.msra.mxu0 0.0
        %2859 = vmatprep.subr.mxu0 0.0
        %2860 = vmatpush2.msra.mxu0 0.0
        %2861 = vmatprep.subr.mxu0 0.0
        %2862 = vmatpush2.msra.mxu0 0.0
        %2863 = vmatprep.subr.mxu0 0.0
        %2864 = vmatpush2.msra.mxu0 0.0
        %2865 = vmatprep.subr.mxu0 0.0
        %2866 = vmatpush2.msra.mxu0 0.0
        %2867 = vmatprep.subr.mxu0 0.0
        %2868 = vmatpush2.msra.mxu0 0.0
        %2869 = vmatprep.subr.mxu0 0.0
        %2870 = vmatpush2.msra.mxu0 0.0
        %2871 = vmatprep.subr.mxu0 0.0
        %2872 = vmatpush2.msra.mxu0 0.0
        %2873 = vmatprep.subr.mxu0 0.0
        %2874 = vmatpush2.msra.mxu0 0.0
        %2875 = vmatprep.subr.mxu0 0.0
        %2876 = vmatpush2.msra.mxu0 0.0
        %2877 = vmatprep.subr.mxu0 0.0
        %2878 = vmatpush2.msra.mxu0 0.0
        %2879 = vmatprep.mubr.f32.mxu0 0.0
        %2880 = vmatmul.mubr.f32.gmra.mxu0 %v2717
        %v2881 = vpop.f32.mrf.mxu0
        %v2882 = vadd.f32 0.0, %v2881
        %v2883 = vpop.f32.mrf.mxu0
        %2884 = vmatprep.mubr.f32.mxu0 0.0
        %2885 = vmatmul.mubr.f32.gmra.mxu0 %v2720
        %v2886 = vpop.f32.mrf.mxu0
        %v2887 = vadd.f32 0.0, %v2886
        %v2888 = vpop.f32.mrf.mxu0
        %2889 = vmatprep.mubr.f32.mxu0 0.0
        %2890 = vmatmul.mubr.f32.gmra.mxu0 %v2723
        %v2891 = vpop.f32.mrf.mxu0
        %v2892 = vadd.f32 0.0, %v2891
        %v2893 = vpop.f32.mrf.mxu0
        %2894 = vmatprep.mubr.f32.mxu0 0.0
        %2895 = vmatmul.mubr.f32.gmra.mxu0 %v2726
        %v2896 = vpop.f32.mrf.mxu0
        %v2897 = vadd.f32 0.0, %v2896
        %v2898 = vpop.f32.mrf.mxu0
        %2899 = vmatprep.mubr.f32.mxu0 0.0
        %2900 = vmatmul.mubr.f32.gmra.mxu0 %v2729
        %v2901 = vpop.f32.mrf.mxu0
        %v2902 = vadd.f32 0.0, %v2901
        %v2903 = vpop.f32.mrf.mxu0
        %2904 = vmatprep.mubr.f32.mxu0 0.0
        %2905 = vmatmul.mubr.f32.gmra.mxu0 %v2732
        %v2906 = vpop.f32.mrf.mxu0
        %v2907 = vadd.f32 0.0, %v2906
        %v2908 = vpop.f32.mrf.mxu0
        %2909 = vmatprep.mubr.f32.mxu0 0.0
        %2910 = vmatmul.mubr.f32.gmra.mxu0 %v2735
        %v2911 = vpop.f32.mrf.mxu0
        %v2912 = vadd.f32 0.0, %v2911
        %v2913 = vpop.f32.mrf.mxu0
        %2914 = vmatprep.mubr.f32.mxu0 0.0
        %2915 = vmatmul.mubr.f32.gmra.mxu0 %v2738
        %v2916 = vpop.f32.mrf.mxu0
        %v2917 = vadd.f32 0.0, %v2916
        %v2918 = vpop.f32.mrf.mxu0
        %2919 = vmatprep.mubr.f32.mxu0 0.0
        %2920 = vmatmul.mubr.f32.gmra.mxu0 %v2741
        %v2921 = vpop.f32.mrf.mxu0
        %v2922 = vadd.f32 0.0, %v2921
        %v2923 = vpop.f32.mrf.mxu0
        %2924 = vmatprep.mubr.f32.mxu0 0.0
        %2925 = vmatmul.mubr.f32.gmra.mxu0 %v2744
        %v2926 = vpop.f32.mrf.mxu0
        %v2927 = vadd.f32 0.0, %v2926
        %v2928 = vpop.f32.mrf.mxu0
        %2929 = vmatprep.mubr.f32.mxu0 0.0
        %2930 = vmatmul.mubr.f32.gmra.mxu0 %v2747
        %v2931 = vpop.f32.mrf.mxu0
        %v2932 = vadd.f32 0.0, %v2931
        %v2933 = vpop.f32.mrf.mxu0
        %2934 = vmatprep.mubr.f32.mxu0 0.0
        %2935 = vmatmul.mubr.f32.gmra.mxu0 %v2750
        %v2936 = vpop.f32.mrf.mxu0
        %v2937 = vadd.f32 0.0, %v2936
        %v2938 = vpop.f32.mrf.mxu0
        %2939 = vmatprep.mubr.f32.mxu0 0.0
        %2940 = vmatmul.mubr.f32.gmra.mxu0 %v2753
        %v2941 = vpop.f32.mrf.mxu0
        %v2942 = vadd.f32 0.0, %v2941
        %v2943 = vpop.f32.mrf.mxu0
        %2944 = vmatprep.mubr.f32.mxu0 0.0
        %2945 = vmatmul.mubr.f32.gmra.mxu0 %v2756
        %v2946 = vpop.f32.mrf.mxu0
        %v2947 = vadd.f32 0.0, %v2946
        %v2948 = vpop.f32.mrf.mxu0
        %2949 = vmatprep.mubr.f32.mxu0 0.0
        %2950 = vmatmul.mubr.f32.gmra.mxu0 %v2759
        %v2951 = vpop.f32.mrf.mxu0
        %v2952 = vadd.f32 0.0, %v2951
        %v2953 = vpop.f32.mrf.mxu0
        %2954 = vmatprep.mubr.f32.mxu0 0.0
        %2955 = vmatmul.mubr.f32.gmra.mxu0 %v2762
        %v2956 = vpop.f32.mrf.mxu0
        %v2957 = vadd.f32 0.0, %v2956
        %v2958 = vpop.f32.mrf.mxu0
        %2959 = vmatprep.mubr.f32.mxu0 0.0
        %2960 = vmatmul.mubr.f32.gmra.mxu0 %v2765
        %v2961 = vpop.f32.mrf.mxu0
        %v2962 = vadd.f32 0.0, %v2961
        %v2963 = vpop.f32.mrf.mxu0
        %2964 = vmatprep.mubr.f32.mxu0 0.0
        %2965 = vmatmul.mubr.f32.gmra.mxu0 %v2768
        %v2966 = vpop.f32.mrf.mxu0
        %v2967 = vadd.f32 0.0, %v2966
        %v2968 = vpop.f32.mrf.mxu0
        %2969 = vmatprep.mubr.f32.mxu0 0.0
        %2970 = vmatmul.mubr.f32.gmra.mxu0 %v2771
        %v2971 = vpop.f32.mrf.mxu0
        %v2972 = vadd.f32 0.0, %v2971
        %v2973 = vpop.f32.mrf.mxu0
        %2974 = vmatprep.mubr.f32.mxu0 0.0
        %2975 = vmatmul.mubr.f32.gmra.mxu0 %v2774
        %v2976 = vpop.f32.mrf.mxu0
        %v2977 = vadd.f32 0.0, %v2976
        %v2978 = vpop.f32.mrf.mxu0
        %2979 = vmatprep.mubr.f32.mxu0 0.0
        %2980 = vmatmul.mubr.f32.gmra.mxu0 %v2777
        %v2981 = vpop.f32.mrf.mxu0
        %v2982 = vadd.f32 0.0, %v2981
        %v2983 = vpop.f32.mrf.mxu0
        %2984 = vmatprep.mubr.f32.mxu0 0.0
        %2985 = vmatmul.mubr.f32.gmra.mxu0 %v2780
        %v2986 = vpop.f32.mrf.mxu0
        %v2987 = vadd.f32 0.0, %v2986
        %v2988 = vpop.f32.mrf.mxu0
        %2989 = vmatprep.mubr.f32.mxu0 0.0
        %2990 = vmatmul.mubr.f32.gmra.mxu0 %v2783
        %v2991 = vpop.f32.mrf.mxu0
        %v2992 = vadd.f32 0.0, %v2991
        %v2993 = vpop.f32.mrf.mxu0
        %2994 = vmatprep.mubr.f32.mxu0 0.0
        %2995 = vmatmul.mubr.f32.gmra.mxu0 %v2786
        %v2996 = vpop.f32.mrf.mxu0
        %v2997 = vadd.f32 0.0, %v2996
        %v2998 = vpop.f32.mrf.mxu0
        %2999 = vmatprep.mubr.f32.mxu0 0.0
        %3000 = vmatmul.mubr.f32.gmra.mxu0 %v2789
        %v3001 = vpop.f32.mrf.mxu0
        %v3002 = vadd.f32 0.0, %v3001
        %v3003 = vpop.f32.mrf.mxu0
        %3004 = vmatprep.mubr.f32.mxu0 0.0
        %3005 = vmatmul.mubr.f32.gmra.mxu0 %v2792
        %v3006 = vpop.f32.mrf.mxu0
        %v3007 = vadd.f32 0.0, %v3006
        %v3008 = vpop.f32.mrf.mxu0
        %3009 = vmatprep.mubr.f32.mxu0 0.0
        %3010 = vmatmul.mubr.f32.gmra.mxu0 %v2795
        %v3011 = vpop.f32.mrf.mxu0
        %v3012 = vadd.f32 0.0, %v3011
        %v3013 = vpop.f32.mrf.mxu0
        %3014 = vmatprep.mubr.f32.mxu0 0.0
        %3015 = vmatmul.mubr.f32.gmra.mxu0 %v2798
        %v3016 = vpop.f32.mrf.mxu0
        %v3017 = vadd.f32 0.0, %v3016
        %v3018 = vpop.f32.mrf.mxu0
        %3019 = vmatprep.mubr.f32.mxu0 0.0
        %3020 = vmatmul.mubr.f32.gmra.mxu0 %v2801
        %v3021 = vpop.f32.mrf.mxu0
        %v3022 = vadd.f32 0.0, %v3021
        %v3023 = vpop.f32.mrf.mxu0
        %3024 = vmatprep.mubr.f32.mxu0 0.0
        %3025 = vmatmul.mubr.f32.gmra.mxu0 %v2804
        %v3026 = vpop.f32.mrf.mxu0
        %v3027 = vadd.f32 0.0, %v3026
        %v3028 = vpop.f32.mrf.mxu0
        %3029 = vmatprep.mubr.f32.mxu0 0.0
        %3030 = vmatmul.mubr.f32.gmra.mxu0 %v2807
        %v3031 = vpop.f32.mrf.mxu0
        %v3032 = vadd.f32 0.0, %v3031
        %v3033 = vpop.f32.mrf.mxu0
        %3034 = vmatprep.mubr.f32.mxu0 0.0
        %3035 = vmatmul.mubr.f32.gmra.mxu0 %v2810
        %v3036 = vpop.f32.mrf.mxu0
        %v3037 = vadd.f32 0.0, %v3036
        %v3038 = vpop.f32.mrf.mxu0
        %3039 = vdwg.mxu0
        %v3040 = vadd.f32 %v2650, %v2882
        %v3041 = vadd.f32 %v2651, %v2887
        %v3042 = vadd.f32 %v2652, %v2892
        %v3043 = vadd.f32 %v2653, %v2897
        %v3044 = vadd.f32 %v2654, %v2902
        %v3045 = vadd.f32 %v2655, %v2907
        %v3046 = vadd.f32 %v2656, %v2912
        %v3047 = vadd.f32 %v2657, %v2917
        %v3048 = vadd.f32 %v2658, %v2922
        %v3049 = vadd.f32 %v2659, %v2927
        %v3050 = vadd.f32 %v2660, %v2932
        %v3051 = vadd.f32 %v2661, %v2937
        %v3052 = vadd.f32 %v2662, %v2942
        %v3053 = vadd.f32 %v2663, %v2947
        %v3054 = vadd.f32 %v2664, %v2952
        %v3055 = vadd.f32 %v2665, %v2957
        %v3056 = vadd.f32 %v2666, %v2962
        %v3057 = vadd.f32 %v2667, %v2967
        %v3058 = vadd.f32 %v2668, %v2972
        %v3059 = vadd.f32 %v2669, %v2977
        %v3060 = vadd.f32 %v2670, %v2982
        %v3061 = vadd.f32 %v2671, %v2987
        %v3062 = vadd.f32 %v2672, %v2992
        %v3063 = vadd.f32 %v2673, %v2997
        %v3064 = vadd.f32 %v2674, %v3002
        %v3065 = vadd.f32 %v2675, %v3007
        %v3066 = vadd.f32 %v2676, %v3012
        %v3067 = vadd.f32 %v2677, %v3017
        %v3068 = vadd.f32 %v2678, %v3022
        %v3069 = vadd.f32 %v2679, %v3027
        %v3070 = vadd.f32 %v2680, %v3032
        %v3071 = vadd.f32 %v2681, %v3037
        %s3072 = scalar_lea.vmem [#allocation2], 48
        %v3073 = vld [vmem:[%s3072] sm:$0xff]
        %v3074 = vld [vmem:[%s3072 + $0x8] sm:$0xff]
        %v3075 = vld [vmem:[%s3072 + $0x18] sm:$0xff]
        %v3076 = vld [vmem:[%s3072 + $0x20] sm:$0xff]
        %v3077 = vld [vmem:[%s3072 + $0x30] sm:$0xff]
        %v3078 = vld [vmem:[%s3072 + $0x38] sm:$0xff]
        %v3079 = vld [vmem:[%s3072 + $0x48] sm:$0xff]
        %v3080 = vld [vmem:[%s3072 + $0x50] sm:$0xff]
        %v3081 = vld [vmem:[%s3072 + $0x60] sm:$0xff]
        %v3082 = vld [vmem:[%s3072 + $0x68] sm:$0xff]
        %v3083 = vld [vmem:[%s3072 + $0x78] sm:$0xff]
        %v3084 = vld [vmem:[%s3072 + $0x80] sm:$0xff]
        %v3085 = vld [vmem:[%s3072 + $0x90] sm:$0xff]
        %v3086 = vld [vmem:[%s3072 + $0x98] sm:$0xff]
        %v3087 = vld [vmem:[%s3072 + $0xa8] sm:$0xff]
        %v3088 = vld [vmem:[%s3072 + $0xb0] sm:$0xff]
        %v3089 = vld [vmem:[%s3072 + $0xc0] sm:$0xff]
        %v3090 = vld [vmem:[%s3072 + $0xc8] sm:$0xff]
        %v3091 = vld [vmem:[%s3072 + $0xd8] sm:$0xff]
        %v3092 = vld [vmem:[%s3072 + $0xe0] sm:$0xff]
        %v3093 = vld [vmem:[%s3072 + $0xf0] sm:$0xff]
        %v3094 = vld [vmem:[%s3072 + $0xf8] sm:$0xff]
        %v3095 = vld [vmem:[%s3072 + $0x108] sm:$0xff]
        %v3096 = vld [vmem:[%s3072 + $0x110] sm:$0xff]
        %v3097 = vld [vmem:[%s3072 + $0x120] sm:$0xff]
        %v3098 = vld [vmem:[%s3072 + $0x128] sm:$0xff]
        %v3099 = vld [vmem:[%s3072 + $0x138] sm:$0xff]
        %v3100 = vld [vmem:[%s3072 + $0x140] sm:$0xff]
        %v3101 = vld [vmem:[%s3072 + $0x150] sm:$0xff]
        %v3102 = vld [vmem:[%s3072 + $0x158] sm:$0xff]
        %v3103 = vld [vmem:[%s3072 + $0x168] sm:$0xff]
        %v3104 = vld [vmem:[%s3072 + $0x170] sm:$0xff]
        %s3105 = scalar_lea.vmem [#allocation6], 24
        %v3106 = vld [vmem:[%s3105] sm:$0xf]
        %v3108 = vsel %vm707, %v3073, 0
        %v3111 = vsel %vm707, %v3074, 0
        %v3114 = vsel %vm707, %v3075, 0
        %v3117 = vsel %vm707, %v3076, 0
        %v3120 = vsel %vm707, %v3077, 0
        %v3123 = vsel %vm707, %v3078, 0
        %v3126 = vsel %vm707, %v3079, 0
        %v3129 = vsel %vm707, %v3080, 0
        %v3132 = vsel %vm707, %v3081, 0
        %v3135 = vsel %vm707, %v3082, 0
        %v3138 = vsel %vm707, %v3083, 0
        %v3141 = vsel %vm707, %v3084, 0
        %v3144 = vsel %vm707, %v3085, 0
        %v3147 = vsel %vm707, %v3086, 0
        %v3150 = vsel %vm707, %v3087, 0
        %v3153 = vsel %vm707, %v3088, 0
        %v3156 = vsel %vm707, %v3089, 0
        %v3159 = vsel %vm707, %v3090, 0
        %v3162 = vsel %vm707, %v3091, 0
        %v3165 = vsel %vm707, %v3092, 0
        %v3168 = vsel %vm707, %v3093, 0
        %v3171 = vsel %vm707, %v3094, 0
        %v3174 = vsel %vm707, %v3095, 0
        %v3177 = vsel %vm707, %v3096, 0
        %v3180 = vsel %vm707, %v3097, 0
        %v3183 = vsel %vm707, %v3098, 0
        %v3186 = vsel %vm707, %v3099, 0
        %v3189 = vsel %vm707, %v3100, 0
        %v3192 = vsel %vm707, %v3101, 0
        %v3195 = vsel %vm707, %v3102, 0
        %v3198 = vsel %vm707, %v3103, 0
        %v3201 = vsel %vm707, %v3104, 0
        %v3204 = vsel %vm959, %v3106, 0
        %3206 = vmatprep.subr.mxu0 0.0
        %3207 = vmatpush1.msra.mxu0 0.0
        %3208 = vmatprep.subr.mxu0 0.0
        %3209 = vmatpush1.msra.mxu0 0.0
        %3210 = vmatprep.subr.mxu0 0.0
        %3211 = vmatpush1.msra.mxu0 0.0
        %3212 = vmatprep.subr.mxu0 0.0
        %3213 = vmatpush1.msra.mxu0 0.0
        %3214 = vmatprep.subr.mxu0 0.0
        %3215 = vmatpush1.msra.mxu0 0.0
        %3216 = vmatprep.subr.mxu0 0.0
        %3217 = vmatpush1.msra.mxu0 0.0
        %3218 = vmatprep.subr.mxu0 0.0
        %3219 = vmatpush1.msra.mxu0 0.0
        %3220 = vmatprep.subr.mxu0 0.0
        %3221 = vmatpush1.msra.mxu0 0.0
        %3222 = vmatprep.subr.mxu0 0.0
        %3223 = vmatpush1.msra.mxu0 0.0
        %3224 = vmatprep.subr.mxu0 0.0
        %3225 = vmatpush1.msra.mxu0 0.0
        %3226 = vmatprep.subr.mxu0 0.0
        %3227 = vmatpush1.msra.mxu0 0.0
        %3228 = vmatprep.subr.mxu0 0.0
        %3229 = vmatpush1.msra.mxu0 0.0
        %3230 = vmatprep.subr.mxu0 0.0
        %3231 = vmatpush1.msra.mxu0 0.0
        %3232 = vmatprep.subr.mxu0 0.0
        %3233 = vmatpush1.msra.mxu0 0.0
        %3234 = vmatprep.subr.mxu0 0.0
        %3235 = vmatpush1.msra.mxu0 0.0
        %3236 = vmatprep.subr.mxu0 0.0
        %3237 = vmatpush1.msra.mxu0 %v3204
        %3238 = vmatprep.subr.mxu0 0.0
        %3239 = vmatpush2.msra.mxu0 0.0
        %3240 = vmatprep.subr.mxu0 0.0
        %3241 = vmatpush2.msra.mxu0 0.0
        %3242 = vmatprep.subr.mxu0 0.0
        %3243 = vmatpush2.msra.mxu0 0.0
        %3244 = vmatprep.subr.mxu0 0.0
        %3245 = vmatpush2.msra.mxu0 0.0
        %3246 = vmatprep.subr.mxu0 0.0
        %3247 = vmatpush2.msra.mxu0 0.0
        %3248 = vmatprep.subr.mxu0 0.0
        %3249 = vmatpush2.msra.mxu0 0.0
        %3250 = vmatprep.subr.mxu0 0.0
        %3251 = vmatpush2.msra.mxu0 0.0
        %3252 = vmatprep.subr.mxu0 0.0
        %3253 = vmatpush2.msra.mxu0 0.0
        %3254 = vmatprep.subr.mxu0 0.0
        %3255 = vmatpush2.msra.mxu0 0.0
        %3256 = vmatprep.subr.mxu0 0.0
        %3257 = vmatpush2.msra.mxu0 0.0
        %3258 = vmatprep.subr.mxu0 0.0
        %3259 = vmatpush2.msra.mxu0 0.0
        %3260 = vmatprep.subr.mxu0 0.0
        %3261 = vmatpush2.msra.mxu0 0.0
        %3262 = vmatprep.subr.mxu0 0.0
        %3263 = vmatpush2.msra.mxu0 0.0
        %3264 = vmatprep.subr.mxu0 0.0
        %3265 = vmatpush2.msra.mxu0 0.0
        %3266 = vmatprep.subr.mxu0 0.0
        %3267 = vmatpush2.msra.mxu0 0.0
        %3268 = vmatprep.subr.mxu0 0.0
        %3269 = vmatpush2.msra.mxu0 0.0
        %3270 = vmatprep.mubr.f32.mxu0 0.0
        %3271 = vmatmul.mubr.f32.gmra.mxu0 %v3108
        %v3272 = vpop.f32.mrf.mxu0
        %v3273 = vadd.f32 0.0, %v3272
        %v3274 = vpop.f32.mrf.mxu0
        %3275 = vmatprep.mubr.f32.mxu0 0.0
        %3276 = vmatmul.mubr.f32.gmra.mxu0 %v3111
        %v3277 = vpop.f32.mrf.mxu0
        %v3278 = vadd.f32 0.0, %v3277
        %v3279 = vpop.f32.mrf.mxu0
        %3280 = vmatprep.mubr.f32.mxu0 0.0
        %3281 = vmatmul.mubr.f32.gmra.mxu0 %v3114
        %v3282 = vpop.f32.mrf.mxu0
        %v3283 = vadd.f32 0.0, %v3282
        %v3284 = vpop.f32.mrf.mxu0
        %3285 = vmatprep.mubr.f32.mxu0 0.0
        %3286 = vmatmul.mubr.f32.gmra.mxu0 %v3117
        %v3287 = vpop.f32.mrf.mxu0
        %v3288 = vadd.f32 0.0, %v3287
        %v3289 = vpop.f32.mrf.mxu0
        %3290 = vmatprep.mubr.f32.mxu0 0.0
        %3291 = vmatmul.mubr.f32.gmra.mxu0 %v3120
        %v3292 = vpop.f32.mrf.mxu0
        %v3293 = vadd.f32 0.0, %v3292
        %v3294 = vpop.f32.mrf.mxu0
        %3295 = vmatprep.mubr.f32.mxu0 0.0
        %3296 = vmatmul.mubr.f32.gmra.mxu0 %v3123
        %v3297 = vpop.f32.mrf.mxu0
        %v3298 = vadd.f32 0.0, %v3297
        %v3299 = vpop.f32.mrf.mxu0
        %3300 = vmatprep.mubr.f32.mxu0 0.0
        %3301 = vmatmul.mubr.f32.gmra.mxu0 %v3126
        %v3302 = vpop.f32.mrf.mxu0
        %v3303 = vadd.f32 0.0, %v3302
        %v3304 = vpop.f32.mrf.mxu0
        %3305 = vmatprep.mubr.f32.mxu0 0.0
        %3306 = vmatmul.mubr.f32.gmra.mxu0 %v3129
        %v3307 = vpop.f32.mrf.mxu0
        %v3308 = vadd.f32 0.0, %v3307
        %v3309 = vpop.f32.mrf.mxu0
        %3310 = vmatprep.mubr.f32.mxu0 0.0
        %3311 = vmatmul.mubr.f32.gmra.mxu0 %v3132
        %v3312 = vpop.f32.mrf.mxu0
        %v3313 = vadd.f32 0.0, %v3312
        %v3314 = vpop.f32.mrf.mxu0
        %3315 = vmatprep.mubr.f32.mxu0 0.0
        %3316 = vmatmul.mubr.f32.gmra.mxu0 %v3135
        %v3317 = vpop.f32.mrf.mxu0
        %v3318 = vadd.f32 0.0, %v3317
        %v3319 = vpop.f32.mrf.mxu0
        %3320 = vmatprep.mubr.f32.mxu0 0.0
        %3321 = vmatmul.mubr.f32.gmra.mxu0 %v3138
        %v3322 = vpop.f32.mrf.mxu0
        %v3323 = vadd.f32 0.0, %v3322
        %v3324 = vpop.f32.mrf.mxu0
        %3325 = vmatprep.mubr.f32.mxu0 0.0
        %3326 = vmatmul.mubr.f32.gmra.mxu0 %v3141
        %v3327 = vpop.f32.mrf.mxu0
        %v3328 = vadd.f32 0.0, %v3327
        %v3329 = vpop.f32.mrf.mxu0
        %3330 = vmatprep.mubr.f32.mxu0 0.0
        %3331 = vmatmul.mubr.f32.gmra.mxu0 %v3144
        %v3332 = vpop.f32.mrf.mxu0
        %v3333 = vadd.f32 0.0, %v3332
        %v3334 = vpop.f32.mrf.mxu0
        %3335 = vmatprep.mubr.f32.mxu0 0.0
        %3336 = vmatmul.mubr.f32.gmra.mxu0 %v3147
        %v3337 = vpop.f32.mrf.mxu0
        %v3338 = vadd.f32 0.0, %v3337
        %v3339 = vpop.f32.mrf.mxu0
        %3340 = vmatprep.mubr.f32.mxu0 0.0
        %3341 = vmatmul.mubr.f32.gmra.mxu0 %v3150
        %v3342 = vpop.f32.mrf.mxu0
        %v3343 = vadd.f32 0.0, %v3342
        %v3344 = vpop.f32.mrf.mxu0
        %3345 = vmatprep.mubr.f32.mxu0 0.0
        %3346 = vmatmul.mubr.f32.gmra.mxu0 %v3153
        %v3347 = vpop.f32.mrf.mxu0
        %v3348 = vadd.f32 0.0, %v3347
        %v3349 = vpop.f32.mrf.mxu0
        %3350 = vmatprep.mubr.f32.mxu0 0.0
        %3351 = vmatmul.mubr.f32.gmra.mxu0 %v3156
        %v3352 = vpop.f32.mrf.mxu0
        %v3353 = vadd.f32 0.0, %v3352
        %v3354 = vpop.f32.mrf.mxu0
        %3355 = vmatprep.mubr.f32.mxu0 0.0
        %3356 = vmatmul.mubr.f32.gmra.mxu0 %v3159
        %v3357 = vpop.f32.mrf.mxu0
        %v3358 = vadd.f32 0.0, %v3357
        %v3359 = vpop.f32.mrf.mxu0
        %3360 = vmatprep.mubr.f32.mxu0 0.0
        %3361 = vmatmul.mubr.f32.gmra.mxu0 %v3162
        %v3362 = vpop.f32.mrf.mxu0
        %v3363 = vadd.f32 0.0, %v3362
        %v3364 = vpop.f32.mrf.mxu0
        %3365 = vmatprep.mubr.f32.mxu0 0.0
        %3366 = vmatmul.mubr.f32.gmra.mxu0 %v3165
        %v3367 = vpop.f32.mrf.mxu0
        %v3368 = vadd.f32 0.0, %v3367
        %v3369 = vpop.f32.mrf.mxu0
        %3370 = vmatprep.mubr.f32.mxu0 0.0
        %3371 = vmatmul.mubr.f32.gmra.mxu0 %v3168
        %v3372 = vpop.f32.mrf.mxu0
        %v3373 = vadd.f32 0.0, %v3372
        %v3374 = vpop.f32.mrf.mxu0
        %3375 = vmatprep.mubr.f32.mxu0 0.0
        %3376 = vmatmul.mubr.f32.gmra.mxu0 %v3171
        %v3377 = vpop.f32.mrf.mxu0
        %v3378 = vadd.f32 0.0, %v3377
        %v3379 = vpop.f32.mrf.mxu0
        %3380 = vmatprep.mubr.f32.mxu0 0.0
        %3381 = vmatmul.mubr.f32.gmra.mxu0 %v3174
        %v3382 = vpop.f32.mrf.mxu0
        %v3383 = vadd.f32 0.0, %v3382
        %v3384 = vpop.f32.mrf.mxu0
        %3385 = vmatprep.mubr.f32.mxu0 0.0
        %3386 = vmatmul.mubr.f32.gmra.mxu0 %v3177
        %v3387 = vpop.f32.mrf.mxu0
        %v3388 = vadd.f32 0.0, %v3387
        %v3389 = vpop.f32.mrf.mxu0
        %3390 = vmatprep.mubr.f32.mxu0 0.0
        %3391 = vmatmul.mubr.f32.gmra.mxu0 %v3180
        %v3392 = vpop.f32.mrf.mxu0
        %v3393 = vadd.f32 0.0, %v3392
        %v3394 = vpop.f32.mrf.mxu0
        %3395 = vmatprep.mubr.f32.mxu0 0.0
        %3396 = vmatmul.mubr.f32.gmra.mxu0 %v3183
        %v3397 = vpop.f32.mrf.mxu0
        %v3398 = vadd.f32 0.0, %v3397
        %v3399 = vpop.f32.mrf.mxu0
        %3400 = vmatprep.mubr.f32.mxu0 0.0
        %3401 = vmatmul.mubr.f32.gmra.mxu0 %v3186
        %v3402 = vpop.f32.mrf.mxu0
        %v3403 = vadd.f32 0.0, %v3402
        %v3404 = vpop.f32.mrf.mxu0
        %3405 = vmatprep.mubr.f32.mxu0 0.0
        %3406 = vmatmul.mubr.f32.gmra.mxu0 %v3189
        %v3407 = vpop.f32.mrf.mxu0
        %v3408 = vadd.f32 0.0, %v3407
        %v3409 = vpop.f32.mrf.mxu0
        %3410 = vmatprep.mubr.f32.mxu0 0.0
        %3411 = vmatmul.mubr.f32.gmra.mxu0 %v3192
        %v3412 = vpop.f32.mrf.mxu0
        %v3413 = vadd.f32 0.0, %v3412
        %v3414 = vpop.f32.mrf.mxu0
        %3415 = vmatprep.mubr.f32.mxu0 0.0
        %3416 = vmatmul.mubr.f32.gmra.mxu0 %v3195
        %v3417 = vpop.f32.mrf.mxu0
        %v3418 = vadd.f32 0.0, %v3417
        %v3419 = vpop.f32.mrf.mxu0
        %3420 = vmatprep.mubr.f32.mxu0 0.0
        %3421 = vmatmul.mubr.f32.gmra.mxu0 %v3198
        %v3422 = vpop.f32.mrf.mxu0
        %v3423 = vadd.f32 0.0, %v3422
        %v3424 = vpop.f32.mrf.mxu0
        %3425 = vmatprep.mubr.f32.mxu0 0.0
        %3426 = vmatmul.mubr.f32.gmra.mxu0 %v3201
        %v3427 = vpop.f32.mrf.mxu0
        %v3428 = vadd.f32 0.0, %v3427
        %v3429 = vpop.f32.mrf.mxu0
        %3430 = vdwg.mxu0
        %v3431 = vadd.f32 %v3040, %v3273
        %v3432 = vadd.f32 %v3041, %v3278
        %v3433 = vadd.f32 %v3042, %v3283
        %v3434 = vadd.f32 %v3043, %v3288
        %v3435 = vadd.f32 %v3044, %v3293
        %v3436 = vadd.f32 %v3045, %v3298
        %v3437 = vadd.f32 %v3046, %v3303
        %v3438 = vadd.f32 %v3047, %v3308
        %v3439 = vadd.f32 %v3048, %v3313
        %v3440 = vadd.f32 %v3049, %v3318
        %v3441 = vadd.f32 %v3050, %v3323
        %v3442 = vadd.f32 %v3051, %v3328
        %v3443 = vadd.f32 %v3052, %v3333
        %v3444 = vadd.f32 %v3053, %v3338
        %v3445 = vadd.f32 %v3054, %v3343
        %v3446 = vadd.f32 %v3055, %v3348
        %v3447 = vadd.f32 %v3056, %v3353
        %v3448 = vadd.f32 %v3057, %v3358
        %v3449 = vadd.f32 %v3058, %v3363
        %v3450 = vadd.f32 %v3059, %v3368
        %v3451 = vadd.f32 %v3060, %v3373
        %v3452 = vadd.f32 %v3061, %v3378
        %v3453 = vadd.f32 %v3062, %v3383
        %v3454 = vadd.f32 %v3063, %v3388
        %v3455 = vadd.f32 %v3064, %v3393
        %v3456 = vadd.f32 %v3065, %v3398
        %v3457 = vadd.f32 %v3066, %v3403
        %v3458 = vadd.f32 %v3067, %v3408
        %v3459 = vadd.f32 %v3068, %v3413
        %v3460 = vadd.f32 %v3069, %v3418
        %v3461 = vadd.f32 %v3070, %v3423
        %v3462 = vadd.f32 %v3071, %v3428
        %v3463 = vld [vmem:[%s3072 + $0x1] sm:$0xff]
        %v3464 = vld [vmem:[%s3072 + $0x9] sm:$0xff]
        %v3465 = vld [vmem:[%s3072 + $0x19] sm:$0xff]
        %v3466 = vld [vmem:[%s3072 + $0x21] sm:$0xff]
        %v3467 = vld [vmem:[%s3072 + $0x31] sm:$0xff]
        %v3468 = vld [vmem:[%s3072 + $0x39] sm:$0xff]
        %v3469 = vld [vmem:[%s3072 + $0x49] sm:$0xff]
        %v3470 = vld [vmem:[%s3072 + $0x51] sm:$0xff]
        %v3471 = vld [vmem:[%s3072 + $0x61] sm:$0xff]
        %v3472 = vld [vmem:[%s3072 + $0x69] sm:$0xff]
        %v3473 = vld [vmem:[%s3072 + $0x79] sm:$0xff]
        %v3474 = vld [vmem:[%s3072 + $0x81] sm:$0xff]
        %v3475 = vld [vmem:[%s3072 + $0x91] sm:$0xff]
        %v3476 = vld [vmem:[%s3072 + $0x99] sm:$0xff]
        %v3477 = vld [vmem:[%s3072 + $0xa9] sm:$0xff]
        %v3478 = vld [vmem:[%s3072 + $0xb1] sm:$0xff]
        %v3479 = vld [vmem:[%s3072 + $0xc1] sm:$0xff]
        %v3480 = vld [vmem:[%s3072 + $0xc9] sm:$0xff]
        %v3481 = vld [vmem:[%s3072 + $0xd9] sm:$0xff]
        %v3482 = vld [vmem:[%s3072 + $0xe1] sm:$0xff]
        %v3483 = vld [vmem:[%s3072 + $0xf1] sm:$0xff]
        %v3484 = vld [vmem:[%s3072 + $0xf9] sm:$0xff]
        %v3485 = vld [vmem:[%s3072 + $0x109] sm:$0xff]
        %v3486 = vld [vmem:[%s3072 + $0x111] sm:$0xff]
        %v3487 = vld [vmem:[%s3072 + $0x121] sm:$0xff]
        %v3488 = vld [vmem:[%s3072 + $0x129] sm:$0xff]
        %v3489 = vld [vmem:[%s3072 + $0x139] sm:$0xff]
        %v3490 = vld [vmem:[%s3072 + $0x141] sm:$0xff]
        %v3491 = vld [vmem:[%s3072 + $0x151] sm:$0xff]
        %v3492 = vld [vmem:[%s3072 + $0x159] sm:$0xff]
        %v3493 = vld [vmem:[%s3072 + $0x169] sm:$0xff]
        %v3494 = vld [vmem:[%s3072 + $0x171] sm:$0xff]
        %s3495 = scalar_lea.vmem [#allocation6], 28
        %v3496 = vld [vmem:[%s3495] sm:$0xf]
        %v3498 = vsel %vm707, %v3463, 0
        %v3501 = vsel %vm707, %v3464, 0
        %v3504 = vsel %vm707, %v3465, 0
        %v3507 = vsel %vm707, %v3466, 0
        %v3510 = vsel %vm707, %v3467, 0
        %v3513 = vsel %vm707, %v3468, 0
        %v3516 = vsel %vm707, %v3469, 0
        %v3519 = vsel %vm707, %v3470, 0
        %v3522 = vsel %vm707, %v3471, 0
        %v3525 = vsel %vm707, %v3472, 0
        %v3528 = vsel %vm707, %v3473, 0
        %v3531 = vsel %vm707, %v3474, 0
        %v3534 = vsel %vm707, %v3475, 0
        %v3537 = vsel %vm707, %v3476, 0
        %v3540 = vsel %vm707, %v3477, 0
        %v3543 = vsel %vm707, %v3478, 0
        %v3546 = vsel %vm707, %v3479, 0
        %v3549 = vsel %vm707, %v3480, 0
        %v3552 = vsel %vm707, %v3481, 0
        %v3555 = vsel %vm707, %v3482, 0
        %v3558 = vsel %vm707, %v3483, 0
        %v3561 = vsel %vm707, %v3484, 0
        %v3564 = vsel %vm707, %v3485, 0
        %v3567 = vsel %vm707, %v3486, 0
        %v3570 = vsel %vm707, %v3487, 0
        %v3573 = vsel %vm707, %v3488, 0
        %v3576 = vsel %vm707, %v3489, 0
        %v3579 = vsel %vm707, %v3490, 0
        %v3582 = vsel %vm707, %v3491, 0
        %v3585 = vsel %vm707, %v3492, 0
        %v3588 = vsel %vm707, %v3493, 0
        %v3591 = vsel %vm707, %v3494, 0
        %v3594 = vsel %vm959, %v3496, 0
        %3596 = vmatprep.subr.mxu0 0.0
        %3597 = vmatpush1.msra.mxu0 0.0
        %3598 = vmatprep.subr.mxu0 0.0
        %3599 = vmatpush1.msra.mxu0 0.0
        %3600 = vmatprep.subr.mxu0 0.0
        %3601 = vmatpush1.msra.mxu0 0.0
        %3602 = vmatprep.subr.mxu0 0.0
        %3603 = vmatpush1.msra.mxu0 0.0
        %3604 = vmatprep.subr.mxu0 0.0
        %3605 = vmatpush1.msra.mxu0 0.0
        %3606 = vmatprep.subr.mxu0 0.0
        %3607 = vmatpush1.msra.mxu0 0.0
        %3608 = vmatprep.subr.mxu0 0.0
        %3609 = vmatpush1.msra.mxu0 0.0
        %3610 = vmatprep.subr.mxu0 0.0
        %3611 = vmatpush1.msra.mxu0 0.0
        %3612 = vmatprep.subr.mxu0 0.0
        %3613 = vmatpush1.msra.mxu0 0.0
        %3614 = vmatprep.subr.mxu0 0.0
        %3615 = vmatpush1.msra.mxu0 0.0
        %3616 = vmatprep.subr.mxu0 0.0
        %3617 = vmatpush1.msra.mxu0 0.0
        %3618 = vmatprep.subr.mxu0 0.0
        %3619 = vmatpush1.msra.mxu0 0.0
        %3620 = vmatprep.subr.mxu0 0.0
        %3621 = vmatpush1.msra.mxu0 0.0
        %3622 = vmatprep.subr.mxu0 0.0
        %3623 = vmatpush1.msra.mxu0 0.0
        %3624 = vmatprep.subr.mxu0 0.0
        %3625 = vmatpush1.msra.mxu0 0.0
        %3626 = vmatprep.subr.mxu0 0.0
        %3627 = vmatpush1.msra.mxu0 %v3594
        %3628 = vmatprep.subr.mxu0 0.0
        %3629 = vmatpush2.msra.mxu0 0.0
        %3630 = vmatprep.subr.mxu0 0.0
        %3631 = vmatpush2.msra.mxu0 0.0
        %3632 = vmatprep.subr.mxu0 0.0
        %3633 = vmatpush2.msra.mxu0 0.0
        %3634 = vmatprep.subr.mxu0 0.0
        %3635 = vmatpush2.msra.mxu0 0.0
        %3636 = vmatprep.subr.mxu0 0.0
        %3637 = vmatpush2.msra.mxu0 0.0
        %3638 = vmatprep.subr.mxu0 0.0
        %3639 = vmatpush2.msra.mxu0 0.0
        %3640 = vmatprep.subr.mxu0 0.0
        %3641 = vmatpush2.msra.mxu0 0.0
        %3642 = vmatprep.subr.mxu0 0.0
        %3643 = vmatpush2.msra.mxu0 0.0
        %3644 = vmatprep.subr.mxu0 0.0
        %3645 = vmatpush2.msra.mxu0 0.0
        %3646 = vmatprep.subr.mxu0 0.0
        %3647 = vmatpush2.msra.mxu0 0.0
        %3648 = vmatprep.subr.mxu0 0.0
        %3649 = vmatpush2.msra.mxu0 0.0
        %3650 = vmatprep.subr.mxu0 0.0
        %3651 = vmatpush2.msra.mxu0 0.0
        %3652 = vmatprep.subr.mxu0 0.0
        %3653 = vmatpush2.msra.mxu0 0.0
        %3654 = vmatprep.subr.mxu0 0.0
        %3655 = vmatpush2.msra.mxu0 0.0
        %3656 = vmatprep.subr.mxu0 0.0
        %3657 = vmatpush2.msra.mxu0 0.0
        %3658 = vmatprep.subr.mxu0 0.0
        %3659 = vmatpush2.msra.mxu0 0.0
        %3660 = vmatprep.mubr.f32.mxu0 0.0
        %3661 = vmatmul.mubr.f32.gmra.mxu0 %v3498
        %v3662 = vpop.f32.mrf.mxu0
        %v3663 = vadd.f32 0.0, %v3662
        %v3664 = vpop.f32.mrf.mxu0
        %3665 = vmatprep.mubr.f32.mxu0 0.0
        %3666 = vmatmul.mubr.f32.gmra.mxu0 %v3501
        %v3667 = vpop.f32.mrf.mxu0
        %v3668 = vadd.f32 0.0, %v3667
        %v3669 = vpop.f32.mrf.mxu0
        %3670 = vmatprep.mubr.f32.mxu0 0.0
        %3671 = vmatmul.mubr.f32.gmra.mxu0 %v3504
        %v3672 = vpop.f32.mrf.mxu0
        %v3673 = vadd.f32 0.0, %v3672
        %v3674 = vpop.f32.mrf.mxu0
        %3675 = vmatprep.mubr.f32.mxu0 0.0
        %3676 = vmatmul.mubr.f32.gmra.mxu0 %v3507
        %v3677 = vpop.f32.mrf.mxu0
        %v3678 = vadd.f32 0.0, %v3677
        %v3679 = vpop.f32.mrf.mxu0
        %3680 = vmatprep.mubr.f32.mxu0 0.0
        %3681 = vmatmul.mubr.f32.gmra.mxu0 %v3510
        %v3682 = vpop.f32.mrf.mxu0
        %v3683 = vadd.f32 0.0, %v3682
        %v3684 = vpop.f32.mrf.mxu0
        %3685 = vmatprep.mubr.f32.mxu0 0.0
        %3686 = vmatmul.mubr.f32.gmra.mxu0 %v3513
        %v3687 = vpop.f32.mrf.mxu0
        %v3688 = vadd.f32 0.0, %v3687
        %v3689 = vpop.f32.mrf.mxu0
        %3690 = vmatprep.mubr.f32.mxu0 0.0
        %3691 = vmatmul.mubr.f32.gmra.mxu0 %v3516
        %v3692 = vpop.f32.mrf.mxu0
        %v3693 = vadd.f32 0.0, %v3692
        %v3694 = vpop.f32.mrf.mxu0
        %3695 = vmatprep.mubr.f32.mxu0 0.0
        %3696 = vmatmul.mubr.f32.gmra.mxu0 %v3519
        %v3697 = vpop.f32.mrf.mxu0
        %v3698 = vadd.f32 0.0, %v3697
        %v3699 = vpop.f32.mrf.mxu0
        %3700 = vmatprep.mubr.f32.mxu0 0.0
        %3701 = vmatmul.mubr.f32.gmra.mxu0 %v3522
        %v3702 = vpop.f32.mrf.mxu0
        %v3703 = vadd.f32 0.0, %v3702
        %v3704 = vpop.f32.mrf.mxu0
        %3705 = vmatprep.mubr.f32.mxu0 0.0
        %3706 = vmatmul.mubr.f32.gmra.mxu0 %v3525
        %v3707 = vpop.f32.mrf.mxu0
        %v3708 = vadd.f32 0.0, %v3707
        %v3709 = vpop.f32.mrf.mxu0
        %3710 = vmatprep.mubr.f32.mxu0 0.0
        %3711 = vmatmul.mubr.f32.gmra.mxu0 %v3528
        %v3712 = vpop.f32.mrf.mxu0
        %v3713 = vadd.f32 0.0, %v3712
        %v3714 = vpop.f32.mrf.mxu0
        %3715 = vmatprep.mubr.f32.mxu0 0.0
        %3716 = vmatmul.mubr.f32.gmra.mxu0 %v3531
        %v3717 = vpop.f32.mrf.mxu0
        %v3718 = vadd.f32 0.0, %v3717
        %v3719 = vpop.f32.mrf.mxu0
        %3720 = vmatprep.mubr.f32.mxu0 0.0
        %3721 = vmatmul.mubr.f32.gmra.mxu0 %v3534
        %v3722 = vpop.f32.mrf.mxu0
        %v3723 = vadd.f32 0.0, %v3722
        %v3724 = vpop.f32.mrf.mxu0
        %3725 = vmatprep.mubr.f32.mxu0 0.0
        %3726 = vmatmul.mubr.f32.gmra.mxu0 %v3537
        %v3727 = vpop.f32.mrf.mxu0
        %v3728 = vadd.f32 0.0, %v3727
        %v3729 = vpop.f32.mrf.mxu0
        %3730 = vmatprep.mubr.f32.mxu0 0.0
        %3731 = vmatmul.mubr.f32.gmra.mxu0 %v3540
        %v3732 = vpop.f32.mrf.mxu0
        %v3733 = vadd.f32 0.0, %v3732
        %v3734 = vpop.f32.mrf.mxu0
        %3735 = vmatprep.mubr.f32.mxu0 0.0
        %3736 = vmatmul.mubr.f32.gmra.mxu0 %v3543
        %v3737 = vpop.f32.mrf.mxu0
        %v3738 = vadd.f32 0.0, %v3737
        %v3739 = vpop.f32.mrf.mxu0
        %3740 = vmatprep.mubr.f32.mxu0 0.0
        %3741 = vmatmul.mubr.f32.gmra.mxu0 %v3546
        %v3742 = vpop.f32.mrf.mxu0
        %v3743 = vadd.f32 0.0, %v3742
        %v3744 = vpop.f32.mrf.mxu0
        %3745 = vmatprep.mubr.f32.mxu0 0.0
        %3746 = vmatmul.mubr.f32.gmra.mxu0 %v3549
        %v3747 = vpop.f32.mrf.mxu0
        %v3748 = vadd.f32 0.0, %v3747
        %v3749 = vpop.f32.mrf.mxu0
        %3750 = vmatprep.mubr.f32.mxu0 0.0
        %3751 = vmatmul.mubr.f32.gmra.mxu0 %v3552
        %v3752 = vpop.f32.mrf.mxu0
        %v3753 = vadd.f32 0.0, %v3752
        %v3754 = vpop.f32.mrf.mxu0
        %3755 = vmatprep.mubr.f32.mxu0 0.0
        %3756 = vmatmul.mubr.f32.gmra.mxu0 %v3555
        %v3757 = vpop.f32.mrf.mxu0
        %v3758 = vadd.f32 0.0, %v3757
        %v3759 = vpop.f32.mrf.mxu0
        %3760 = vmatprep.mubr.f32.mxu0 0.0
        %3761 = vmatmul.mubr.f32.gmra.mxu0 %v3558
        %v3762 = vpop.f32.mrf.mxu0
        %v3763 = vadd.f32 0.0, %v3762
        %v3764 = vpop.f32.mrf.mxu0
        %3765 = vmatprep.mubr.f32.mxu0 0.0
        %3766 = vmatmul.mubr.f32.gmra.mxu0 %v3561
        %v3767 = vpop.f32.mrf.mxu0
        %v3768 = vadd.f32 0.0, %v3767
        %v3769 = vpop.f32.mrf.mxu0
        %3770 = vmatprep.mubr.f32.mxu0 0.0
        %3771 = vmatmul.mubr.f32.gmra.mxu0 %v3564
        %v3772 = vpop.f32.mrf.mxu0
        %v3773 = vadd.f32 0.0, %v3772
        %v3774 = vpop.f32.mrf.mxu0
        %3775 = vmatprep.mubr.f32.mxu0 0.0
        %3776 = vmatmul.mubr.f32.gmra.mxu0 %v3567
        %v3777 = vpop.f32.mrf.mxu0
        %v3778 = vadd.f32 0.0, %v3777
        %v3779 = vpop.f32.mrf.mxu0
        %3780 = vmatprep.mubr.f32.mxu0 0.0
        %3781 = vmatmul.mubr.f32.gmra.mxu0 %v3570
        %v3782 = vpop.f32.mrf.mxu0
        %v3783 = vadd.f32 0.0, %v3782
        %v3784 = vpop.f32.mrf.mxu0
        %3785 = vmatprep.mubr.f32.mxu0 0.0
        %3786 = vmatmul.mubr.f32.gmra.mxu0 %v3573
        %v3787 = vpop.f32.mrf.mxu0
        %v3788 = vadd.f32 0.0, %v3787
        %v3789 = vpop.f32.mrf.mxu0
        %3790 = vmatprep.mubr.f32.mxu0 0.0
        %3791 = vmatmul.mubr.f32.gmra.mxu0 %v3576
        %v3792 = vpop.f32.mrf.mxu0
        %v3793 = vadd.f32 0.0, %v3792
        %v3794 = vpop.f32.mrf.mxu0
        %3795 = vmatprep.mubr.f32.mxu0 0.0
        %3796 = vmatmul.mubr.f32.gmra.mxu0 %v3579
        %v3797 = vpop.f32.mrf.mxu0
        %v3798 = vadd.f32 0.0, %v3797
        %v3799 = vpop.f32.mrf.mxu0
        %3800 = vmatprep.mubr.f32.mxu0 0.0
        %3801 = vmatmul.mubr.f32.gmra.mxu0 %v3582
        %v3802 = vpop.f32.mrf.mxu0
        %v3803 = vadd.f32 0.0, %v3802
        %v3804 = vpop.f32.mrf.mxu0
        %3805 = vmatprep.mubr.f32.mxu0 0.0
        %3806 = vmatmul.mubr.f32.gmra.mxu0 %v3585
        %v3807 = vpop.f32.mrf.mxu0
        %v3808 = vadd.f32 0.0, %v3807
        %v3809 = vpop.f32.mrf.mxu0
        %3810 = vmatprep.mubr.f32.mxu0 0.0
        %3811 = vmatmul.mubr.f32.gmra.mxu0 %v3588
        %v3812 = vpop.f32.mrf.mxu0
        %v3813 = vadd.f32 0.0, %v3812
        %v3814 = vpop.f32.mrf.mxu0
        %3815 = vmatprep.mubr.f32.mxu0 0.0
        %3816 = vmatmul.mubr.f32.gmra.mxu0 %v3591
        %v3817 = vpop.f32.mrf.mxu0
        %v3818 = vadd.f32 0.0, %v3817
        %v3819 = vpop.f32.mrf.mxu0
        %3820 = vdwg.mxu0
        %v3821 = vadd.f32 %v3431, %v3663
        %v3822 = vadd.f32 %v3432, %v3668
        %v3823 = vadd.f32 %v3433, %v3673
        %v3824 = vadd.f32 %v3434, %v3678
        %v3825 = vadd.f32 %v3435, %v3683
        %v3826 = vadd.f32 %v3436, %v3688
        %v3827 = vadd.f32 %v3437, %v3693
        %v3828 = vadd.f32 %v3438, %v3698
        %v3829 = vadd.f32 %v3439, %v3703
        %v3830 = vadd.f32 %v3440, %v3708
        %v3831 = vadd.f32 %v3441, %v3713
        %v3832 = vadd.f32 %v3442, %v3718
        %v3833 = vadd.f32 %v3443, %v3723
        %v3834 = vadd.f32 %v3444, %v3728
        %v3835 = vadd.f32 %v3445, %v3733
        %v3836 = vadd.f32 %v3446, %v3738
        %v3837 = vadd.f32 %v3447, %v3743
        %v3838 = vadd.f32 %v3448, %v3748
        %v3839 = vadd.f32 %v3449, %v3753
        %v3840 = vadd.f32 %v3450, %v3758
        %v3841 = vadd.f32 %v3451, %v3763
        %v3842 = vadd.f32 %v3452, %v3768
        %v3843 = vadd.f32 %v3453, %v3773
        %v3844 = vadd.f32 %v3454, %v3778
        %v3845 = vadd.f32 %v3455, %v3783
        %v3846 = vadd.f32 %v3456, %v3788
        %v3847 = vadd.f32 %v3457, %v3793
        %v3848 = vadd.f32 %v3458, %v3798
        %v3849 = vadd.f32 %v3459, %v3803
        %v3850 = vadd.f32 %v3460, %v3808
        %v3851 = vadd.f32 %v3461, %v3813
        %v3852 = vadd.f32 %v3462, %v3818
        %v3853 = vld [vmem:[%s3072 + $0x2] sm:$0xff]
        %v3854 = vld [vmem:[%s3072 + $0xa] sm:$0xff]
        %v3855 = vld [vmem:[%s3072 + $0x1a] sm:$0xff]
        %v3856 = vld [vmem:[%s3072 + $0x22] sm:$0xff]
        %v3857 = vld [vmem:[%s3072 + $0x32] sm:$0xff]
        %v3858 = vld [vmem:[%s3072 + $0x3a] sm:$0xff]
        %v3859 = vld [vmem:[%s3072 + $0x4a] sm:$0xff]
        %v3860 = vld [vmem:[%s3072 + $0x52] sm:$0xff]
        %v3861 = vld [vmem:[%s3072 + $0x62] sm:$0xff]
        %v3862 = vld [vmem:[%s3072 + $0x6a] sm:$0xff]
        %v3863 = vld [vmem:[%s3072 + $0x7a] sm:$0xff]
        %v3864 = vld [vmem:[%s3072 + $0x82] sm:$0xff]
        %v3865 = vld [vmem:[%s3072 + $0x92] sm:$0xff]
        %v3866 = vld [vmem:[%s3072 + $0x9a] sm:$0xff]
        %v3867 = vld [vmem:[%s3072 + $0xaa] sm:$0xff]
        %v3868 = vld [vmem:[%s3072 + $0xb2] sm:$0xff]
        %v3869 = vld [vmem:[%s3072 + $0xc2] sm:$0xff]
        %v3870 = vld [vmem:[%s3072 + $0xca] sm:$0xff]
        %v3871 = vld [vmem:[%s3072 + $0xda] sm:$0xff]
        %v3872 = vld [vmem:[%s3072 + $0xe2] sm:$0xff]
        %v3873 = vld [vmem:[%s3072 + $0xf2] sm:$0xff]
        %v3874 = vld [vmem:[%s3072 + $0xfa] sm:$0xff]
        %v3875 = vld [vmem:[%s3072 + $0x10a] sm:$0xff]
        %v3876 = vld [vmem:[%s3072 + $0x112] sm:$0xff]
        %v3877 = vld [vmem:[%s3072 + $0x122] sm:$0xff]
        %v3878 = vld [vmem:[%s3072 + $0x12a] sm:$0xff]
        %v3879 = vld [vmem:[%s3072 + $0x13a] sm:$0xff]
        %v3880 = vld [vmem:[%s3072 + $0x142] sm:$0xff]
        %v3881 = vld [vmem:[%s3072 + $0x152] sm:$0xff]
        %v3882 = vld [vmem:[%s3072 + $0x15a] sm:$0xff]
        %v3883 = vld [vmem:[%s3072 + $0x16a] sm:$0xff]
        %v3884 = vld [vmem:[%s3072 + $0x172] sm:$0xff]
        %s3885 = scalar_lea.vmem [#allocation6], 32
        %v3886 = vld [vmem:[%s3885] sm:$0xf]
        %v3888 = vsel %vm707, %v3853, 0
        %v3891 = vsel %vm707, %v3854, 0
        %v3894 = vsel %vm707, %v3855, 0
        %v3897 = vsel %vm707, %v3856, 0
        %v3900 = vsel %vm707, %v3857, 0
        %v3903 = vsel %vm707, %v3858, 0
        %v3906 = vsel %vm707, %v3859, 0
        %v3909 = vsel %vm707, %v3860, 0
        %v3912 = vsel %vm707, %v3861, 0
        %v3915 = vsel %vm707, %v3862, 0
        %v3918 = vsel %vm707, %v3863, 0
        %v3921 = vsel %vm707, %v3864, 0
        %v3924 = vsel %vm707, %v3865, 0
        %v3927 = vsel %vm707, %v3866, 0
        %v3930 = vsel %vm707, %v3867, 0
        %v3933 = vsel %vm707, %v3868, 0
        %v3936 = vsel %vm707, %v3869, 0
        %v3939 = vsel %vm707, %v3870, 0
        %v3942 = vsel %vm707, %v3871, 0
        %v3945 = vsel %vm707, %v3872, 0
        %v3948 = vsel %vm707, %v3873, 0
        %v3951 = vsel %vm707, %v3874, 0
        %v3954 = vsel %vm707, %v3875, 0
        %v3957 = vsel %vm707, %v3876, 0
        %v3960 = vsel %vm707, %v3877, 0
        %v3963 = vsel %vm707, %v3878, 0
        %v3966 = vsel %vm707, %v3879, 0
        %v3969 = vsel %vm707, %v3880, 0
        %v3972 = vsel %vm707, %v3881, 0
        %v3975 = vsel %vm707, %v3882, 0
        %v3978 = vsel %vm707, %v3883, 0
        %v3981 = vsel %vm707, %v3884, 0
        %v3984 = vsel %vm959, %v3886, 0
        %3986 = vmatprep.subr.mxu0 0.0
        %3987 = vmatpush1.msra.mxu0 0.0
        %3988 = vmatprep.subr.mxu0 0.0
        %3989 = vmatpush1.msra.mxu0 0.0
        %3990 = vmatprep.subr.mxu0 0.0
        %3991 = vmatpush1.msra.mxu0 0.0
        %3992 = vmatprep.subr.mxu0 0.0
        %3993 = vmatpush1.msra.mxu0 0.0
        %3994 = vmatprep.subr.mxu0 0.0
        %3995 = vmatpush1.msra.mxu0 0.0
        %3996 = vmatprep.subr.mxu0 0.0
        %3997 = vmatpush1.msra.mxu0 0.0
        %3998 = vmatprep.subr.mxu0 0.0
        %3999 = vmatpush1.msra.mxu0 0.0
        %4000 = vmatprep.subr.mxu0 0.0
        %4001 = vmatpush1.msra.mxu0 0.0
        %4002 = vmatprep.subr.mxu0 0.0
        %4003 = vmatpush1.msra.mxu0 0.0
        %4004 = vmatprep.subr.mxu0 0.0
        %4005 = vmatpush1.msra.mxu0 0.0
        %4006 = vmatprep.subr.mxu0 0.0
        %4007 = vmatpush1.msra.mxu0 0.0
        %4008 = vmatprep.subr.mxu0 0.0
        %4009 = vmatpush1.msra.mxu0 0.0
        %4010 = vmatprep.subr.mxu0 0.0
        %4011 = vmatpush1.msra.mxu0 0.0
        %4012 = vmatprep.subr.mxu0 0.0
        %4013 = vmatpush1.msra.mxu0 0.0
        %4014 = vmatprep.subr.mxu0 0.0
        %4015 = vmatpush1.msra.mxu0 0.0
        %4016 = vmatprep.subr.mxu0 0.0
        %4017 = vmatpush1.msra.mxu0 %v3984
        %4018 = vmatprep.subr.mxu0 0.0
        %4019 = vmatpush2.msra.mxu0 0.0
        %4020 = vmatprep.subr.mxu0 0.0
        %4021 = vmatpush2.msra.mxu0 0.0
        %4022 = vmatprep.subr.mxu0 0.0
        %4023 = vmatpush2.msra.mxu0 0.0
        %4024 = vmatprep.subr.mxu0 0.0
        %4025 = vmatpush2.msra.mxu0 0.0
        %4026 = vmatprep.subr.mxu0 0.0
        %4027 = vmatpush2.msra.mxu0 0.0
        %4028 = vmatprep.subr.mxu0 0.0
        %4029 = vmatpush2.msra.mxu0 0.0
        %4030 = vmatprep.subr.mxu0 0.0
        %4031 = vmatpush2.msra.mxu0 0.0
        %4032 = vmatprep.subr.mxu0 0.0
        %4033 = vmatpush2.msra.mxu0 0.0
        %4034 = vmatprep.subr.mxu0 0.0
        %4035 = vmatpush2.msra.mxu0 0.0
        %4036 = vmatprep.subr.mxu0 0.0
        %4037 = vmatpush2.msra.mxu0 0.0
        %4038 = vmatprep.subr.mxu0 0.0
        %4039 = vmatpush2.msra.mxu0 0.0
        %4040 = vmatprep.subr.mxu0 0.0
        %4041 = vmatpush2.msra.mxu0 0.0
        %4042 = vmatprep.subr.mxu0 0.0
        %4043 = vmatpush2.msra.mxu0 0.0
        %4044 = vmatprep.subr.mxu0 0.0
        %4045 = vmatpush2.msra.mxu0 0.0
        %4046 = vmatprep.subr.mxu0 0.0
        %4047 = vmatpush2.msra.mxu0 0.0
        %4048 = vmatprep.subr.mxu0 0.0
        %4049 = vmatpush2.msra.mxu0 0.0
        %4050 = vmatprep.mubr.f32.mxu0 0.0
        %4051 = vmatmul.mubr.f32.gmra.mxu0 %v3888
        %v4052 = vpop.f32.mrf.mxu0
        %v4053 = vadd.f32 0.0, %v4052
        %v4054 = vpop.f32.mrf.mxu0
        %4055 = vmatprep.mubr.f32.mxu0 0.0
        %4056 = vmatmul.mubr.f32.gmra.mxu0 %v3891
        %v4057 = vpop.f32.mrf.mxu0
        %v4058 = vadd.f32 0.0, %v4057
        %v4059 = vpop.f32.mrf.mxu0
        %4060 = vmatprep.mubr.f32.mxu0 0.0
        %4061 = vmatmul.mubr.f32.gmra.mxu0 %v3894
        %v4062 = vpop.f32.mrf.mxu0
        %v4063 = vadd.f32 0.0, %v4062
        %v4064 = vpop.f32.mrf.mxu0
        %4065 = vmatprep.mubr.f32.mxu0 0.0
        %4066 = vmatmul.mubr.f32.gmra.mxu0 %v3897
        %v4067 = vpop.f32.mrf.mxu0
        %v4068 = vadd.f32 0.0, %v4067
        %v4069 = vpop.f32.mrf.mxu0
        %4070 = vmatprep.mubr.f32.mxu0 0.0
        %4071 = vmatmul.mubr.f32.gmra.mxu0 %v3900
        %v4072 = vpop.f32.mrf.mxu0
        %v4073 = vadd.f32 0.0, %v4072
        %v4074 = vpop.f32.mrf.mxu0
        %4075 = vmatprep.mubr.f32.mxu0 0.0
        %4076 = vmatmul.mubr.f32.gmra.mxu0 %v3903
        %v4077 = vpop.f32.mrf.mxu0
        %v4078 = vadd.f32 0.0, %v4077
        %v4079 = vpop.f32.mrf.mxu0
        %4080 = vmatprep.mubr.f32.mxu0 0.0
        %4081 = vmatmul.mubr.f32.gmra.mxu0 %v3906
        %v4082 = vpop.f32.mrf.mxu0
        %v4083 = vadd.f32 0.0, %v4082
        %v4084 = vpop.f32.mrf.mxu0
        %4085 = vmatprep.mubr.f32.mxu0 0.0
        %4086 = vmatmul.mubr.f32.gmra.mxu0 %v3909
        %v4087 = vpop.f32.mrf.mxu0
        %v4088 = vadd.f32 0.0, %v4087
        %v4089 = vpop.f32.mrf.mxu0
        %4090 = vmatprep.mubr.f32.mxu0 0.0
        %4091 = vmatmul.mubr.f32.gmra.mxu0 %v3912
        %v4092 = vpop.f32.mrf.mxu0
        %v4093 = vadd.f32 0.0, %v4092
        %v4094 = vpop.f32.mrf.mxu0
        %4095 = vmatprep.mubr.f32.mxu0 0.0
        %4096 = vmatmul.mubr.f32.gmra.mxu0 %v3915
        %v4097 = vpop.f32.mrf.mxu0
        %v4098 = vadd.f32 0.0, %v4097
        %v4099 = vpop.f32.mrf.mxu0
        %4100 = vmatprep.mubr.f32.mxu0 0.0
        %4101 = vmatmul.mubr.f32.gmra.mxu0 %v3918
        %v4102 = vpop.f32.mrf.mxu0
        %v4103 = vadd.f32 0.0, %v4102
        %v4104 = vpop.f32.mrf.mxu0
        %4105 = vmatprep.mubr.f32.mxu0 0.0
        %4106 = vmatmul.mubr.f32.gmra.mxu0 %v3921
        %v4107 = vpop.f32.mrf.mxu0
        %v4108 = vadd.f32 0.0, %v4107
        %v4109 = vpop.f32.mrf.mxu0
        %4110 = vmatprep.mubr.f32.mxu0 0.0
        %4111 = vmatmul.mubr.f32.gmra.mxu0 %v3924
        %v4112 = vpop.f32.mrf.mxu0
        %v4113 = vadd.f32 0.0, %v4112
        %v4114 = vpop.f32.mrf.mxu0
        %4115 = vmatprep.mubr.f32.mxu0 0.0
        %4116 = vmatmul.mubr.f32.gmra.mxu0 %v3927
        %v4117 = vpop.f32.mrf.mxu0
        %v4118 = vadd.f32 0.0, %v4117
        %v4119 = vpop.f32.mrf.mxu0
        %4120 = vmatprep.mubr.f32.mxu0 0.0
        %4121 = vmatmul.mubr.f32.gmra.mxu0 %v3930
        %v4122 = vpop.f32.mrf.mxu0
        %v4123 = vadd.f32 0.0, %v4122
        %v4124 = vpop.f32.mrf.mxu0
        %4125 = vmatprep.mubr.f32.mxu0 0.0
        %4126 = vmatmul.mubr.f32.gmra.mxu0 %v3933
        %v4127 = vpop.f32.mrf.mxu0
        %v4128 = vadd.f32 0.0, %v4127
        %v4129 = vpop.f32.mrf.mxu0
        %4130 = vmatprep.mubr.f32.mxu0 0.0
        %4131 = vmatmul.mubr.f32.gmra.mxu0 %v3936
        %v4132 = vpop.f32.mrf.mxu0
        %v4133 = vadd.f32 0.0, %v4132
        %v4134 = vpop.f32.mrf.mxu0
        %4135 = vmatprep.mubr.f32.mxu0 0.0
        %4136 = vmatmul.mubr.f32.gmra.mxu0 %v3939
        %v4137 = vpop.f32.mrf.mxu0
        %v4138 = vadd.f32 0.0, %v4137
        %v4139 = vpop.f32.mrf.mxu0
        %4140 = vmatprep.mubr.f32.mxu0 0.0
        %4141 = vmatmul.mubr.f32.gmra.mxu0 %v3942
        %v4142 = vpop.f32.mrf.mxu0
        %v4143 = vadd.f32 0.0, %v4142
        %v4144 = vpop.f32.mrf.mxu0
        %4145 = vmatprep.mubr.f32.mxu0 0.0
        %4146 = vmatmul.mubr.f32.gmra.mxu0 %v3945
        %v4147 = vpop.f32.mrf.mxu0
        %v4148 = vadd.f32 0.0, %v4147
        %v4149 = vpop.f32.mrf.mxu0
        %4150 = vmatprep.mubr.f32.mxu0 0.0
        %4151 = vmatmul.mubr.f32.gmra.mxu0 %v3948
        %v4152 = vpop.f32.mrf.mxu0
        %v4153 = vadd.f32 0.0, %v4152
        %v4154 = vpop.f32.mrf.mxu0
        %4155 = vmatprep.mubr.f32.mxu0 0.0
        %4156 = vmatmul.mubr.f32.gmra.mxu0 %v3951
        %v4157 = vpop.f32.mrf.mxu0
        %v4158 = vadd.f32 0.0, %v4157
        %v4159 = vpop.f32.mrf.mxu0
        %4160 = vmatprep.mubr.f32.mxu0 0.0
        %4161 = vmatmul.mubr.f32.gmra.mxu0 %v3954
        %v4162 = vpop.f32.mrf.mxu0
        %v4163 = vadd.f32 0.0, %v4162
        %v4164 = vpop.f32.mrf.mxu0
        %4165 = vmatprep.mubr.f32.mxu0 0.0
        %4166 = vmatmul.mubr.f32.gmra.mxu0 %v3957
        %v4167 = vpop.f32.mrf.mxu0
        %v4168 = vadd.f32 0.0, %v4167
        %v4169 = vpop.f32.mrf.mxu0
        %4170 = vmatprep.mubr.f32.mxu0 0.0
        %4171 = vmatmul.mubr.f32.gmra.mxu0 %v3960
        %v4172 = vpop.f32.mrf.mxu0
        %v4173 = vadd.f32 0.0, %v4172
        %v4174 = vpop.f32.mrf.mxu0
        %4175 = vmatprep.mubr.f32.mxu0 0.0
        %4176 = vmatmul.mubr.f32.gmra.mxu0 %v3963
        %v4177 = vpop.f32.mrf.mxu0
        %v4178 = vadd.f32 0.0, %v4177
        %v4179 = vpop.f32.mrf.mxu0
        %4180 = vmatprep.mubr.f32.mxu0 0.0
        %4181 = vmatmul.mubr.f32.gmra.mxu0 %v3966
        %v4182 = vpop.f32.mrf.mxu0
        %v4183 = vadd.f32 0.0, %v4182
        %v4184 = vpop.f32.mrf.mxu0
        %4185 = vmatprep.mubr.f32.mxu0 0.0
        %4186 = vmatmul.mubr.f32.gmra.mxu0 %v3969
        %v4187 = vpop.f32.mrf.mxu0
        %v4188 = vadd.f32 0.0, %v4187
        %v4189 = vpop.f32.mrf.mxu0
        %4190 = vmatprep.mubr.f32.mxu0 0.0
        %4191 = vmatmul.mubr.f32.gmra.mxu0 %v3972
        %v4192 = vpop.f32.mrf.mxu0
        %v4193 = vadd.f32 0.0, %v4192
        %v4194 = vpop.f32.mrf.mxu0
        %4195 = vmatprep.mubr.f32.mxu0 0.0
        %4196 = vmatmul.mubr.f32.gmra.mxu0 %v3975
        %v4197 = vpop.f32.mrf.mxu0
        %v4198 = vadd.f32 0.0, %v4197
        %v4199 = vpop.f32.mrf.mxu0
        %4200 = vmatprep.mubr.f32.mxu0 0.0
        %4201 = vmatmul.mubr.f32.gmra.mxu0 %v3978
        %v4202 = vpop.f32.mrf.mxu0
        %v4203 = vadd.f32 0.0, %v4202
        %v4204 = vpop.f32.mrf.mxu0
        %4205 = vmatprep.mubr.f32.mxu0 0.0
        %4206 = vmatmul.mubr.f32.gmra.mxu0 %v3981
        %v4207 = vpop.f32.mrf.mxu0
        %v4208 = vadd.f32 0.0, %v4207
        %v4209 = vpop.f32.mrf.mxu0
        %4210 = vdwg.mxu0
        %v4211 = vadd.f32 %v3821, %v4053
        %v4212 = vadd.f32 %v3822, %v4058
        %v4213 = vadd.f32 %v3823, %v4063
        %v4214 = vadd.f32 %v3824, %v4068
        %v4215 = vadd.f32 %v3825, %v4073
        %v4216 = vadd.f32 %v3826, %v4078
        %v4217 = vadd.f32 %v3827, %v4083
        %v4218 = vadd.f32 %v3828, %v4088
        %v4219 = vadd.f32 %v3829, %v4093
        %v4220 = vadd.f32 %v3830, %v4098
        %v4221 = vadd.f32 %v3831, %v4103
        %v4222 = vadd.f32 %v3832, %v4108
        %v4223 = vadd.f32 %v3833, %v4113
        %v4224 = vadd.f32 %v3834, %v4118
        %v4225 = vadd.f32 %v3835, %v4123
        %v4226 = vadd.f32 %v3836, %v4128
        %v4227 = vadd.f32 %v3837, %v4133
        %v4228 = vadd.f32 %v3838, %v4138
        %v4229 = vadd.f32 %v3839, %v4143
        %v4230 = vadd.f32 %v3840, %v4148
        %v4231 = vadd.f32 %v3841, %v4153
        %v4232 = vadd.f32 %v3842, %v4158
        %v4233 = vadd.f32 %v3843, %v4163
        %v4234 = vadd.f32 %v3844, %v4168
        %v4235 = vadd.f32 %v3845, %v4173
        %v4236 = vadd.f32 %v3846, %v4178
        %v4237 = vadd.f32 %v3847, %v4183
        %v4238 = vadd.f32 %v3848, %v4188
        %v4239 = vadd.f32 %v3849, %v4193
        %v4240 = vadd.f32 %v3850, %v4198
        %v4241 = vadd.f32 %v3851, %v4203
        %v4242 = vadd.f32 %v3852, %v4208
        %v4243 = vld [vmem:[%s4] sm:$0x1]
        %v4245 = vlaneseq
        %v4246 = vshrl.u32 %v4245, 7
        %v4247 = vsub.s32 0, %v4246
        %v4248 = vrot.slane %v4243, %v4247
        %v4250 = vadd.f32 %v4211, %v4248
        %v4251 = vadd.f32 %v4212, %v4248
        %v4252 = vadd.f32 %v4213, %v4248
        %v4253 = vadd.f32 %v4214, %v4248
        %v4254 = vadd.f32 %v4215, %v4248
        %v4255 = vadd.f32 %v4216, %v4248
        %v4256 = vadd.f32 %v4217, %v4248
        %v4257 = vadd.f32 %v4218, %v4248
        %v4258 = vadd.f32 %v4219, %v4248
        %v4259 = vadd.f32 %v4220, %v4248
        %v4260 = vadd.f32 %v4221, %v4248
        %v4261 = vadd.f32 %v4222, %v4248
        %v4262 = vadd.f32 %v4223, %v4248
        %v4263 = vadd.f32 %v4224, %v4248
        %v4264 = vadd.f32 %v4225, %v4248
        %v4265 = vadd.f32 %v4226, %v4248
        %v4266 = vadd.f32 %v4227, %v4248
        %v4267 = vadd.f32 %v4228, %v4248
        %v4268 = vadd.f32 %v4229, %v4248
        %v4269 = vadd.f32 %v4230, %v4248
        %v4270 = vadd.f32 %v4231, %v4248
        %v4271 = vadd.f32 %v4232, %v4248
        %v4272 = vadd.f32 %v4233, %v4248
        %v4273 = vadd.f32 %v4234, %v4248
        %v4274 = vadd.f32 %v4235, %v4248
        %v4275 = vadd.f32 %v4236, %v4248
        %v4276 = vadd.f32 %v4237, %v4248
        %v4277 = vadd.f32 %v4238, %v4248
        %v4278 = vadd.f32 %v4239, %v4248
        %v4279 = vadd.f32 %v4240, %v4248
        %v4280 = vadd.f32 %v4241, %v4248
        %v4281 = vadd.f32 %v4242, %v4248
        %v4282 = vmax.f32 %v4250, 0.0
        %v4283 = vmax.f32 %v4251, 0.0
        %v4284 = vmax.f32 %v4252, 0.0
        %v4285 = vmax.f32 %v4253, 0.0
        %v4286 = vmax.f32 %v4254, 0.0
        %v4287 = vmax.f32 %v4255, 0.0
        %v4288 = vmax.f32 %v4256, 0.0
        %v4289 = vmax.f32 %v4257, 0.0
        %v4290 = vmax.f32 %v4258, 0.0
        %v4291 = vmax.f32 %v4259, 0.0
        %v4292 = vmax.f32 %v4260, 0.0
        %v4293 = vmax.f32 %v4261, 0.0
        %v4294 = vmax.f32 %v4262, 0.0
        %v4295 = vmax.f32 %v4263, 0.0
        %v4296 = vmax.f32 %v4264, 0.0
        %v4297 = vmax.f32 %v4265, 0.0
        %v4298 = vmax.f32 %v4266, 0.0
        %v4299 = vmax.f32 %v4267, 0.0
        %v4300 = vmax.f32 %v4268, 0.0
        %v4301 = vmax.f32 %v4269, 0.0
        %v4302 = vmax.f32 %v4270, 0.0
        %v4303 = vmax.f32 %v4271, 0.0
        %v4304 = vmax.f32 %v4272, 0.0
        %v4305 = vmax.f32 %v4273, 0.0
        %v4306 = vmax.f32 %v4274, 0.0
        %v4307 = vmax.f32 %v4275, 0.0
        %v4308 = vmax.f32 %v4276, 0.0
        %v4309 = vmax.f32 %v4277, 0.0
        %v4310 = vmax.f32 %v4278, 0.0
        %v4311 = vmax.f32 %v4279, 0.0
        %v4312 = vmax.f32 %v4280, 0.0
        %v4313 = vmax.f32 %v4281, 0.0
        %v4314 = vld [vmem:[%s5] sm:$0xf]
        %v4315 = vld [vmem:[%s6] sm:$0x1]
        %v4317 = vlaneseq
        %v4318 = vshrl.u32 %v4317, 7
        %v4319 = vsub.s32 0, %v4318
        %v4320 = vrot.slane %v4315, %v4319
        %v4323 = vsel %vm707, %v4282, 0
        %v4326 = vsel %vm707, %v4283, 0
        %v4329 = vsel %vm707, %v4284, 0
        %v4332 = vsel %vm707, %v4285, 0
        %v4335 = vsel %vm707, %v4286, 0
        %v4338 = vsel %vm707, %v4287, 0
        %v4341 = vsel %vm707, %v4288, 0
        %v4344 = vsel %vm707, %v4289, 0
        %v4347 = vsel %vm707, %v4290, 0
        %v4350 = vsel %vm707, %v4291, 0
        %v4353 = vsel %vm707, %v4292, 0
        %v4356 = vsel %vm707, %v4293, 0
        %v4359 = vsel %vm707, %v4294, 0
        %v4362 = vsel %vm707, %v4295, 0
        %v4365 = vsel %vm707, %v4296, 0
        %v4368 = vsel %vm707, %v4297, 0
        %v4371 = vsel %vm707, %v4298, 0
        %v4374 = vsel %vm707, %v4299, 0
        %v4377 = vsel %vm707, %v4300, 0
        %v4380 = vsel %vm707, %v4301, 0
        %v4383 = vsel %vm707, %v4302, 0
        %v4386 = vsel %vm707, %v4303, 0
        %v4389 = vsel %vm707, %v4304, 0
        %v4392 = vsel %vm707, %v4305, 0
        %v4395 = vsel %vm707, %v4306, 0
        %v4398 = vsel %vm707, %v4307, 0
        %v4401 = vsel %vm707, %v4308, 0
        %v4404 = vsel %vm707, %v4309, 0
        %v4407 = vsel %vm707, %v4310, 0
        %v4410 = vsel %vm707, %v4311, 0
        %v4413 = vsel %vm707, %v4312, 0
        %v4416 = vsel %vm707, %v4313, 0
        %v4419 = vsel %vm959, %v4314, 0
        %4421 = vmatprep.subr.mxu0 0.0
        %4422 = vmatpush1.msra.mxu0 0.0
        %4423 = vmatprep.subr.mxu0 0.0
        %4424 = vmatpush1.msra.mxu0 0.0
        %4425 = vmatprep.subr.mxu0 0.0
        %4426 = vmatpush1.msra.mxu0 0.0
        %4427 = vmatprep.subr.mxu0 0.0
        %4428 = vmatpush1.msra.mxu0 0.0
        %4429 = vmatprep.subr.mxu0 0.0
        %4430 = vmatpush1.msra.mxu0 0.0
        %4431 = vmatprep.subr.mxu0 0.0
        %4432 = vmatpush1.msra.mxu0 0.0
        %4433 = vmatprep.subr.mxu0 0.0
        %4434 = vmatpush1.msra.mxu0 0.0
        %4435 = vmatprep.subr.mxu0 0.0
        %4436 = vmatpush1.msra.mxu0 0.0
        %4437 = vmatprep.subr.mxu0 0.0
        %4438 = vmatpush1.msra.mxu0 0.0
        %4439 = vmatprep.subr.mxu0 0.0
        %4440 = vmatpush1.msra.mxu0 0.0
        %4441 = vmatprep.subr.mxu0 0.0
        %4442 = vmatpush1.msra.mxu0 0.0
        %4443 = vmatprep.subr.mxu0 0.0
        %4444 = vmatpush1.msra.mxu0 0.0
        %4445 = vmatprep.subr.mxu0 0.0
        %4446 = vmatpush1.msra.mxu0 0.0
        %4447 = vmatprep.subr.mxu0 0.0
        %4448 = vmatpush1.msra.mxu0 0.0
        %4449 = vmatprep.subr.mxu0 0.0
        %4450 = vmatpush1.msra.mxu0 0.0
        %4451 = vmatprep.subr.mxu0 0.0
        %4452 = vmatpush1.msra.mxu0 %v4419
        %4453 = vmatprep.subr.mxu0 0.0
        %4454 = vmatpush2.msra.mxu0 0.0
        %4455 = vmatprep.subr.mxu0 0.0
        %4456 = vmatpush2.msra.mxu0 0.0
        %4457 = vmatprep.subr.mxu0 0.0
        %4458 = vmatpush2.msra.mxu0 0.0
        %4459 = vmatprep.subr.mxu0 0.0
        %4460 = vmatpush2.msra.mxu0 0.0
        %4461 = vmatprep.subr.mxu0 0.0
        %4462 = vmatpush2.msra.mxu0 0.0
        %4463 = vmatprep.subr.mxu0 0.0
        %4464 = vmatpush2.msra.mxu0 0.0
        %4465 = vmatprep.subr.mxu0 0.0
        %4466 = vmatpush2.msra.mxu0 0.0
        %4467 = vmatprep.subr.mxu0 0.0
        %4468 = vmatpush2.msra.mxu0 0.0
        %4469 = vmatprep.subr.mxu0 0.0
        %4470 = vmatpush2.msra.mxu0 0.0
        %4471 = vmatprep.subr.mxu0 0.0
        %4472 = vmatpush2.msra.mxu0 0.0
        %4473 = vmatprep.subr.mxu0 0.0
        %4474 = vmatpush2.msra.mxu0 0.0
        %4475 = vmatprep.subr.mxu0 0.0
        %4476 = vmatpush2.msra.mxu0 0.0
        %4477 = vmatprep.subr.mxu0 0.0
        %4478 = vmatpush2.msra.mxu0 0.0
        %4479 = vmatprep.subr.mxu0 0.0
        %4480 = vmatpush2.msra.mxu0 0.0
        %4481 = vmatprep.subr.mxu0 0.0
        %4482 = vmatpush2.msra.mxu0 0.0
        %4483 = vmatprep.subr.mxu0 0.0
        %4484 = vmatpush2.msra.mxu0 0.0
        %4485 = vmatprep.mubr.f32.mxu0 0.0
        %4486 = vmatmul.mubr.f32.gmra.mxu0 %v4323
        %v4487 = vpop.f32.mrf.mxu0
        %v4488 = vadd.f32 %v4320, %v4487
        %v4489 = vpop.f32.mrf.mxu0
        %4490 = vmatprep.mubr.f32.mxu0 0.0
        %4491 = vmatmul.mubr.f32.gmra.mxu0 %v4326
        %v4492 = vpop.f32.mrf.mxu0
        %v4493 = vadd.f32 %v4320, %v4492
        %v4494 = vpop.f32.mrf.mxu0
        %4495 = vmatprep.mubr.f32.mxu0 0.0
        %4496 = vmatmul.mubr.f32.gmra.mxu0 %v4329
        %v4497 = vpop.f32.mrf.mxu0
        %v4498 = vadd.f32 %v4320, %v4497
        %v4499 = vpop.f32.mrf.mxu0
        %4500 = vmatprep.mubr.f32.mxu0 0.0
        %4501 = vmatmul.mubr.f32.gmra.mxu0 %v4332
        %v4502 = vpop.f32.mrf.mxu0
        %v4503 = vadd.f32 %v4320, %v4502
        %v4504 = vpop.f32.mrf.mxu0
        %4505 = vmatprep.mubr.f32.mxu0 0.0
        %4506 = vmatmul.mubr.f32.gmra.mxu0 %v4335
        %v4507 = vpop.f32.mrf.mxu0
        %v4508 = vadd.f32 %v4320, %v4507
        %v4509 = vpop.f32.mrf.mxu0
        %4510 = vmatprep.mubr.f32.mxu0 0.0
        %4511 = vmatmul.mubr.f32.gmra.mxu0 %v4338
        %v4512 = vpop.f32.mrf.mxu0
        %v4513 = vadd.f32 %v4320, %v4512
        %v4514 = vpop.f32.mrf.mxu0
        %4515 = vmatprep.mubr.f32.mxu0 0.0
        %4516 = vmatmul.mubr.f32.gmra.mxu0 %v4341
        %v4517 = vpop.f32.mrf.mxu0
        %v4518 = vadd.f32 %v4320, %v4517
        %v4519 = vpop.f32.mrf.mxu0
        %4520 = vmatprep.mubr.f32.mxu0 0.0
        %4521 = vmatmul.mubr.f32.gmra.mxu0 %v4344
        %v4522 = vpop.f32.mrf.mxu0
        %v4523 = vadd.f32 %v4320, %v4522
        %v4524 = vpop.f32.mrf.mxu0
        %4525 = vmatprep.mubr.f32.mxu0 0.0
        %4526 = vmatmul.mubr.f32.gmra.mxu0 %v4347
        %v4527 = vpop.f32.mrf.mxu0
        %v4528 = vadd.f32 %v4320, %v4527
        %v4529 = vpop.f32.mrf.mxu0
        %4530 = vmatprep.mubr.f32.mxu0 0.0
        %4531 = vmatmul.mubr.f32.gmra.mxu0 %v4350
        %v4532 = vpop.f32.mrf.mxu0
        %v4533 = vadd.f32 %v4320, %v4532
        %v4534 = vpop.f32.mrf.mxu0
        %4535 = vmatprep.mubr.f32.mxu0 0.0
        %4536 = vmatmul.mubr.f32.gmra.mxu0 %v4353
        %v4537 = vpop.f32.mrf.mxu0
        %v4538 = vadd.f32 %v4320, %v4537
        %v4539 = vpop.f32.mrf.mxu0
        %4540 = vmatprep.mubr.f32.mxu0 0.0
        %4541 = vmatmul.mubr.f32.gmra.mxu0 %v4356
        %v4542 = vpop.f32.mrf.mxu0
        %v4543 = vadd.f32 %v4320, %v4542
        %v4544 = vpop.f32.mrf.mxu0
        %4545 = vmatprep.mubr.f32.mxu0 0.0
        %4546 = vmatmul.mubr.f32.gmra.mxu0 %v4359
        %v4547 = vpop.f32.mrf.mxu0
        %v4548 = vadd.f32 %v4320, %v4547
        %v4549 = vpop.f32.mrf.mxu0
        %4550 = vmatprep.mubr.f32.mxu0 0.0
        %4551 = vmatmul.mubr.f32.gmra.mxu0 %v4362
        %v4552 = vpop.f32.mrf.mxu0
        %v4553 = vadd.f32 %v4320, %v4552
        %v4554 = vpop.f32.mrf.mxu0
        %4555 = vmatprep.mubr.f32.mxu0 0.0
        %4556 = vmatmul.mubr.f32.gmra.mxu0 %v4365
        %v4557 = vpop.f32.mrf.mxu0
        %v4558 = vadd.f32 %v4320, %v4557
        %v4559 = vpop.f32.mrf.mxu0
        %4560 = vmatprep.mubr.f32.mxu0 0.0
        %4561 = vmatmul.mubr.f32.gmra.mxu0 %v4368
        %v4562 = vpop.f32.mrf.mxu0
        %v4563 = vadd.f32 %v4320, %v4562
        %v4564 = vpop.f32.mrf.mxu0
        %4565 = vmatprep.mubr.f32.mxu0 0.0
        %4566 = vmatmul.mubr.f32.gmra.mxu0 %v4371
        %v4567 = vpop.f32.mrf.mxu0
        %v4568 = vadd.f32 %v4320, %v4567
        %v4569 = vpop.f32.mrf.mxu0
        %4570 = vmatprep.mubr.f32.mxu0 0.0
        %4571 = vmatmul.mubr.f32.gmra.mxu0 %v4374
        %v4572 = vpop.f32.mrf.mxu0
        %v4573 = vadd.f32 %v4320, %v4572
        %v4574 = vpop.f32.mrf.mxu0
        %4575 = vmatprep.mubr.f32.mxu0 0.0
        %4576 = vmatmul.mubr.f32.gmra.mxu0 %v4377
        %v4577 = vpop.f32.mrf.mxu0
        %v4578 = vadd.f32 %v4320, %v4577
        %v4579 = vpop.f32.mrf.mxu0
        %4580 = vmatprep.mubr.f32.mxu0 0.0
        %4581 = vmatmul.mubr.f32.gmra.mxu0 %v4380
        %v4582 = vpop.f32.mrf.mxu0
        %v4583 = vadd.f32 %v4320, %v4582
        %v4584 = vpop.f32.mrf.mxu0
        %4585 = vmatprep.mubr.f32.mxu0 0.0
        %4586 = vmatmul.mubr.f32.gmra.mxu0 %v4383
        %v4587 = vpop.f32.mrf.mxu0
        %v4588 = vadd.f32 %v4320, %v4587
        %v4589 = vpop.f32.mrf.mxu0
        %4590 = vmatprep.mubr.f32.mxu0 0.0
        %4591 = vmatmul.mubr.f32.gmra.mxu0 %v4386
        %v4592 = vpop.f32.mrf.mxu0
        %v4593 = vadd.f32 %v4320, %v4592
        %v4594 = vpop.f32.mrf.mxu0
        %4595 = vmatprep.mubr.f32.mxu0 0.0
        %4596 = vmatmul.mubr.f32.gmra.mxu0 %v4389
        %v4597 = vpop.f32.mrf.mxu0
        %v4598 = vadd.f32 %v4320, %v4597
        %v4599 = vpop.f32.mrf.mxu0
        %4600 = vmatprep.mubr.f32.mxu0 0.0
        %4601 = vmatmul.mubr.f32.gmra.mxu0 %v4392
        %v4602 = vpop.f32.mrf.mxu0
        %v4603 = vadd.f32 %v4320, %v4602
        %v4604 = vpop.f32.mrf.mxu0
        %4605 = vmatprep.mubr.f32.mxu0 0.0
        %4606 = vmatmul.mubr.f32.gmra.mxu0 %v4395
        %v4607 = vpop.f32.mrf.mxu0
        %v4608 = vadd.f32 %v4320, %v4607
        %v4609 = vpop.f32.mrf.mxu0
        %4610 = vmatprep.mubr.f32.mxu0 0.0
        %4611 = vmatmul.mubr.f32.gmra.mxu0 %v4398
        %v4612 = vpop.f32.mrf.mxu0
        %v4613 = vadd.f32 %v4320, %v4612
        %v4614 = vpop.f32.mrf.mxu0
        %4615 = vmatprep.mubr.f32.mxu0 0.0
        %4616 = vmatmul.mubr.f32.gmra.mxu0 %v4401
        %v4617 = vpop.f32.mrf.mxu0
        %v4618 = vadd.f32 %v4320, %v4617
        %v4619 = vpop.f32.mrf.mxu0
        %4620 = vmatprep.mubr.f32.mxu0 0.0
        %4621 = vmatmul.mubr.f32.gmra.mxu0 %v4404
        %v4622 = vpop.f32.mrf.mxu0
        %v4623 = vadd.f32 %v4320, %v4622
        %v4624 = vpop.f32.mrf.mxu0
        %4625 = vmatprep.mubr.f32.mxu0 0.0
        %4626 = vmatmul.mubr.f32.gmra.mxu0 %v4407
        %v4627 = vpop.f32.mrf.mxu0
        %v4628 = vadd.f32 %v4320, %v4627
        %v4629 = vpop.f32.mrf.mxu0
        %4630 = vmatprep.mubr.f32.mxu0 0.0
        %4631 = vmatmul.mubr.f32.gmra.mxu0 %v4410
        %v4632 = vpop.f32.mrf.mxu0
        %v4633 = vadd.f32 %v4320, %v4632
        %v4634 = vpop.f32.mrf.mxu0
        %4635 = vmatprep.mubr.f32.mxu0 0.0
        %4636 = vmatmul.mubr.f32.gmra.mxu0 %v4413
        %v4637 = vpop.f32.mrf.mxu0
        %v4638 = vadd.f32 %v4320, %v4637
        %v4639 = vpop.f32.mrf.mxu0
        %4640 = vmatprep.mubr.f32.mxu0 0.0
        %4641 = vmatmul.mubr.f32.gmra.mxu0 %v4416
        %v4642 = vpop.f32.mrf.mxu0
        %v4643 = vadd.f32 %v4320, %v4642
        %v4644 = vpop.f32.mrf.mxu0
        %4645 = vdwg.mxu0
        %v4646 = vadd.f32 %v4488, %v312
        %v4647 = vadd.f32 %v4493, %v313
        %v4648 = vadd.f32 %v4498, %v314
        %v4649 = vadd.f32 %v4503, %v315
        %v4650 = vadd.f32 %v4508, %v316
        %v4651 = vadd.f32 %v4513, %v317
        %v4652 = vadd.f32 %v4518, %v318
        %v4653 = vadd.f32 %v4523, %v319
        %v4654 = vadd.f32 %v4528, %v320
        %v4655 = vadd.f32 %v4533, %v321
        %v4656 = vadd.f32 %v4538, %v322
        %v4657 = vadd.f32 %v4543, %v323
        %v4658 = vadd.f32 %v4548, %v324
        %v4659 = vadd.f32 %v4553, %v325
        %v4660 = vadd.f32 %v4558, %v326
        %v4661 = vadd.f32 %v4563, %v327
        %v4662 = vadd.f32 %v4568, %v328
        %v4663 = vadd.f32 %v4573, %v329
        %v4664 = vadd.f32 %v4578, %v330
        %v4665 = vadd.f32 %v4583, %v331
        %v4666 = vadd.f32 %v4588, %v332
        %v4667 = vadd.f32 %v4593, %v333
        %v4668 = vadd.f32 %v4598, %v334
        %v4669 = vadd.f32 %v4603, %v335
        %v4670 = vadd.f32 %v4608, %v336
        %v4671 = vadd.f32 %v4613, %v337
        %v4672 = vadd.f32 %v4618, %v338
        %v4673 = vadd.f32 %v4623, %v339
        %v4674 = vadd.f32 %v4628, %v340
        %v4675 = vadd.f32 %v4633, %v341
        %v4676 = vadd.f32 %v4638, %v342
        %v4677 = vadd.f32 %v4643, %v343
        %v4678 = vmax.f32 %v4646, 0.0
        %v4679 = vmax.f32 %v4647, 0.0
        %v4680 = vmax.f32 %v4648, 0.0
        %v4681 = vmax.f32 %v4649, 0.0
        %v4682 = vmax.f32 %v4650, 0.0
        %v4683 = vmax.f32 %v4651, 0.0
        %v4684 = vmax.f32 %v4652, 0.0
        %v4685 = vmax.f32 %v4653, 0.0
        %v4686 = vmax.f32 %v4654, 0.0
        %v4687 = vmax.f32 %v4655, 0.0
        %v4688 = vmax.f32 %v4656, 0.0
        %v4689 = vmax.f32 %v4657, 0.0
        %v4690 = vmax.f32 %v4658, 0.0
        %v4691 = vmax.f32 %v4659, 0.0
        %v4692 = vmax.f32 %v4660, 0.0
        %v4693 = vmax.f32 %v4661, 0.0
        %v4694 = vmax.f32 %v4662, 0.0
        %v4695 = vmax.f32 %v4663, 0.0
        %v4696 = vmax.f32 %v4664, 0.0
        %v4697 = vmax.f32 %v4665, 0.0
        %v4698 = vmax.f32 %v4666, 0.0
        %v4699 = vmax.f32 %v4667, 0.0
        %v4700 = vmax.f32 %v4668, 0.0
        %v4701 = vmax.f32 %v4669, 0.0
        %v4702 = vmax.f32 %v4670, 0.0
        %v4703 = vmax.f32 %v4671, 0.0
        %v4704 = vmax.f32 %v4672, 0.0
        %v4705 = vmax.f32 %v4673, 0.0
        %v4706 = vmax.f32 %v4674, 0.0
        %v4707 = vmax.f32 %v4675, 0.0
        %v4708 = vmax.f32 %v4676, 0.0
        %v4709 = vmax.f32 %v4677, 0.0
        %4710 = vst.msk [vmem:[%s311] sm:$0xff] %vm353, %v4678
        %4711 = vst.msk [vmem:[%s311 + $0x8] sm:$0xff] %vm353, %v4679
        %4712 = vst.msk [vmem:[%s311 + $0x10] sm:$0xff] %vm353, %v4680
        %4713 = vst.msk [vmem:[%s311 + $0x18] sm:$0xff] %vm353, %v4681
        %4714 = vst.msk [vmem:[%s311 + $0x20] sm:$0xff] %vm353, %v4682
        %4715 = vst.msk [vmem:[%s311 + $0x28] sm:$0xff] %vm353, %v4683
        %4716 = vst.msk [vmem:[%s311 + $0x30] sm:$0xff] %vm353, %v4684
        %4717 = vst.msk [vmem:[%s311 + $0x38] sm:$0xff] %vm353, %v4685
        %4718 = vst.msk [vmem:[%s311 + $0x40] sm:$0xff] %vm353, %v4686
        %4719 = vst.msk [vmem:[%s311 + $0x48] sm:$0xff] %vm353, %v4687
        %4720 = vst.msk [vmem:[%s311 + $0x50] sm:$0xff] %vm353, %v4688
        %4721 = vst.msk [vmem:[%s311 + $0x58] sm:$0xff] %vm353, %v4689
        %4722 = vst.msk [vmem:[%s311 + $0x60] sm:$0xff] %vm353, %v4690
        %4723 = vst.msk [vmem:[%s311 + $0x68] sm:$0xff] %vm353, %v4691
        %4724 = vst.msk [vmem:[%s311 + $0x70] sm:$0xff] %vm353, %v4692
        %4725 = vst.msk [vmem:[%s311 + $0x78] sm:$0xff] %vm353, %v4693
        %4726 = vst.msk [vmem:[%s311 + $0x80] sm:$0xff] %vm353, %v4694
        %4727 = vst.msk [vmem:[%s311 + $0x88] sm:$0xff] %vm353, %v4695
        %4728 = vst.msk [vmem:[%s311 + $0x90] sm:$0xff] %vm353, %v4696
        %4729 = vst.msk [vmem:[%s311 + $0x98] sm:$0xff] %vm353, %v4697
        %4730 = vst.msk [vmem:[%s311 + $0xa0] sm:$0xff] %vm353, %v4698
        %4731 = vst.msk [vmem:[%s311 + $0xa8] sm:$0xff] %vm353, %v4699
        %4732 = vst.msk [vmem:[%s311 + $0xb0] sm:$0xff] %vm353, %v4700
        %4733 = vst.msk [vmem:[%s311 + $0xb8] sm:$0xff] %vm353, %v4701
        %4734 = vst.msk [vmem:[%s311 + $0xc0] sm:$0xff] %vm353, %v4702
        %4735 = vst.msk [vmem:[%s311 + $0xc8] sm:$0xff] %vm353, %v4703
        %4736 = vst.msk [vmem:[%s311 + $0xd0] sm:$0xff] %vm353, %v4704
        %4737 = vst.msk [vmem:[%s311 + $0xd8] sm:$0xff] %vm353, %v4705
        %4738 = vst.msk [vmem:[%s311 + $0xe0] sm:$0xff] %vm353, %v4706
        %4739 = vst.msk [vmem:[%s311 + $0xe8] sm:$0xff] %vm353, %v4707
        %4740 = vst.msk [vmem:[%s311 + $0xf0] sm:$0xff] %vm353, %v4708
        %4741 = vst.msk [vmem:[%s311 + $0xf8] sm:$0xff] %vm353, %v4709
        %s4742 = sand.u32 %s185, 1
        %s4743 = scalar_lea.sflag [#allocation5], %s4742
        %s4744 = sand.u32 %s185, 1
        %s4745 = smul.addr %s4744, 256
        %s4746 = scalar_lea.vmem [#allocation8], %s4745
        // Predicated region
        $region57: #{tpu_custom_call.1} parent=47 // pred_check
          %p4747 = pneg %p195
        $region58: #{tpu_custom_call.1} parent=47 // pred_check_branch
          %4749 = sbr.rel (%p4747) target = $region60
        $region59: #{tpu_custom_call.1} parent=47 // pred_region
          %s4751 = ssub.s32 4096, 4096
          %4752 = vsyncadd %s4743, %s4751
          %s4753 = smul.addr %s25, 32
          %s4754 = smul.addr %s4753, 128
          %s4755 = scalar_lea.hbm %s7, %s4754
          %s4756 = sshll.u32 %s4746, 4
          %s4757 = int_to_ptr.vmem [resolvable:$true] %s4756
          %4762 = dma.vmem_to_hbm [thread:$0]  %s4757, 4096, %s4755, %s4743, 128, 128, 8
        $region60: #{tpu_custom_call.1} parent=47 // pred_fallthru
          _
      $region48: #{tpu_custom_call.1} parent=5 // pred_fallthru
        _
      %p4763 = scmp.le.s32.totalorder 2, %s20
      // Predicated region
      $region61: #{tpu_custom_call.1} parent=5 // pred_check
        %p4764 = pneg %p4763
      $region62: #{tpu_custom_call.1} parent=5 // pred_check_branch
        %4766 = sbr.rel (%p4764) target = $region64
      $region63: #{tpu_custom_call.1} parent=5 // pred_region
        %s4767 = ssub.s32 %s20, 2
        // Predicated region
        $region65: #{tpu_custom_call.1} parent=63 // pred_check
          %p4768 = pneg %p201
        $region66: #{tpu_custom_call.1} parent=63 // pred_check_branch
          %4770 = sbr.rel (%p4768) target = $region68
        $region67: #{tpu_custom_call.1} parent=63 // pred_region
          %s4771 = sand.u32 %s186, 1
          %s4772 = scalar_lea.sflag [#allocation5], %s4771
          %s4773 = sand.u32 %s186, 1
          %s4774 = smul.addr %s4773, 256
          %s4775 = scalar_lea.vmem [#allocation8], %s4774
          %4776 = dma.done %s4772, 4096
        $region68: #{tpu_custom_call.1} parent=63 // pred_fallthru
          _
      $region64: #{tpu_custom_call.1} parent=5 // pred_fallthru
        _
    $region6: #{tpu_custom_call.1} parent=1 // loop_footer
      %s24 = sadd.s32 1, %s20
    $region7: #{tpu_custom_call.1} parent=1 // loop_footer_branch
      %19 = sbr.rel target = $region3
    $region8: #{tpu_custom_call.1} parent=1 // loop_exit
      _
    %4777 = vsyncpa [#allocation4], 1
    %s4778 = scalar_lea.sflag [#allocation4], 1
    %4779 = vsyncpa %s4778, 1
    %4780 = vsyncpa [#allocation7], 1
    %4781 = vsyncpa [#allocation5], 1
    %s4782 = scalar_lea.sflag [#allocation5], 1
    %4783 = vsyncpa %s4782, 1

</llo_original>
